<compile_context>
chip_gen: v7x
topology: tpu7x:2x2x1
jax: 0.10.0
libtpu: 0.0.40
codegen_flags: <defaults>
</compile_context>

<pallas_src>
import functools

import jax
import jax.numpy as jnp
from jax.experimental import pallas as pl
from jax.experimental.pallas import tpu as pltpu

DECAY = 0.2        # SNN membrane decay of the stem LIF (stand-in, see TODO)
TIMESTAMP = 6      # matches forward(input, timestamp=6)
FEAT_CH = 192      # classifier input channels: nn.Linear(192, 10)
NUM_CLASSES = 10


def _lif_scale(timestamp):
    """(sum_{t<T} sum_{i<=t} DECAY^i) / T  -- logits are averaged over T."""
    acc, total = 0.0, 0.0
    for _ in range(timestamp):
        acc = acc * DECAY + 1.0          # membrane gain at step t (t=0 -> 1.0)
        total += acc
    return total / timestamp


def autostereo_kernel(x_ref, wc3_ref, bc_ref, wf_ref, bf_ref, out_ref, *,
                      h, w, lif_scale):
    """One batch element per grid step.

    x_ref   : (1, H, W, Cin)   channels-last input image
    wc3_ref : (9, Cin, F)      conv weight, rows regrouped (shift, cin, cout)
    bc_ref  : (1, F)           conv bias
    wf_ref  : (F, n_cls)       classifier weight
    bf_ref  : (1, n_cls)       classifier bias
    out_ref : (1, 1, n_cls)
    """
    x = x_ref[...]
    inv_hw = 1.0 / (h * w)

    # Fused "im2col + AdaptiveAvgPool2d(1)": for a 3x3 / stride-1 / pad-1 conv
    # the spatially-pooled patch column (dy, dx, c) equals the mean of
    # x[..., c] over a sub-rectangle (the zero padding contributes nothing),
    # so   pooled_conv = bc + sum_shift  mean(rect_shift) @ wc[shift].
    row_bounds = ((0, h - 1), (0, h), (1, h))     # dy = 0, 1, 2
    col_bounds = ((0, w - 1), (0, w), (1, w))     # dx = 0, 1, 2

    pooled_conv = bc_ref[...]                     # bias added post-pool (exact)
    shift = 0
    for r0, r1 in row_bounds:
        for c0, c1 in col_bounds:
            rect = x[:, r0:r1, c0:c1, :]                                # (1,r,c,Cin)
            pooled = jnp.sum(jnp.sum(rect, axis=1), axis=1) * inv_hw   # (1, Cin)
            pooled_conv = pooled_conv + jnp.dot(
                pooled, wc3_ref[shift],
                preferred_element_type=jnp.float32,
                precision=jax.lax.Precision.HIGHEST)
            shift += 1

    # LIF membrane + classifier, collapsed algebraically:
    #   mem_t = (sum_{i<=t} DECAY^i) * pooled_conv   (is_first reset at t=0)
    #   (sum_t (mem_t @ wf + bf)) / T == lif_scale * (pooled_conv @ wf) + bf.
    logits = jnp.dot(pooled_conv, wf_ref[...],
                     preferred_element_type=jnp.float32,
                     precision=jax.lax.Precision.HIGHEST)               # (1, n_cls)
    out_ref[0] = lif_scale * logits + bf_ref[...]


@functools.partial(jax.jit, static_argnames=("timestamp",))
def autostereo_forward(x_nchw, wc, bc, wf, bf, timestamp=TIMESTAMP):
    B, C_in, H, W = x_nchw.shape
    assert H >= 2 and W >= 2, "pooled-rectangle rewrite needs H, W >= 2"
    assert wc.shape[0] == 9 * C_in, (wc.shape, C_in)
    feat = wc.shape[1]
    n_cls = wf.shape[-1]

    # Channels-last input, NO 9x im2col expansion in HBM.  Conv weight rows are
    # regrouped (9*Cin, F) -> (9, Cin, F) so the kernel picks per-shift slices
    # with clean leading-axis loads (no unaligned lane concatenation).
    x_nhwc = jnp.transpose(x_nchw, (0, 2, 3, 1))
    wc3 = wc.reshape(9, C_in, feat)

    kernel = functools.partial(
        autostereo_kernel, h=H, w=W, lif_scale=_lif_scale(timestamp))

    out = pl.pallas_call(
        kernel,
        out_shape=jax.ShapeDtypeStruct((B, 1, n_cls), jnp.float32),
        grid=(B,),
        in_specs=[
            pl.BlockSpec((1, H, W, C_in), lambda b: (b, 0, 0, 0)),
            pl.BlockSpec((9, C_in, feat), lambda b: (0, 0, 0)),
            pl.BlockSpec((1, feat), lambda b: (0, 0)),
            pl.BlockSpec((feat, n_cls), lambda b: (0, 0)),
            pl.BlockSpec((1, n_cls), lambda b: (0, 0)),
        ],
        out_specs=pl.BlockSpec((1, 1, n_cls), lambda b: (b, 0, 0)),
        compiler_params=pltpu.CompilerParams(
            dimension_semantics=("parallel",)),
    )(x_nhwc, wc3, bc.reshape(1, -1), wf, bf.reshape(1, -1))
    return out.reshape(B, n_cls)


# ----------------------------- pure-JAX reference ----------------------------

def _im2col_3x3(x_nchw):
    """NCHW -> (B, H*W, 9*Cin) patches for a 3x3 / stride-1 / pad-1 conv."""
    B, C, H, W = x_nchw.shape
    x = jnp.transpose(x_nchw, (0, 2, 3, 1))                       # NHWC
    xp = jnp.pad(x, ((0, 0), (1, 1), (1, 1), (0, 0)))
    cols = [xp[:, i:i + H, j:j + W, :] for i in range(3) for j in range(3)]
    patches = jnp.stack(cols, axis=3)                             # (B,H,W,9,C)
    return patches.reshape(B, H * W, 9 * C)


def reference_forward(x, wc, bc, wf, bf, timestamp=TIMESTAMP):
    """Mirrors the PyTorch per-timestep structure (conv -> LIF -> pool -> fc)."""
    patches = _im2col_3x3(x)
    conv = jnp.einsum('bpk,kc->bpc', patches, wc,
                      precision=jax.lax.Precision.HIGHEST) + bc[None, None, :]
    mem = None
    logits_sum = jnp.zeros((x.shape[0], wf.shape[-1]), jnp.float32)
    for t in range(timestamp):
        mem = conv if t == 0 else DECAY * mem + conv              # is_first reset
        pooled = mem.mean(axis=1)                                 # AdaptiveAvgPool2d(1)
        logits = jnp.dot(pooled, wf,
                         precision=jax.lax.Precision.HIGHEST) + bf[None, :]
        logits_sum = logits_sum + logits
    return logits_sum / timestamp


if __name__ == "__main__":
    key = jax.random.PRNGKey(0)
    k_x, k_wc, k_bc, k_wf, k_bf = jax.random.split(key, 5)

    B, C_in, H, W = 2, 3, 16, 16          # init_channels = 3
    K = 9 * C_in

    x = jax.random.normal(k_x, (B, C_in, H, W), jnp.float32)
    wc = jax.random.normal(k_wc, (K, FEAT_CH), jnp.float32) / jnp.sqrt(K)
    bc = jax.random.normal(k_bc, (FEAT_CH,), jnp.float32) * 0.1
    wf = jax.random.normal(k_wf, (FEAT_CH, NUM_CLASSES), jnp.float32) / jnp.sqrt(FEAT_CH)
    bf = jax.random.normal(k_bf, (NUM_CLASSES,), jnp.float32) * 0.1

    out = autostereo_forward(x, wc, bc, wf, bf)
    jax.block_until_ready(out)

    ref = reference_forward(x, wc, bc, wf, bf)
    assert out.shape == (B, NUM_CLASSES)
    # HIGHEST precision in both kernel and reference -> only reassociation
    # differences remain; tolerance tightened accordingly (was 2e-2).
    assert jnp.allclose(out, ref, rtol=1e-4, atol=1e-4), (out, ref)

    print("KERNEL_OK")
</pallas_src>

<mosaic_0001>
module attributes {stable_mosaic.version = 11 : i64} {
  func.func @autostereo_kernel(%arg0: i32, %arg1: memref<1x16x16x3xf32, #tpu.memory_space<vmem>>, %arg2: memref<9x3x192xf32, #tpu.memory_space<vmem>>, %arg3: memref<1x192xf32, #tpu.memory_space<vmem>>, %arg4: memref<192x10xf32, #tpu.memory_space<vmem>>, %arg5: memref<1x10xf32, #tpu.memory_space<vmem>>, %arg6: memref<1x1x10xf32, #tpu.memory_space<vmem>>) attributes {dimension_semantics = [#tpu.dimension_semantics<parallel>], iteration_bounds = array<i64: 2>, scalar_prefetch = 0 : i64, scratch_operands = 0 : i64, tpu.core_type = #tpu.core_type<tc>, window_params = [{transform_indices = @transform_0, window_bounds = array<i64: 1, 16, 16, 3>}, {pipeline_mode = #tpu.pipeline_mode<synchronous>, transform_indices = @transform_1, window_bounds = array<i64: 9, 3, 192>}, {pipeline_mode = #tpu.pipeline_mode<synchronous>, transform_indices = @transform_2, window_bounds = array<i64: 1, 192>}, {pipeline_mode = #tpu.pipeline_mode<synchronous>, transform_indices = @transform_3, window_bounds = array<i64: 192, 10>}, {pipeline_mode = #tpu.pipeline_mode<synchronous>, transform_indices = @transform_4, window_bounds = array<i64: 1, 10>}, {transform_indices = @transform_5, window_bounds = array<i64: 1, 1, 10>}]} {
    %c0 = arith.constant 0 : index
    %c0_0 = arith.constant 0 : index
    %c0_1 = arith.constant 0 : index
    %c0_2 = arith.constant 0 : index
    %0 = vector.load %arg1[%c0, %c0_0, %c0_1, %c0_2] : memref<1x16x16x3xf32, #tpu.memory_space<vmem>>, vector<1x16x16x3xf32>
    %c0_3 = arith.constant 0 : index
    %c0_4 = arith.constant 0 : index
    %1 = vector.load %arg3[%c0_3, %c0_4] : memref<1x192xf32, #tpu.memory_space<vmem>>, vector<1x192xf32>
    %2 = vector.extract_strided_slice %0 {offsets = [0, 0, 0, 0], sizes = [1, 15, 15, 3], strides = [1, 1, 1, 1]} : vector<1x16x16x3xf32> to vector<1x15x15x3xf32>
    %cst = arith.constant dense<0.000000e+00> : vector<1x15x3xf32>
    %3 = vector.multi_reduction <add>, %2, %cst [1] : vector<1x15x15x3xf32> to vector<1x15x3xf32>
    %cst_5 = arith.constant dense<0.000000e+00> : vector<1x3xf32>
    %4 = vector.multi_reduction <add>, %3, %cst_5 [1] : vector<1x15x3xf32> to vector<1x3xf32>
    %cst_6 = arith.constant 3.906250e-03 : f32
    %5 = vector.broadcast %cst_6 : f32 to vector<1x3xf32>
    %6 = arith.mulf %4, %5 : vector<1x3xf32>
    %c0_7 = arith.constant 0 : index
    %c0_8 = arith.constant 0 : index
    %c0_9 = arith.constant 0 : index
    %7 = vector.load %arg2[%c0_7, %c0_8, %c0_9] : memref<9x3x192xf32, #tpu.memory_space<vmem>>, vector<1x3x192xf32>
    %8 = vector.shape_cast %7 : vector<1x3x192xf32> to vector<3x192xf32>
    %cst_10 = arith.constant dense<0.000000e+00> : vector<1x192xf32>
    %9 = tpu.matmul %6, %8, %cst_10 {dimension_numbers = #tpu.dot_dimension_numbers<[1], [0], [0], [1], [0, 0, 1, 1], [], []>, precision = #tpu.contract_precision<fp32>} : vector<1x3xf32>, vector<3x192xf32>, vector<1x192xf32> -> vector<1x192xf32>
    %10 = arith.addf %1, %9 : vector<1x192xf32>
    %11 = vector.extract_strided_slice %0 {offsets = [0, 0, 0, 0], sizes = [1, 15, 16, 3], strides = [1, 1, 1, 1]} : vector<1x16x16x3xf32> to vector<1x15x16x3xf32>
    %cst_11 = arith.constant dense<0.000000e+00> : vector<1x16x3xf32>
    %12 = vector.multi_reduction <add>, %11, %cst_11 [1] : vector<1x15x16x3xf32> to vector<1x16x3xf32>
    %cst_12 = arith.constant dense<0.000000e+00> : vector<1x3xf32>
    %13 = vector.multi_reduction <add>, %12, %cst_12 [1] : vector<1x16x3xf32> to vector<1x3xf32>
    %cst_13 = arith.constant 3.906250e-03 : f32
    %14 = vector.broadcast %cst_13 : f32 to vector<1x3xf32>
    %15 = arith.mulf %13, %14 : vector<1x3xf32>
    %c1 = arith.constant 1 : index
    %c0_14 = arith.constant 0 : index
    %c0_15 = arith.constant 0 : index
    %16 = vector.load %arg2[%c1, %c0_14, %c0_15] : memref<9x3x192xf32, #tpu.memory_space<vmem>>, vector<1x3x192xf32>
    %17 = vector.shape_cast %16 : vector<1x3x192xf32> to vector<3x192xf32>
    %cst_16 = arith.constant dense<0.000000e+00> : vector<1x192xf32>
    %18 = tpu.matmul %15, %17, %cst_16 {dimension_numbers = #tpu.dot_dimension_numbers<[1], [0], [0], [1], [0, 0, 1, 1], [], []>, precision = #tpu.contract_precision<fp32>} : vector<1x3xf32>, vector<3x192xf32>, vector<1x192xf32> -> vector<1x192xf32>
    %19 = arith.addf %10, %18 : vector<1x192xf32>
    %20 = vector.extract_strided_slice %0 {offsets = [0, 0, 1, 0], sizes = [1, 15, 15, 3], strides = [1, 1, 1, 1]} : vector<1x16x16x3xf32> to vector<1x15x15x3xf32>
    %cst_17 = arith.constant dense<0.000000e+00> : vector<1x15x3xf32>
    %21 = vector.multi_reduction <add>, %20, %cst_17 [1] : vector<1x15x15x3xf32> to vector<1x15x3xf32>
    %cst_18 = arith.constant dense<0.000000e+00> : vector<1x3xf32>
    %22 = vector.multi_reduction <add>, %21, %cst_18 [1] : vector<1x15x3xf32> to vector<1x3xf32>
    %cst_19 = arith.constant 3.906250e-03 : f32
    %23 = vector.broadcast %cst_19 : f32 to vector<1x3xf32>
    %24 = arith.mulf %22, %23 : vector<1x3xf32>
    %c2 = arith.constant 2 : index
    %c0_20 = arith.constant 0 : index
    %c0_21 = arith.constant 0 : index
    %25 = vector.load %arg2[%c2, %c0_20, %c0_21] : memref<9x3x192xf32, #tpu.memory_space<vmem>>, vector<1x3x192xf32>
    %26 = vector.shape_cast %25 : vector<1x3x192xf32> to vector<3x192xf32>
    %cst_22 = arith.constant dense<0.000000e+00> : vector<1x192xf32>
    %27 = tpu.matmul %24, %26, %cst_22 {dimension_numbers = #tpu.dot_dimension_numbers<[1], [0], [0], [1], [0, 0, 1, 1], [], []>, precision = #tpu.contract_precision<fp32>} : vector<1x3xf32>, vector<3x192xf32>, vector<1x192xf32> -> vector<1x192xf32>
    %28 = arith.addf %19, %27 : vector<1x192xf32>
    %29 = vector.extract_strided_slice %0 {offsets = [0, 0, 0, 0], sizes = [1, 16, 15, 3], strides = [1, 1, 1, 1]} : vector<1x16x16x3xf32> to vector<1x16x15x3xf32>
    %cst_23 = arith.constant dense<0.000000e+00> : vector<1x15x3xf32>
    %30 = vector.multi_reduction <add>, %29, %cst_23 [1] : vector<1x16x15x3xf32> to vector<1x15x3xf32>
    %cst_24 = arith.constant dense<0.000000e+00> : vector<1x3xf32>
    %31 = vector.multi_reduction <add>, %30, %cst_24 [1] : vector<1x15x3xf32> to vector<1x3xf32>
    %cst_25 = arith.constant 3.906250e-03 : f32
    %32 = vector.broadcast %cst_25 : f32 to vector<1x3xf32>
    %33 = arith.mulf %31, %32 : vector<1x3xf32>
    %c3 = arith.constant 3 : index
    %c0_26 = arith.constant 0 : index
    %c0_27 = arith.constant 0 : index
    %34 = vector.load %arg2[%c3, %c0_26, %c0_27] : memref<9x3x192xf32, #tpu.memory_space<vmem>>, vector<1x3x192xf32>
    %35 = vector.shape_cast %34 : vector<1x3x192xf32> to vector<3x192xf32>
    %cst_28 = arith.constant dense<0.000000e+00> : vector<1x192xf32>
    %36 = tpu.matmul %33, %35, %cst_28 {dimension_numbers = #tpu.dot_dimension_numbers<[1], [0], [0], [1], [0, 0, 1, 1], [], []>, precision = #tpu.contract_precision<fp32>} : vector<1x3xf32>, vector<3x192xf32>, vector<1x192xf32> -> vector<1x192xf32>
    %37 = arith.addf %28, %36 : vector<1x192xf32>
    %cst_29 = arith.constant dense<0.000000e+00> : vector<1x16x3xf32>
    %38 = vector.multi_reduction <add>, %0, %cst_29 [1] : vector<1x16x16x3xf32> to vector<1x16x3xf32>
    %cst_30 = arith.constant dense<0.000000e+00> : vector<1x3xf32>
    %39 = vector.multi_reduction <add>, %38, %cst_30 [1] : vector<1x16x3xf32> to vector<1x3xf32>
    %cst_31 = arith.constant 3.906250e-03 : f32
    %40 = vector.broadcast %cst_31 : f32 to vector<1x3xf32>
    %41 = arith.mulf %39, %40 : vector<1x3xf32>
    %c4 = arith.constant 4 : index
    %c0_32 = arith.constant 0 : index
    %c0_33 = arith.constant 0 : index
    %42 = vector.load %arg2[%c4, %c0_32, %c0_33] : memref<9x3x192xf32, #tpu.memory_space<vmem>>, vector<1x3x192xf32>
    %43 = vector.shape_cast %42 : vector<1x3x192xf32> to vector<3x192xf32>
    %cst_34 = arith.constant dense<0.000000e+00> : vector<1x192xf32>
    %44 = tpu.matmul %41, %43, %cst_34 {dimension_numbers = #tpu.dot_dimension_numbers<[1], [0], [0], [1], [0, 0, 1, 1], [], []>, precision = #tpu.contract_precision<fp32>} : vector<1x3xf32>, vector<3x192xf32>, vector<1x192xf32> -> vector<1x192xf32>
    %45 = arith.addf %37, %44 : vector<1x192xf32>
    %46 = vector.extract_strided_slice %0 {offsets = [0, 0, 1, 0], sizes = [1, 16, 15, 3], strides = [1, 1, 1, 1]} : vector<1x16x16x3xf32> to vector<1x16x15x3xf32>
    %cst_35 = arith.constant dense<0.000000e+00> : vector<1x15x3xf32>
    %47 = vector.multi_reduction <add>, %46, %cst_35 [1] : vector<1x16x15x3xf32> to vector<1x15x3xf32>
    %cst_36 = arith.constant dense<0.000000e+00> : vector<1x3xf32>
    %48 = vector.multi_reduction <add>, %47, %cst_36 [1] : vector<1x15x3xf32> to vector<1x3xf32>
    %cst_37 = arith.constant 3.906250e-03 : f32
    %49 = vector.broadcast %cst_37 : f32 to vector<1x3xf32>
    %50 = arith.mulf %48, %49 : vector<1x3xf32>
    %c5 = arith.constant 5 : index
    %c0_38 = arith.constant 0 : index
    %c0_39 = arith.constant 0 : index
    %51 = vector.load %arg2[%c5, %c0_38, %c0_39] : memref<9x3x192xf32, #tpu.memory_space<vmem>>, vector<1x3x192xf32>
    %52 = vector.shape_cast %51 : vector<1x3x192xf32> to vector<3x192xf32>
    %cst_40 = arith.constant dense<0.000000e+00> : vector<1x192xf32>
    %53 = tpu.matmul %50, %52, %cst_40 {dimension_numbers = #tpu.dot_dimension_numbers<[1], [0], [0], [1], [0, 0, 1, 1], [], []>, precision = #tpu.contract_precision<fp32>} : vector<1x3xf32>, vector<3x192xf32>, vector<1x192xf32> -> vector<1x192xf32>
    %54 = arith.addf %45, %53 : vector<1x192xf32>
    %55 = vector.extract_strided_slice %0 {offsets = [0, 1, 0, 0], sizes = [1, 15, 15, 3], strides = [1, 1, 1, 1]} : vector<1x16x16x3xf32> to vector<1x15x15x3xf32>
    %cst_41 = arith.constant dense<0.000000e+00> : vector<1x15x3xf32>
    %56 = vector.multi_reduction <add>, %55, %cst_41 [1] : vector<1x15x15x3xf32> to vector<1x15x3xf32>
    %cst_42 = arith.constant dense<0.000000e+00> : vector<1x3xf32>
    %57 = vector.multi_reduction <add>, %56, %cst_42 [1] : vector<1x15x3xf32> to vector<1x3xf32>
    %cst_43 = arith.constant 3.906250e-03 : f32
    %58 = vector.broadcast %cst_43 : f32 to vector<1x3xf32>
    %59 = arith.mulf %57, %58 : vector<1x3xf32>
    %c6 = arith.constant 6 : index
    %c0_44 = arith.constant 0 : index
    %c0_45 = arith.constant 0 : index
    %60 = vector.load %arg2[%c6, %c0_44, %c0_45] : memref<9x3x192xf32, #tpu.memory_space<vmem>>, vector<1x3x192xf32>
    %61 = vector.shape_cast %60 : vector<1x3x192xf32> to vector<3x192xf32>
    %cst_46 = arith.constant dense<0.000000e+00> : vector<1x192xf32>
    %62 = tpu.matmul %59, %61, %cst_46 {dimension_numbers = #tpu.dot_dimension_numbers<[1], [0], [0], [1], [0, 0, 1, 1], [], []>, precision = #tpu.contract_precision<fp32>} : vector<1x3xf32>, vector<3x192xf32>, vector<1x192xf32> -> vector<1x192xf32>
    %63 = arith.addf %54, %62 : vector<1x192xf32>
    %64 = vector.extract_strided_slice %0 {offsets = [0, 1, 0, 0], sizes = [1, 15, 16, 3], strides = [1, 1, 1, 1]} : vector<1x16x16x3xf32> to vector<1x15x16x3xf32>
    %cst_47 = arith.constant dense<0.000000e+00> : vector<1x16x3xf32>
    %65 = vector.multi_reduction <add>, %64, %cst_47 [1] : vector<1x15x16x3xf32> to vector<1x16x3xf32>
    %cst_48 = arith.constant dense<0.000000e+00> : vector<1x3xf32>
    %66 = vector.multi_reduction <add>, %65, %cst_48 [1] : vector<1x16x3xf32> to vector<1x3xf32>
    %cst_49 = arith.constant 3.906250e-03 : f32
    %67 = vector.broadcast %cst_49 : f32 to vector<1x3xf32>
    %68 = arith.mulf %66, %67 : vector<1x3xf32>
    %c7 = arith.constant 7 : index
    %c0_50 = arith.constant 0 : index
    %c0_51 = arith.constant 0 : index
    %69 = vector.load %arg2[%c7, %c0_50, %c0_51] : memref<9x3x192xf32, #tpu.memory_space<vmem>>, vector<1x3x192xf32>
    %70 = vector.shape_cast %69 : vector<1x3x192xf32> to vector<3x192xf32>
    %cst_52 = arith.constant dense<0.000000e+00> : vector<1x192xf32>
    %71 = tpu.matmul %68, %70, %cst_52 {dimension_numbers = #tpu.dot_dimension_numbers<[1], [0], [0], [1], [0, 0, 1, 1], [], []>, precision = #tpu.contract_precision<fp32>} : vector<1x3xf32>, vector<3x192xf32>, vector<1x192xf32> -> vector<1x192xf32>
    %72 = arith.addf %63, %71 : vector<1x192xf32>
    %73 = vector.extract_strided_slice %0 {offsets = [0, 1, 1, 0], sizes = [1, 15, 15, 3], strides = [1, 1, 1, 1]} : vector<1x16x16x3xf32> to vector<1x15x15x3xf32>
    %cst_53 = arith.constant dense<0.000000e+00> : vector<1x15x3xf32>
    %74 = vector.multi_reduction <add>, %73, %cst_53 [1] : vector<1x15x15x3xf32> to vector<1x15x3xf32>
    %cst_54 = arith.constant dense<0.000000e+00> : vector<1x3xf32>
    %75 = vector.multi_reduction <add>, %74, %cst_54 [1] : vector<1x15x3xf32> to vector<1x3xf32>
    %cst_55 = arith.constant 3.906250e-03 : f32
    %76 = vector.broadcast %cst_55 : f32 to vector<1x3xf32>
    %77 = arith.mulf %75, %76 : vector<1x3xf32>
    %c8 = arith.constant 8 : index
    %c0_56 = arith.constant 0 : index
    %c0_57 = arith.constant 0 : index
    %78 = vector.load %arg2[%c8, %c0_56, %c0_57] : memref<9x3x192xf32, #tpu.memory_space<vmem>>, vector<1x3x192xf32>
    %79 = vector.shape_cast %78 : vector<1x3x192xf32> to vector<3x192xf32>
    %cst_58 = arith.constant dense<0.000000e+00> : vector<1x192xf32>
    %80 = tpu.matmul %77, %79, %cst_58 {dimension_numbers = #tpu.dot_dimension_numbers<[1], [0], [0], [1], [0, 0, 1, 1], [], []>, precision = #tpu.contract_precision<fp32>} : vector<1x3xf32>, vector<3x192xf32>, vector<1x192xf32> -> vector<1x192xf32>
    %81 = arith.addf %72, %80 : vector<1x192xf32>
    %c0_59 = arith.constant 0 : index
    %c0_60 = arith.constant 0 : index
    %82 = vector.load %arg4[%c0_59, %c0_60] : memref<192x10xf32, #tpu.memory_space<vmem>>, vector<192x10xf32>
    %cst_61 = arith.constant dense<0.000000e+00> : vector<1x10xf32>
    %83 = tpu.matmul %81, %82, %cst_61 {dimension_numbers = #tpu.dot_dimension_numbers<[1], [0], [0], [1], [0, 0, 1, 1], [], []>, precision = #tpu.contract_precision<fp32>} : vector<1x192xf32>, vector<192x10xf32>, vector<1x10xf32> -> vector<1x10xf32>
    %cst_62 = arith.constant 1.197920e+00 : f32
    %84 = vector.broadcast %cst_62 : f32 to vector<1x10xf32>
    %85 = arith.mulf %84, %83 : vector<1x10xf32>
    %c0_63 = arith.constant 0 : index
    %c0_64 = arith.constant 0 : index
    %86 = vector.load %arg5[%c0_63, %c0_64] : memref<1x10xf32, #tpu.memory_space<vmem>>, vector<1x10xf32>
    %87 = arith.addf %85, %86 : vector<1x10xf32>
    %c0_65 = arith.constant 0 : index
    %c0_66 = arith.constant 0 : index
    %c0_67 = arith.constant 0 : index
    %88 = vector.load %arg6[%c0_65, %c0_66, %c0_67] : memref<1x1x10xf32, #tpu.memory_space<vmem>>, vector<1x1x10xf32>
    %89 = vector.shape_cast %88 : vector<1x1x10xf32> to vector<1x10xf32>
    %90 = vector.shape_cast %87 : vector<1x10xf32> to vector<1x1x10xf32>
    tpu.vector_store %arg6[%c0_65, %c0_66, %c0_67], %90 {strides = array<i32>} : memref<1x1x10xf32, #tpu.memory_space<vmem>>, vector<1x1x10xf32>,
    return
  }
  func.func @transform_0(%arg0: i32) -> (i32, i32, i32, i32) {
    %c0_i32 = arith.constant 0 : i32
    %c0_i32_0 = arith.constant 0 : i32
    %c0_i32_1 = arith.constant 0 : i32
    %c0_i32_2 = arith.constant 0 : i32
    return %arg0, %c0_i32, %c0_i32_0, %c0_i32_1 : i32, i32, i32, i32
  }
  func.func @transform_1(%arg0: i32) -> (i32, i32, i32) {
    %c0_i32 = arith.constant 0 : i32
    %c0_i32_0 = arith.constant 0 : i32
    %c0_i32_1 = arith.constant 0 : i32
    %c0_i32_2 = arith.constant 0 : i32
    return %c0_i32, %c0_i32_0, %c0_i32_1 : i32, i32, i32
  }
  func.func @transform_2(%arg0: i32) -> (i32, i32) {
    %c0_i32 = arith.constant 0 : i32
    %c0_i32_0 = arith.constant 0 : i32
    %c0_i32_1 = arith.constant 0 : i32
    return %c0_i32, %c0_i32_0 : i32, i32
  }
  func.func @transform_3(%arg0: i32) -> (i32, i32) {
    %c0_i32 = arith.constant 0 : i32
    %c0_i32_0 = arith.constant 0 : i32
    %c0_i32_1 = arith.constant 0 : i32
    return %c0_i32, %c0_i32_0 : i32, i32
  }
  func.func @transform_4(%arg0: i32) -> (i32, i32) {
    %c0_i32 = arith.constant 0 : i32
    %c0_i32_0 = arith.constant 0 : i32
    %c0_i32_1 = arith.constant 0 : i32
    return %c0_i32, %c0_i32_0 : i32, i32
  }
  func.func @transform_5(%arg0: i32) -> (i32, i32, i32) {
    %c0_i32 = arith.constant 0 : i32
    %c0_i32_0 = arith.constant 0 : i32
    %c0_i32_1 = arith.constant 0 : i32
    return %arg0, %c0_i32, %c0_i32_0 : i32, i32, i32
  }
}

</mosaic_0001>

<llo_original>
// kernel: autostereo_forward.1
$region0: #{autostereo_forward.1}
  #allocation0 [shape = 'u32[]', space=smem, size = 0x4, offset = 0x4, fixed_abs, tag = 'smem constant byte address 0x4 - core index']
  #allocation1 [shape = 'u32[144,128]{1,0:T(1,128)}', space=vmem, size = 0x12000, scoped, tag = 'internal scratch']
  %s0 = inlined_call_operand.vmem [shape: f32[2,16,16,3], index: 0, kind: input, shape index: {}]
  %s1 = inlined_call_operand.vmem [shape: f32[9,3,192], index: 1, kind: input, shape index: {}]
  %s2 = inlined_call_operand.vmem [shape: f32[1,192], index: 2, kind: input, shape index: {}]
  %s3 = inlined_call_operand.vmem [shape: f32[192,10], index: 3, kind: input, shape index: {}]
  %s4 = inlined_call_operand.vmem [shape: f32[1,10], index: 4, kind: input, shape index: {}]
  %s5 = inlined_call_operand.hbm [shape: f32[2,1,10], index: 5, kind: output, shape index: {}]
  %s6 = sld [smem:[#allocation0]]
  $region53: #{autostereo_forward.1} parent=0
    _
  %s8 = ssub.s32 1, %s6
  %s9 = scalar_select 0, %s8, %s6
  $region1: #{autostereo_forward.1} parent=0
    #allocation2 [shape = 'u8[1024]{0}', space=vmem, size = 0x400, scoped, tag = 'output window, operand 0']
    #allocation3 [shape = 's32[2]{0}', space=sflag, size = 0x8, scoped, tag = 'scoped memory for autostereo_forward.1']
    %10 = vsyncpa [#allocation3], 0
    %s11 = scalar_lea.sflag [#allocation3], 1
    %12 = vsyncpa %s11, 0
    loop: start=0, step=1, limit=4
    $region2: #{autostereo_forward.1} parent=1 // loop_pre_header
      _
    $region3: #{autostereo_forward.1} parent=1 // loop_header
      %s14 = sphi 0, %s18
      %p15 = scmp.ge.s32.totalorder %s14, 4
      %s24 = sphi 0, %s26
      %s27 = sphi 0, %s24
      %s28 = sphi 0, %s27
      %s44 = sphi 0, %s28
      %s48 = sphi 0, %s48
      %s50 = sphi 0, %s48
      %s51 = sphi 0, %s50
      %s65 = sphi 0, %s51
      %s69 = sphi 0, %s69
      %s71 = sphi 0, %s69
      %s72 = sphi 0, %s71
      %s86 = sphi 0, %s72
      %s90 = sphi 0, %s90
      %s92 = sphi 0, %s90
      %s93 = sphi 0, %s92
      %s107 = sphi 0, %s93
      %s111 = sphi 0, %s111
      %s113 = sphi 0, %s111
      %s114 = sphi 0, %s113
      %s128 = sphi 0, %s114
      %s134 = sphi 0, %s136
      %s137 = sphi 0, %s134
      %s138 = sphi 0, %s137
      %s154 = sphi 0, %s138
    $region4: #{autostereo_forward.1} parent=1 // loop_header_branch
      %17 = sbr.rel (%p15) target = $region8
    $region5: #{autostereo_forward.1} parent=1 // loop_body
      %s19 = ssub.s32 %s14, 1
      %s20 = ssub.s32 %s14, 2
      %s21 = sadd.s32 %s14, 1
      %s22 = ssub.s32 %s14, %s21
      %p23 = scmp.eq.s32.totalorder %s22, 0
      %s25 = sadd.s32 %s24, 1
      %s26 = scalar_select %p23, %s24, %s25
      %p29 = pneg %p23
      %p30 = scmp.eq.s32.totalorder %s14, 1
      %p31 = por %p29, %p30
      %p32 = scmp.ne.s32.totalorder %s24, %s27
      %p33 = scmp.eq.s32.totalorder %s14, 0
      %p34 = por %p32, %p33
      %p35 = scmp.ne.s32.totalorder %s24, %s27
      %p36 = scmp.eq.s32.totalorder %s19, 1
      %p37 = por %p35, %p36
      %p38 = scmp.ne.s32.totalorder %s27, %s28
      %p39 = scmp.eq.s32.totalorder %s19, 0
      %p40 = por %p38, %p39
      %p41 = scmp.ne.s32.totalorder %s27, %s28
      %p42 = scmp.eq.s32.totalorder %s20, 1
      %p43 = por %p41, %p42
      %p45 = scmp.ne.s32.totalorder %s28, %s44
      %p46 = scmp.eq.s32.totalorder %s20, 0
      %p47 = por %p45, %p46
      %s49 = sadd.s32 %s48, 1
      %p52 = scmp.eq.s32.totalorder %s14, 1
      %p53 = scmp.ne.s32.totalorder %s48, %s50
      %p54 = scmp.eq.s32.totalorder %s14, 0
      %p55 = por %p53, %p54
      %p56 = scmp.ne.s32.totalorder %s48, %s50
      %p57 = scmp.eq.s32.totalorder %s19, 1
      %p58 = por %p56, %p57
      %p59 = scmp.ne.s32.totalorder %s50, %s51
      %p60 = scmp.eq.s32.totalorder %s19, 0
      %p61 = por %p59, %p60
      %p62 = scmp.ne.s32.totalorder %s50, %s51
      %p63 = scmp.eq.s32.totalorder %s20, 1
      %p64 = por %p62, %p63
      %p66 = scmp.ne.s32.totalorder %s51, %s65
      %p67 = scmp.eq.s32.totalorder %s20, 0
      %p68 = por %p66, %p67
      %s70 = sadd.s32 %s69, 1
      %p73 = scmp.eq.s32.totalorder %s14, 1
      %p74 = scmp.ne.s32.totalorder %s69, %s71
      %p75 = scmp.eq.s32.totalorder %s14, 0
      %p76 = por %p74, %p75
      %p77 = scmp.ne.s32.totalorder %s69, %s71
      %p78 = scmp.eq.s32.totalorder %s19, 1
      %p79 = por %p77, %p78
      %p80 = scmp.ne.s32.totalorder %s71, %s72
      %p81 = scmp.eq.s32.totalorder %s19, 0
      %p82 = por %p80, %p81
      %p83 = scmp.ne.s32.totalorder %s71, %s72
      %p84 = scmp.eq.s32.totalorder %s20, 1
      %p85 = por %p83, %p84
      %p87 = scmp.ne.s32.totalorder %s72, %s86
      %p88 = scmp.eq.s32.totalorder %s20, 0
      %p89 = por %p87, %p88
      %s91 = sadd.s32 %s90, 1
      %p94 = scmp.eq.s32.totalorder %s14, 1
      %p95 = scmp.ne.s32.totalorder %s90, %s92
      %p96 = scmp.eq.s32.totalorder %s14, 0
      %p97 = por %p95, %p96
      %p98 = scmp.ne.s32.totalorder %s90, %s92
      %p99 = scmp.eq.s32.totalorder %s19, 1
      %p100 = por %p98, %p99
      %p101 = scmp.ne.s32.totalorder %s92, %s93
      %p102 = scmp.eq.s32.totalorder %s19, 0
      %p103 = por %p101, %p102
      %p104 = scmp.ne.s32.totalorder %s92, %s93
      %p105 = scmp.eq.s32.totalorder %s20, 1
      %p106 = por %p104, %p105
      %p108 = scmp.ne.s32.totalorder %s93, %s107
      %p109 = scmp.eq.s32.totalorder %s20, 0
      %p110 = por %p108, %p109
      %s112 = sadd.s32 %s111, 1
      %p115 = scmp.eq.s32.totalorder %s14, 1
      %p116 = scmp.ne.s32.totalorder %s111, %s113
      %p117 = scmp.eq.s32.totalorder %s14, 0
      %p118 = por %p116, %p117
      %p119 = scmp.ne.s32.totalorder %s111, %s113
      %p120 = scmp.eq.s32.totalorder %s19, 1
      %p121 = por %p119, %p120
      %p122 = scmp.ne.s32.totalorder %s113, %s114
      %p123 = scmp.eq.s32.totalorder %s19, 0
      %p124 = por %p122, %p123
      %p125 = scmp.ne.s32.totalorder %s113, %s114
      %p126 = scmp.eq.s32.totalorder %s20, 1
      %p127 = por %p125, %p126
      %p129 = scmp.ne.s32.totalorder %s114, %s128
      %p130 = scmp.eq.s32.totalorder %s20, 0
      %p131 = por %p129, %p130
      %s132 = ssub.s32 %s14, %s21
      %p133 = scmp.eq.s32.totalorder %s132, 0
      %s135 = sadd.s32 %s134, 1
      %s136 = scalar_select %p133, %s134, %s135
      %p139 = pneg %p133
      %p140 = scmp.eq.s32.totalorder %s14, 1
      %p141 = por %p139, %p140
      %p142 = scmp.ne.s32.totalorder %s134, %s137
      %p143 = scmp.eq.s32.totalorder %s14, 0
      %p144 = por %p142, %p143
      %p145 = scmp.ne.s32.totalorder %s134, %s137
      %p146 = scmp.eq.s32.totalorder %s19, 1
      %p147 = por %p145, %p146
      %p148 = scmp.ne.s32.totalorder %s137, %s138
      %p149 = scmp.eq.s32.totalorder %s19, 0
      %p150 = por %p148, %p149
      %p151 = scmp.ne.s32.totalorder %s137, %s138
      %p152 = scmp.eq.s32.totalorder %s20, 1
      %p153 = por %p151, %p152
      %p155 = scmp.ne.s32.totalorder %s138, %s154
      %p156 = scmp.eq.s32.totalorder %s20, 0
      %p157 = por %p155, %p156
      %p158 = scmp.le.s32.totalorder 1, %s14
      %p159 = scmp.lt.s32.totalorder %s14, 3
      %p160 = pnand %p158, %p159
      %p161 = pneg %p160
      // Predicated region
      $region9: #{autostereo_forward.1} parent=5 // pred_check
        _
      $region10: #{autostereo_forward.1} parent=5 // pred_check_branch
        %163 = sbr.rel (%p160) target = $region12
      $region11: #{autostereo_forward.1} parent=5 // pred_region
        %s164 = ssub.s32 %s14, 1
        // Predicated region
        $region13: #{autostereo_forward.1} parent=11 // pred_check
          %p165 = pneg %p61
        $region14: #{autostereo_forward.1} parent=11 // pred_check_branch
          %167 = sbr.rel (%p165) target = $region16
        $region15: #{autostereo_forward.1} parent=11 // pred_region
          _
        $region16: #{autostereo_forward.1} parent=11 // pred_fallthru
          _
        // Predicated region
        $region17: #{autostereo_forward.1} parent=11 // pred_check
          %p168 = pneg %p82
        $region18: #{autostereo_forward.1} parent=11 // pred_check_branch
          %170 = sbr.rel (%p168) target = $region20
        $region19: #{autostereo_forward.1} parent=11 // pred_region
          _
        $region20: #{autostereo_forward.1} parent=11 // pred_fallthru
          _
        // Predicated region
        $region21: #{autostereo_forward.1} parent=11 // pred_check
          %p171 = pneg %p103
        $region22: #{autostereo_forward.1} parent=11 // pred_check_branch
          %173 = sbr.rel (%p171) target = $region24
        $region23: #{autostereo_forward.1} parent=11 // pred_region
          _
        $region24: #{autostereo_forward.1} parent=11 // pred_fallthru
          _
        // Predicated region
        $region25: #{autostereo_forward.1} parent=11 // pred_check
          %p174 = pneg %p124
        $region26: #{autostereo_forward.1} parent=11 // pred_check_branch
          %176 = sbr.rel (%p174) target = $region28
        $region27: #{autostereo_forward.1} parent=11 // pred_region
          _
        $region28: #{autostereo_forward.1} parent=11 // pred_fallthru
          _
      $region12: #{autostereo_forward.1} parent=5 // pred_fallthru
        _
      %p177 = scmp.lt.s32.totalorder %s14, 2
      // Predicated region
      $region29: #{autostereo_forward.1} parent=5 // pred_check
        %p178 = pneg %p177
      $region30: #{autostereo_forward.1} parent=5 // pred_check_branch
        %180 = sbr.rel (%p178) target = $region32
      $region31: #{autostereo_forward.1} parent=5 // pred_region
        // Predicated region
        $region33: #{autostereo_forward.1} parent=31 // pred_check
          %p181 = pneg %p34
        $region34: #{autostereo_forward.1} parent=31 // pred_check_branch
          %183 = sbr.rel (%p181) target = $region36
        $region35: #{autostereo_forward.1} parent=31 // pred_region
          %p184 = scmp.lt.s32.totalorder %s14, 1
          %s185 = scalar_select %p184, %s14, 1
          %s186 = smul.addr %s185, 32
          %s187 = smul.addr %s186, 8
          %s188 = scalar_lea.vmem %s0, %s187
        $region36: #{autostereo_forward.1} parent=31 // pred_fallthru
          _
      $region32: #{autostereo_forward.1} parent=5 // pred_fallthru
        _
      %p189 = scmp.le.s32.totalorder 1, %s14
      %p190 = scmp.lt.s32.totalorder %s14, 3
      %p191 = pnand %p189, %p190
      %p192 = pneg %p191
      // Predicated region
      $region37: #{autostereo_forward.1} parent=5 // pred_check
        _
      $region38: #{autostereo_forward.1} parent=5 // pred_check_branch
        %194 = sbr.rel (%p191) target = $region40
      $region39: #{autostereo_forward.1} parent=5 // pred_region
        %s195 = ssub.s32 %s14, 1
        %p196 = scmp.lt.s32.totalorder %s19, 1
        %s197 = scalar_select %p196, %s19, 1
        %s198 = smul.addr %s197, 32
        %s199 = smul.addr %s198, 8
        %s200 = scalar_lea.vmem %s0, %s199
        %p201 = pneg %p40
        %p202 = pneg %p37
        %p203 = pneg %p61
        %p204 = pneg %p58
        %p205 = pneg %p82
        %p206 = pneg %p79
        %p207 = pneg %p103
        %p208 = pneg %p100
        %p209 = pneg %p124
        %p210 = pneg %p121
        %p211 = pneg %p150
        %p212 = pneg %p147
        %s213 = sand.u32 %s137, 1
        %s214 = scalar_lea.sflag [#allocation3], %s213
        %s215 = sand.u32 %s137, 1
        %s216 = scalar_lea.vmem [#allocation2], %s215
        %p217 = scmp.lt.s32.totalorder %s19, 1
        %s218 = scalar_select %p217, %s19, 1
        %s219 = smul.addr %s218, 32
        %s220 = smul.addr %s219, 8
        %s221 = scalar_lea.vmem %s0, %s220
        %v222 = vld [vmem:[%s221] sm:$0xff]
        %v223 = vld [vmem:[%s221 + $0x8] sm:$0xff]
        %v224 = vld [vmem:[%s221 + $0x10] sm:$0xff]
        %v225 = vld [vmem:[%s221 + $0x18] sm:$0xff]
        %v226 = vld [vmem:[%s221 + $0x20] sm:$0xff]
        %v227 = vld [vmem:[%s221 + $0x28] sm:$0xff]
        %v228 = vld [vmem:[%s221 + $0x30] sm:$0xff]
        %v229 = vld [vmem:[%s221 + $0x38] sm:$0xff]
        %v230 = vld [vmem:[%s221 + $0x40] sm:$0xff]
        %v231 = vld [vmem:[%s221 + $0x48] sm:$0xff]
        %v232 = vld [vmem:[%s221 + $0x50] sm:$0xff]
        %v233 = vld [vmem:[%s221 + $0x58] sm:$0xff]
        %v234 = vld [vmem:[%s221 + $0x60] sm:$0xff]
        %v235 = vld [vmem:[%s221 + $0x68] sm:$0xff]
        %v236 = vld [vmem:[%s221 + $0x70] sm:$0xff]
        %v237 = vld [vmem:[%s221 + $0x78] sm:$0xff]
        %v238 = vld [vmem:[%s221 + $0x80] sm:$0xff]
        %v239 = vld [vmem:[%s221 + $0x88] sm:$0xff]
        %v240 = vld [vmem:[%s221 + $0x90] sm:$0xff]
        %v241 = vld [vmem:[%s221 + $0x98] sm:$0xff]
        %v242 = vld [vmem:[%s221 + $0xa0] sm:$0xff]
        %v243 = vld [vmem:[%s221 + $0xa8] sm:$0xff]
        %v244 = vld [vmem:[%s221 + $0xb0] sm:$0xff]
        %v245 = vld [vmem:[%s221 + $0xb8] sm:$0xff]
        %v246 = vld [vmem:[%s221 + $0xc0] sm:$0xff]
        %v247 = vld [vmem:[%s221 + $0xc8] sm:$0xff]
        %v248 = vld [vmem:[%s221 + $0xd0] sm:$0xff]
        %v249 = vld [vmem:[%s221 + $0xd8] sm:$0xff]
        %v250 = vld [vmem:[%s221 + $0xe0] sm:$0xff]
        %v251 = vld [vmem:[%s221 + $0xe8] sm:$0xff]
        %v252 = vld [vmem:[%s221 + $0xf0] sm:$0xff]
        %v253 = vld [vmem:[%s221 + $0xf8] sm:$0xff]
        %v254 = vld [vmem:[%s2] sm:$0x3]
        %vm255 = vcmask 23552
        %v256 = vsel %vm255, %v222, 0.0
        %v257 = vsel %vm255, %v224, 0.0
        %v258 = vadd.f32 %v256, %v257
        %v259 = vsel %vm255, %v226, 0.0
        %v260 = vadd.f32 %v258, %v259
        %v261 = vsel %vm255, %v228, 0.0
        %v262 = vadd.f32 %v260, %v261
        %v263 = vsel %vm255, %v230, 0.0
        %v264 = vadd.f32 %v262, %v263
        %v265 = vsel %vm255, %v232, 0.0
        %v266 = vadd.f32 %v264, %v265
        %v267 = vsel %vm255, %v234, 0.0
        %v268 = vadd.f32 %v266, %v267
        %v269 = vsel %vm255, %v236, 0.0
        %v270 = vadd.f32 %v268, %v269
        %v271 = vsel %vm255, %v238, 0.0
        %v272 = vadd.f32 %v270, %v271
        %v273 = vsel %vm255, %v240, 0.0
        %v274 = vadd.f32 %v272, %v273
        %v275 = vsel %vm255, %v242, 0.0
        %v276 = vadd.f32 %v274, %v275
        %v277 = vsel %vm255, %v244, 0.0
        %v278 = vadd.f32 %v276, %v277
        %v279 = vsel %vm255, %v246, 0.0
        %v280 = vadd.f32 %v278, %v279
        %v281 = vsel %vm255, %v248, 0.0
        %v282 = vadd.f32 %v280, %v281
        %v283 = vsel %vm255, %v250, 0.0
        %v284 = vadd.f32 %v282, %v283
        %vm285 = vcmask 22528
        %v286 = vsel %vm285, %v223, 0.0
        %v287 = vsel %vm285, %v225, 0.0
        %v288 = vadd.f32 %v286, %v287
        %v289 = vsel %vm285, %v227, 0.0
        %v290 = vadd.f32 %v288, %v289
        %v291 = vsel %vm285, %v229, 0.0
        %v292 = vadd.f32 %v290, %v291
        %v293 = vsel %vm285, %v231, 0.0
        %v294 = vadd.f32 %v292, %v293
        %v295 = vsel %vm285, %v233, 0.0
        %v296 = vadd.f32 %v294, %v295
        %v297 = vsel %vm285, %v235, 0.0
        %v298 = vadd.f32 %v296, %v297
        %v299 = vsel %vm285, %v237, 0.0
        %v300 = vadd.f32 %v298, %v299
        %v301 = vsel %vm285, %v239, 0.0
        %v302 = vadd.f32 %v300, %v301
        %v303 = vsel %vm285, %v241, 0.0
        %v304 = vadd.f32 %v302, %v303
        %v305 = vsel %vm285, %v243, 0.0
        %v306 = vadd.f32 %v304, %v305
        %v307 = vsel %vm285, %v245, 0.0
        %v308 = vadd.f32 %v306, %v307
        %v309 = vsel %vm285, %v247, 0.0
        %v310 = vadd.f32 %v308, %v309
        %v311 = vsel %vm285, %v249, 0.0
        %v312 = vadd.f32 %v310, %v311
        %v313 = vsel %vm285, %v251, 0.0
        %v314 = vadd.f32 %v312, %v313
        %v315 = vsel %vm255, %v284, 0.0
        %v316 = vsel %vm285, %v314, 0.0
        %v317 = vadd.f32 %v315, %v316
        %v318 = vrot.slane %v317, 4
        %v319 = vadd.f32 %v317, %v318
        %v320 = vrot.slane %v319, 2
        %v321 = vadd.f32 %v319, %v320
        %v322 = vrot.slane %v321, 1
        %v323 = vadd.f32 %v321, %v322
        %v324 = vmul.f32 %v323, 0.00390625
        %v325 = vld [vmem:[%s1] sm:$0x77]
        %v327 = vcombine.high %v325, %v325
        %v329 = vsel %vm255, %v324, 0
        %vm331 = vcmask 1042432
        %v332 = vsel %vm331, %v325, 0
        %v334 = vsel %vm331, %v327, 0
        %v336 = vand.u32 %v334, 4294901760
        %337 = vmatprep.subr.mxu0 %v336
        %v338 = vand.u32 %v332, 4294901760
        %339 = vmatpush1.msra.mxu0 %v338
        %340 = vmatprep.subr.mxu0 0.0
        %341 = vmatpush1.msra.mxu0 0.0
        %342 = vmatprep.subr.mxu0 0.0
        %343 = vmatpush1.msra.mxu0 0.0
        %344 = vmatprep.subr.mxu0 0.0
        %345 = vmatpush1.msra.mxu0 0.0
        %346 = vmatprep.subr.mxu0 0.0
        %347 = vmatpush1.msra.mxu0 0.0
        %348 = vmatprep.subr.mxu0 0.0
        %349 = vmatpush1.msra.mxu0 0.0
        %350 = vmatprep.subr.mxu0 0.0
        %351 = vmatpush1.msra.mxu0 0.0
        %352 = vmatprep.subr.mxu0 0.0
        %353 = vmatpush1.msra.mxu0 0.0
        %354 = vmatprep.subr.mxu0 0.0
        %355 = vmatpush1.msra.mxu0 0.0
        %356 = vmatprep.subr.mxu0 0.0
        %357 = vmatpush1.msra.mxu0 0.0
        %358 = vmatprep.subr.mxu0 0.0
        %359 = vmatpush1.msra.mxu0 0.0
        %360 = vmatprep.subr.mxu0 0.0
        %361 = vmatpush1.msra.mxu0 0.0
        %362 = vmatprep.subr.mxu0 0.0
        %363 = vmatpush1.msra.mxu0 0.0
        %364 = vmatprep.subr.mxu0 0.0
        %365 = vmatpush1.msra.mxu0 0.0
        %366 = vmatprep.subr.mxu0 0.0
        %367 = vmatpush1.msra.mxu0 0.0
        %368 = vmatprep.subr.mxu0 0.0
        %369 = vmatpush1.msra.mxu0 0.0
        %370 = vmatprep.subr.mxu0 0.0
        %371 = vmatpush1.msra.mxu0 0.0
        %372 = vmatprep.subr.mxu0 0.0
        %373 = vmatpush1.msra.mxu0 0.0
        %374 = vmatprep.subr.mxu0 0.0
        %375 = vmatpush1.msra.mxu0 0.0
        %376 = vmatprep.subr.mxu0 0.0
        %377 = vmatpush1.msra.mxu0 0.0
        %378 = vmatprep.subr.mxu0 0.0
        %379 = vmatpush1.msra.mxu0 0.0
        %380 = vmatprep.subr.mxu0 0.0
        %381 = vmatpush1.msra.mxu0 0.0
        %382 = vmatprep.subr.mxu0 0.0
        %383 = vmatpush1.msra.mxu0 0.0
        %384 = vmatprep.subr.mxu0 0.0
        %385 = vmatpush1.msra.mxu0 0.0
        %386 = vmatprep.subr.mxu0 0.0
        %387 = vmatpush1.msra.mxu0 0.0
        %388 = vmatprep.subr.mxu0 0.0
        %389 = vmatpush1.msra.mxu0 0.0
        %390 = vmatprep.subr.mxu0 0.0
        %391 = vmatpush1.msra.mxu0 0.0
        %392 = vmatprep.subr.mxu0 0.0
        %393 = vmatpush1.msra.mxu0 0.0
        %394 = vmatprep.subr.mxu0 0.0
        %395 = vmatpush1.msra.mxu0 0.0
        %396 = vmatprep.subr.mxu0 0.0
        %397 = vmatpush1.msra.mxu0 0.0
        %398 = vmatprep.subr.mxu0 0.0
        %399 = vmatpush1.msra.mxu0 0.0
        %400 = vmatprep.subr.mxu0 0.0
        %401 = vmatpush1.msra.mxu0 0.0
        %402 = vmatprep.mubr.f32.mxu0 0.0
        %v403 = vand.u32 %v329, 4294901760
        %v404 = vsub.f32 %v329, %v403
        %v405 = vand.u32 %v404, 4294901760
        %v406 = vsub.f32 %v404, %v405
        %v407 = vand.u32 %v406, 4294901760
        %408 = vmatmul.mubr.f32.gmra.mrb[0].mxu0 %v407
        %v409 = vpop.f32.mrb[0].mxu0
        %v410 = vadd.f32 0.0, %v409
        %v411 = vpop.f32.mrb[0].mxu0
        %v412 = vadd.f32 0.0, %v411
        %413 = vdwg.mxu0
        %v414 = vand.u32 %v334, 4294901760
        %v415 = vsub.f32 %v334, %v414
        %v416 = vand.u32 %v415, 4294901760
        %v417 = vsub.f32 %v415, %v416
        %v418 = vand.u32 %v417, 4294901760
        %419 = vmatprep.subr.mxu0 %v418
        %v420 = vand.u32 %v332, 4294901760
        %v421 = vsub.f32 %v332, %v420
        %v422 = vand.u32 %v421, 4294901760
        %v423 = vsub.f32 %v421, %v422
        %v424 = vand.u32 %v423, 4294901760
        %425 = vmatpush1.msra.mxu0 %v424
        %426 = vmatprep.subr.mxu0 0.0
        %427 = vmatpush1.msra.mxu0 0.0
        %428 = vmatprep.subr.mxu0 0.0
        %429 = vmatpush1.msra.mxu0 0.0
        %430 = vmatprep.subr.mxu0 0.0
        %431 = vmatpush1.msra.mxu0 0.0
        %432 = vmatprep.subr.mxu0 0.0
        %433 = vmatpush1.msra.mxu0 0.0
        %434 = vmatprep.subr.mxu0 0.0
        %435 = vmatpush1.msra.mxu0 0.0
        %436 = vmatprep.subr.mxu0 0.0
        %437 = vmatpush1.msra.mxu0 0.0
        %438 = vmatprep.subr.mxu0 0.0
        %439 = vmatpush1.msra.mxu0 0.0
        %440 = vmatprep.subr.mxu0 0.0
        %441 = vmatpush1.msra.mxu0 0.0
        %442 = vmatprep.subr.mxu0 0.0
        %443 = vmatpush1.msra.mxu0 0.0
        %444 = vmatprep.subr.mxu0 0.0
        %445 = vmatpush1.msra.mxu0 0.0
        %446 = vmatprep.subr.mxu0 0.0
        %447 = vmatpush1.msra.mxu0 0.0
        %448 = vmatprep.subr.mxu0 0.0
        %449 = vmatpush1.msra.mxu0 0.0
        %450 = vmatprep.subr.mxu0 0.0
        %451 = vmatpush1.msra.mxu0 0.0
        %452 = vmatprep.subr.mxu0 0.0
        %453 = vmatpush1.msra.mxu0 0.0
        %454 = vmatprep.subr.mxu0 0.0
        %455 = vmatpush1.msra.mxu0 0.0
        %456 = vmatprep.subr.mxu0 0.0
        %457 = vmatpush1.msra.mxu0 0.0
        %458 = vmatprep.subr.mxu0 0.0
        %459 = vmatpush1.msra.mxu0 0.0
        %460 = vmatprep.subr.mxu0 0.0
        %461 = vmatpush1.msra.mxu0 0.0
        %462 = vmatprep.subr.mxu0 0.0
        %463 = vmatpush1.msra.mxu0 0.0
        %464 = vmatprep.subr.mxu0 0.0
        %465 = vmatpush1.msra.mxu0 0.0
        %466 = vmatprep.subr.mxu0 0.0
        %467 = vmatpush1.msra.mxu0 0.0
        %468 = vmatprep.subr.mxu0 0.0
        %469 = vmatpush1.msra.mxu0 0.0
        %470 = vmatprep.subr.mxu0 0.0
        %471 = vmatpush1.msra.mxu0 0.0
        %472 = vmatprep.subr.mxu0 0.0
        %473 = vmatpush1.msra.mxu0 0.0
        %474 = vmatprep.subr.mxu0 0.0
        %475 = vmatpush1.msra.mxu0 0.0
        %476 = vmatprep.subr.mxu0 0.0
        %477 = vmatpush1.msra.mxu0 0.0
        %478 = vmatprep.subr.mxu0 0.0
        %479 = vmatpush1.msra.mxu0 0.0
        %480 = vmatprep.subr.mxu0 0.0
        %481 = vmatpush1.msra.mxu0 0.0
        %482 = vmatprep.subr.mxu0 0.0
        %483 = vmatpush1.msra.mxu0 0.0
        %484 = vmatprep.subr.mxu0 0.0
        %485 = vmatpush1.msra.mxu0 0.0
        %486 = vmatprep.subr.mxu0 0.0
        %487 = vmatpush1.msra.mxu0 0.0
        %488 = vmatprep.mubr.f32.mxu0 0.0
        %v489 = vand.u32 %v329, 4294901760
        %490 = vmatmul.mubr.f32.gmra.mrb[0].mxu0 %v489
        %v491 = vpop.f32.mrb[0].mxu0
        %v492 = vadd.f32 %v410, %v491
        %v493 = vpop.f32.mrb[0].mxu0
        %v494 = vadd.f32 %v412, %v493
        %495 = vdwg.mxu0
        %v496 = vand.u32 %v334, 4294901760
        %v497 = vsub.f32 %v334, %v496
        %498 = vmatprep.subr.mxu0 %v497
        %v499 = vand.u32 %v332, 4294901760
        %v500 = vsub.f32 %v332, %v499
        %501 = vmatpush1.msra.mxu0 %v500
        %502 = vmatprep.subr.mxu0 0.0
        %503 = vmatpush1.msra.mxu0 0.0
        %504 = vmatprep.subr.mxu0 0.0
        %505 = vmatpush1.msra.mxu0 0.0
        %506 = vmatprep.subr.mxu0 0.0
        %507 = vmatpush1.msra.mxu0 0.0
        %508 = vmatprep.subr.mxu0 0.0
        %509 = vmatpush1.msra.mxu0 0.0
        %510 = vmatprep.subr.mxu0 0.0
        %511 = vmatpush1.msra.mxu0 0.0
        %512 = vmatprep.subr.mxu0 0.0
        %513 = vmatpush1.msra.mxu0 0.0
        %514 = vmatprep.subr.mxu0 0.0
        %515 = vmatpush1.msra.mxu0 0.0
        %516 = vmatprep.subr.mxu0 0.0
        %517 = vmatpush1.msra.mxu0 0.0
        %518 = vmatprep.subr.mxu0 0.0
        %519 = vmatpush1.msra.mxu0 0.0
        %520 = vmatprep.subr.mxu0 0.0
        %521 = vmatpush1.msra.mxu0 0.0
        %522 = vmatprep.subr.mxu0 0.0
        %523 = vmatpush1.msra.mxu0 0.0
        %524 = vmatprep.subr.mxu0 0.0
        %525 = vmatpush1.msra.mxu0 0.0
        %526 = vmatprep.subr.mxu0 0.0
        %527 = vmatpush1.msra.mxu0 0.0
        %528 = vmatprep.subr.mxu0 0.0
        %529 = vmatpush1.msra.mxu0 0.0
        %530 = vmatprep.subr.mxu0 0.0
        %531 = vmatpush1.msra.mxu0 0.0
        %532 = vmatprep.subr.mxu0 0.0
        %533 = vmatpush1.msra.mxu0 0.0
        %534 = vmatprep.subr.mxu0 0.0
        %535 = vmatpush1.msra.mxu0 0.0
        %536 = vmatprep.subr.mxu0 0.0
        %537 = vmatpush1.msra.mxu0 0.0
        %538 = vmatprep.subr.mxu0 0.0
        %539 = vmatpush1.msra.mxu0 0.0
        %540 = vmatprep.subr.mxu0 0.0
        %541 = vmatpush1.msra.mxu0 0.0
        %542 = vmatprep.subr.mxu0 0.0
        %543 = vmatpush1.msra.mxu0 0.0
        %544 = vmatprep.subr.mxu0 0.0
        %545 = vmatpush1.msra.mxu0 0.0
        %546 = vmatprep.subr.mxu0 0.0
        %547 = vmatpush1.msra.mxu0 0.0
        %548 = vmatprep.subr.mxu0 0.0
        %549 = vmatpush1.msra.mxu0 0.0
        %550 = vmatprep.subr.mxu0 0.0
        %551 = vmatpush1.msra.mxu0 0.0
        %552 = vmatprep.subr.mxu0 0.0
        %553 = vmatpush1.msra.mxu0 0.0
        %554 = vmatprep.subr.mxu0 0.0
        %555 = vmatpush1.msra.mxu0 0.0
        %556 = vmatprep.subr.mxu0 0.0
        %557 = vmatpush1.msra.mxu0 0.0
        %558 = vmatprep.subr.mxu0 0.0
        %559 = vmatpush1.msra.mxu0 0.0
        %560 = vmatprep.subr.mxu0 0.0
        %561 = vmatpush1.msra.mxu0 0.0
        %562 = vmatprep.subr.mxu0 0.0
        %563 = vmatpush1.msra.mxu0 0.0
        %564 = vmatprep.mubr.f32.mxu0 0.0
        %v565 = vand.u32 %v329, 4294901760
        %v566 = vsub.f32 %v329, %v565
        %567 = vmatmul.mubr.f32.gmra.mrb[0].mxu0 %v566
        %v568 = vpop.f32.mrb[0].mxu0
        %v569 = vadd.f32 %v492, %v568
        %v570 = vpop.f32.mrb[0].mxu0
        %v571 = vadd.f32 %v494, %v570
        %572 = vdwg.mxu0
        %v573 = vand.u32 %v334, 4294901760
        %574 = vmatprep.subr.mxu0 %v573
        %v575 = vand.u32 %v332, 4294901760
        %576 = vmatpush1.msra.mxu0 %v575
        %577 = vmatprep.subr.mxu0 0.0
        %578 = vmatpush1.msra.mxu0 0.0
        %579 = vmatprep.subr.mxu0 0.0
        %580 = vmatpush1.msra.mxu0 0.0
        %581 = vmatprep.subr.mxu0 0.0
        %582 = vmatpush1.msra.mxu0 0.0
        %583 = vmatprep.subr.mxu0 0.0
        %584 = vmatpush1.msra.mxu0 0.0
        %585 = vmatprep.subr.mxu0 0.0
        %586 = vmatpush1.msra.mxu0 0.0
        %587 = vmatprep.subr.mxu0 0.0
        %588 = vmatpush1.msra.mxu0 0.0
        %589 = vmatprep.subr.mxu0 0.0
        %590 = vmatpush1.msra.mxu0 0.0
        %591 = vmatprep.subr.mxu0 0.0
        %592 = vmatpush1.msra.mxu0 0.0
        %593 = vmatprep.subr.mxu0 0.0
        %594 = vmatpush1.msra.mxu0 0.0
        %595 = vmatprep.subr.mxu0 0.0
        %596 = vmatpush1.msra.mxu0 0.0
        %597 = vmatprep.subr.mxu0 0.0
        %598 = vmatpush1.msra.mxu0 0.0
        %599 = vmatprep.subr.mxu0 0.0
        %600 = vmatpush1.msra.mxu0 0.0
        %601 = vmatprep.subr.mxu0 0.0
        %602 = vmatpush1.msra.mxu0 0.0
        %603 = vmatprep.subr.mxu0 0.0
        %604 = vmatpush1.msra.mxu0 0.0
        %605 = vmatprep.subr.mxu0 0.0
        %606 = vmatpush1.msra.mxu0 0.0
        %607 = vmatprep.subr.mxu0 0.0
        %608 = vmatpush1.msra.mxu0 0.0
        %609 = vmatprep.subr.mxu0 0.0
        %610 = vmatpush1.msra.mxu0 0.0
        %611 = vmatprep.subr.mxu0 0.0
        %612 = vmatpush1.msra.mxu0 0.0
        %613 = vmatprep.subr.mxu0 0.0
        %614 = vmatpush1.msra.mxu0 0.0
        %615 = vmatprep.subr.mxu0 0.0
        %616 = vmatpush1.msra.mxu0 0.0
        %617 = vmatprep.subr.mxu0 0.0
        %618 = vmatpush1.msra.mxu0 0.0
        %619 = vmatprep.subr.mxu0 0.0
        %620 = vmatpush1.msra.mxu0 0.0
        %621 = vmatprep.subr.mxu0 0.0
        %622 = vmatpush1.msra.mxu0 0.0
        %623 = vmatprep.subr.mxu0 0.0
        %624 = vmatpush1.msra.mxu0 0.0
        %625 = vmatprep.subr.mxu0 0.0
        %626 = vmatpush1.msra.mxu0 0.0
        %627 = vmatprep.subr.mxu0 0.0
        %628 = vmatpush1.msra.mxu0 0.0
        %629 = vmatprep.subr.mxu0 0.0
        %630 = vmatpush1.msra.mxu0 0.0
        %631 = vmatprep.subr.mxu0 0.0
        %632 = vmatpush1.msra.mxu0 0.0
        %633 = vmatprep.subr.mxu0 0.0
        %634 = vmatpush1.msra.mxu0 0.0
        %635 = vmatprep.subr.mxu0 0.0
        %636 = vmatpush1.msra.mxu0 0.0
        %637 = vmatprep.subr.mxu0 0.0
        %638 = vmatpush1.msra.mxu0 0.0
        %639 = vmatprep.mubr.f32.mxu0 0.0
        %v640 = vand.u32 %v329, 4294901760
        %v641 = vsub.f32 %v329, %v640
        %v642 = vand.u32 %v641, 4294901760
        %643 = vmatmul.mubr.f32.gmra.mrb[0].mxu0 %v642
        %v644 = vpop.f32.mrb[0].mxu0
        %v645 = vadd.f32 %v569, %v644
        %v646 = vpop.f32.mrb[0].mxu0
        %v647 = vadd.f32 %v571, %v646
        %648 = vdwg.mxu0
        %v649 = vand.u32 %v334, 4294901760
        %v650 = vsub.f32 %v334, %v649
        %v651 = vand.u32 %v650, 4294901760
        %652 = vmatprep.subr.mxu0 %v651
        %v653 = vand.u32 %v332, 4294901760
        %v654 = vsub.f32 %v332, %v653
        %v655 = vand.u32 %v654, 4294901760
        %656 = vmatpush1.msra.mxu0 %v655
        %657 = vmatprep.subr.mxu0 0.0
        %658 = vmatpush1.msra.mxu0 0.0
        %659 = vmatprep.subr.mxu0 0.0
        %660 = vmatpush1.msra.mxu0 0.0
        %661 = vmatprep.subr.mxu0 0.0
        %662 = vmatpush1.msra.mxu0 0.0
        %663 = vmatprep.subr.mxu0 0.0
        %664 = vmatpush1.msra.mxu0 0.0
        %665 = vmatprep.subr.mxu0 0.0
        %666 = vmatpush1.msra.mxu0 0.0
        %667 = vmatprep.subr.mxu0 0.0
        %668 = vmatpush1.msra.mxu0 0.0
        %669 = vmatprep.subr.mxu0 0.0
        %670 = vmatpush1.msra.mxu0 0.0
        %671 = vmatprep.subr.mxu0 0.0
        %672 = vmatpush1.msra.mxu0 0.0
        %673 = vmatprep.subr.mxu0 0.0
        %674 = vmatpush1.msra.mxu0 0.0
        %675 = vmatprep.subr.mxu0 0.0
        %676 = vmatpush1.msra.mxu0 0.0
        %677 = vmatprep.subr.mxu0 0.0
        %678 = vmatpush1.msra.mxu0 0.0
        %679 = vmatprep.subr.mxu0 0.0
        %680 = vmatpush1.msra.mxu0 0.0
        %681 = vmatprep.subr.mxu0 0.0
        %682 = vmatpush1.msra.mxu0 0.0
        %683 = vmatprep.subr.mxu0 0.0
        %684 = vmatpush1.msra.mxu0 0.0
        %685 = vmatprep.subr.mxu0 0.0
        %686 = vmatpush1.msra.mxu0 0.0
        %687 = vmatprep.subr.mxu0 0.0
        %688 = vmatpush1.msra.mxu0 0.0
        %689 = vmatprep.subr.mxu0 0.0
        %690 = vmatpush1.msra.mxu0 0.0
        %691 = vmatprep.subr.mxu0 0.0
        %692 = vmatpush1.msra.mxu0 0.0
        %693 = vmatprep.subr.mxu0 0.0
        %694 = vmatpush1.msra.mxu0 0.0
        %695 = vmatprep.subr.mxu0 0.0
        %696 = vmatpush1.msra.mxu0 0.0
        %697 = vmatprep.subr.mxu0 0.0
        %698 = vmatpush1.msra.mxu0 0.0
        %699 = vmatprep.subr.mxu0 0.0
        %700 = vmatpush1.msra.mxu0 0.0
        %701 = vmatprep.subr.mxu0 0.0
        %702 = vmatpush1.msra.mxu0 0.0
        %703 = vmatprep.subr.mxu0 0.0
        %704 = vmatpush1.msra.mxu0 0.0
        %705 = vmatprep.subr.mxu0 0.0
        %706 = vmatpush1.msra.mxu0 0.0
        %707 = vmatprep.subr.mxu0 0.0
        %708 = vmatpush1.msra.mxu0 0.0
        %709 = vmatprep.subr.mxu0 0.0
        %710 = vmatpush1.msra.mxu0 0.0
        %711 = vmatprep.subr.mxu0 0.0
        %712 = vmatpush1.msra.mxu0 0.0
        %713 = vmatprep.subr.mxu0 0.0
        %714 = vmatpush1.msra.mxu0 0.0
        %715 = vmatprep.subr.mxu0 0.0
        %716 = vmatpush1.msra.mxu0 0.0
        %717 = vmatprep.subr.mxu0 0.0
        %718 = vmatpush1.msra.mxu0 0.0
        %719 = vmatprep.mubr.f32.mxu0 0.0
        %v720 = vand.u32 %v329, 4294901760
        %721 = vmatmul.mubr.f32.gmra.mrb[0].mxu0 %v720
        %v722 = vpop.f32.mrb[0].mxu0
        %v723 = vadd.f32 %v645, %v722
        %v724 = vpop.f32.mrb[0].mxu0
        %v725 = vadd.f32 %v647, %v724
        %726 = vdwg.mxu0
        %v727 = vand.u32 %v334, 4294901760
        %728 = vmatprep.subr.mxu0 %v727
        %v729 = vand.u32 %v332, 4294901760
        %730 = vmatpush1.msra.mxu0 %v729
        %731 = vmatprep.subr.mxu0 0.0
        %732 = vmatpush1.msra.mxu0 0.0
        %733 = vmatprep.subr.mxu0 0.0
        %734 = vmatpush1.msra.mxu0 0.0
        %735 = vmatprep.subr.mxu0 0.0
        %736 = vmatpush1.msra.mxu0 0.0
        %737 = vmatprep.subr.mxu0 0.0
        %738 = vmatpush1.msra.mxu0 0.0
        %739 = vmatprep.subr.mxu0 0.0
        %740 = vmatpush1.msra.mxu0 0.0
        %741 = vmatprep.subr.mxu0 0.0
        %742 = vmatpush1.msra.mxu0 0.0
        %743 = vmatprep.subr.mxu0 0.0
        %744 = vmatpush1.msra.mxu0 0.0
        %745 = vmatprep.subr.mxu0 0.0
        %746 = vmatpush1.msra.mxu0 0.0
        %747 = vmatprep.subr.mxu0 0.0
        %748 = vmatpush1.msra.mxu0 0.0
        %749 = vmatprep.subr.mxu0 0.0
        %750 = vmatpush1.msra.mxu0 0.0
        %751 = vmatprep.subr.mxu0 0.0
        %752 = vmatpush1.msra.mxu0 0.0
        %753 = vmatprep.subr.mxu0 0.0
        %754 = vmatpush1.msra.mxu0 0.0
        %755 = vmatprep.subr.mxu0 0.0
        %756 = vmatpush1.msra.mxu0 0.0
        %757 = vmatprep.subr.mxu0 0.0
        %758 = vmatpush1.msra.mxu0 0.0
        %759 = vmatprep.subr.mxu0 0.0
        %760 = vmatpush1.msra.mxu0 0.0
        %761 = vmatprep.subr.mxu0 0.0
        %762 = vmatpush1.msra.mxu0 0.0
        %763 = vmatprep.subr.mxu0 0.0
        %764 = vmatpush1.msra.mxu0 0.0
        %765 = vmatprep.subr.mxu0 0.0
        %766 = vmatpush1.msra.mxu0 0.0
        %767 = vmatprep.subr.mxu0 0.0
        %768 = vmatpush1.msra.mxu0 0.0
        %769 = vmatprep.subr.mxu0 0.0
        %770 = vmatpush1.msra.mxu0 0.0
        %771 = vmatprep.subr.mxu0 0.0
        %772 = vmatpush1.msra.mxu0 0.0
        %773 = vmatprep.subr.mxu0 0.0
        %774 = vmatpush1.msra.mxu0 0.0
        %775 = vmatprep.subr.mxu0 0.0
        %776 = vmatpush1.msra.mxu0 0.0
        %777 = vmatprep.subr.mxu0 0.0
        %778 = vmatpush1.msra.mxu0 0.0
        %779 = vmatprep.subr.mxu0 0.0
        %780 = vmatpush1.msra.mxu0 0.0
        %781 = vmatprep.subr.mxu0 0.0
        %782 = vmatpush1.msra.mxu0 0.0
        %783 = vmatprep.subr.mxu0 0.0
        %784 = vmatpush1.msra.mxu0 0.0
        %785 = vmatprep.subr.mxu0 0.0
        %786 = vmatpush1.msra.mxu0 0.0
        %787 = vmatprep.subr.mxu0 0.0
        %788 = vmatpush1.msra.mxu0 0.0
        %789 = vmatprep.subr.mxu0 0.0
        %790 = vmatpush1.msra.mxu0 0.0
        %791 = vmatprep.subr.mxu0 0.0
        %792 = vmatpush1.msra.mxu0 0.0
        %793 = vmatprep.mubr.f32.mxu0 0.0
        %v794 = vand.u32 %v329, 4294901760
        %795 = vmatmul.mubr.f32.gmra.mrb[0].mxu0 %v794
        %v796 = vpop.f32.mrb[0].mxu0
        %v797 = vadd.f32 %v723, %v796
        %v798 = vpop.f32.mrb[0].mxu0
        %v799 = vadd.f32 %v725, %v798
        %800 = vdwg.mxu0
        %v803 = vcombine.low %v797, %v799
        %v805 = vunpack.c.l.s4 1966171168
        %v806 = vunpack.c.0.s8 %v805
        %v807 = vlaneseq
        %v808 = vshrl.u32 %v807, 7
        %v809 = vsub.s32 %v806, %v808
        %v810 = vrot.slane %v803, %v809
        %v812 = vunpack.c.l.s4 1966171168
        %v813 = vunpack.c.0.s8 %v812
        %v814 = vlaneseq
        %v815 = vshrl.u32 %v814, 7
        %v816 = vsub.s32 %v813, %v815
        %v817 = vrot.slane %v810, %v816
        %v819 = vadd.f32 %v254, %v817
        %v820 = vsel %vm255, %v223, 0.0
        %v821 = vsel %vm255, %v225, 0.0
        %v822 = vadd.f32 %v820, %v821
        %v823 = vsel %vm255, %v227, 0.0
        %v824 = vadd.f32 %v822, %v823
        %v825 = vsel %vm255, %v229, 0.0
        %v826 = vadd.f32 %v824, %v825
        %v827 = vsel %vm255, %v231, 0.0
        %v828 = vadd.f32 %v826, %v827
        %v829 = vsel %vm255, %v233, 0.0
        %v830 = vadd.f32 %v828, %v829
        %v831 = vsel %vm255, %v235, 0.0
        %v832 = vadd.f32 %v830, %v831
        %v833 = vsel %vm255, %v237, 0.0
        %v834 = vadd.f32 %v832, %v833
        %v835 = vsel %vm255, %v239, 0.0
        %v836 = vadd.f32 %v834, %v835
        %v837 = vsel %vm255, %v241, 0.0
        %v838 = vadd.f32 %v836, %v837
        %v839 = vsel %vm255, %v243, 0.0
        %v840 = vadd.f32 %v838, %v839
        %v841 = vsel %vm255, %v245, 0.0
        %v842 = vadd.f32 %v840, %v841
        %v843 = vsel %vm255, %v247, 0.0
        %v844 = vadd.f32 %v842, %v843
        %v845 = vsel %vm255, %v249, 0.0
        %v846 = vadd.f32 %v844, %v845
        %v847 = vsel %vm255, %v251, 0.0
        %v848 = vadd.f32 %v846, %v847
        %v849 = vsel %vm255, %v848, 0.0
        %v850 = vadd.f32 %v315, %v849
        %v851 = vrot.slane %v850, 4
        %v852 = vadd.f32 %v850, %v851
        %v853 = vrot.slane %v852, 2
        %v854 = vadd.f32 %v852, %v853
        %v855 = vrot.slane %v854, 1
        %v856 = vadd.f32 %v854, %v855
        %v857 = vmul.f32 %v856, 0.00390625
        %s858 = scalar_lea.vmem %s1, 8
        %v859 = vld [vmem:[%s858] sm:$0x77]
        %v861 = vcombine.high %v859, %v859
        %v863 = vsel %vm255, %v857, 0
        %v865 = vsel %vm331, %v859, 0
        %v867 = vsel %vm331, %v861, 0
        %v869 = vand.u32 %v867, 4294901760
        %870 = vmatprep.subr.mxu0 %v869
        %v871 = vand.u32 %v865, 4294901760
        %872 = vmatpush1.msra.mxu0 %v871
        %873 = vmatprep.subr.mxu0 0.0
        %874 = vmatpush1.msra.mxu0 0.0
        %875 = vmatprep.subr.mxu0 0.0
        %876 = vmatpush1.msra.mxu0 0.0
        %877 = vmatprep.subr.mxu0 0.0
        %878 = vmatpush1.msra.mxu0 0.0
        %879 = vmatprep.subr.mxu0 0.0
        %880 = vmatpush1.msra.mxu0 0.0
        %881 = vmatprep.subr.mxu0 0.0
        %882 = vmatpush1.msra.mxu0 0.0
        %883 = vmatprep.subr.mxu0 0.0
        %884 = vmatpush1.msra.mxu0 0.0
        %885 = vmatprep.subr.mxu0 0.0
        %886 = vmatpush1.msra.mxu0 0.0
        %887 = vmatprep.subr.mxu0 0.0
        %888 = vmatpush1.msra.mxu0 0.0
        %889 = vmatprep.subr.mxu0 0.0
        %890 = vmatpush1.msra.mxu0 0.0
        %891 = vmatprep.subr.mxu0 0.0
        %892 = vmatpush1.msra.mxu0 0.0
        %893 = vmatprep.subr.mxu0 0.0
        %894 = vmatpush1.msra.mxu0 0.0
        %895 = vmatprep.subr.mxu0 0.0
        %896 = vmatpush1.msra.mxu0 0.0
        %897 = vmatprep.subr.mxu0 0.0
        %898 = vmatpush1.msra.mxu0 0.0
        %899 = vmatprep.subr.mxu0 0.0
        %900 = vmatpush1.msra.mxu0 0.0
        %901 = vmatprep.subr.mxu0 0.0
        %902 = vmatpush1.msra.mxu0 0.0
        %903 = vmatprep.subr.mxu0 0.0
        %904 = vmatpush1.msra.mxu0 0.0
        %905 = vmatprep.subr.mxu0 0.0
        %906 = vmatpush1.msra.mxu0 0.0
        %907 = vmatprep.subr.mxu0 0.0
        %908 = vmatpush1.msra.mxu0 0.0
        %909 = vmatprep.subr.mxu0 0.0
        %910 = vmatpush1.msra.mxu0 0.0
        %911 = vmatprep.subr.mxu0 0.0
        %912 = vmatpush1.msra.mxu0 0.0
        %913 = vmatprep.subr.mxu0 0.0
        %914 = vmatpush1.msra.mxu0 0.0
        %915 = vmatprep.subr.mxu0 0.0
        %916 = vmatpush1.msra.mxu0 0.0
        %917 = vmatprep.subr.mxu0 0.0
        %918 = vmatpush1.msra.mxu0 0.0
        %919 = vmatprep.subr.mxu0 0.0
        %920 = vmatpush1.msra.mxu0 0.0
        %921 = vmatprep.subr.mxu0 0.0
        %922 = vmatpush1.msra.mxu0 0.0
        %923 = vmatprep.subr.mxu0 0.0
        %924 = vmatpush1.msra.mxu0 0.0
        %925 = vmatprep.subr.mxu0 0.0
        %926 = vmatpush1.msra.mxu0 0.0
        %927 = vmatprep.subr.mxu0 0.0
        %928 = vmatpush1.msra.mxu0 0.0
        %929 = vmatprep.subr.mxu0 0.0
        %930 = vmatpush1.msra.mxu0 0.0
        %931 = vmatprep.subr.mxu0 0.0
        %932 = vmatpush1.msra.mxu0 0.0
        %933 = vmatprep.subr.mxu0 0.0
        %934 = vmatpush1.msra.mxu0 0.0
        %935 = vmatprep.mubr.f32.mxu0 0.0
        %v936 = vand.u32 %v863, 4294901760
        %v937 = vsub.f32 %v863, %v936
        %v938 = vand.u32 %v937, 4294901760
        %v939 = vsub.f32 %v937, %v938
        %v940 = vand.u32 %v939, 4294901760
        %941 = vmatmul.mubr.f32.gmra.mrb[0].mxu0 %v940
        %v942 = vpop.f32.mrb[0].mxu0
        %v943 = vadd.f32 0.0, %v942
        %v944 = vpop.f32.mrb[0].mxu0
        %v945 = vadd.f32 0.0, %v944
        %946 = vdwg.mxu0
        %v947 = vand.u32 %v867, 4294901760
        %v948 = vsub.f32 %v867, %v947
        %v949 = vand.u32 %v948, 4294901760
        %v950 = vsub.f32 %v948, %v949
        %v951 = vand.u32 %v950, 4294901760
        %952 = vmatprep.subr.mxu0 %v951
        %v953 = vand.u32 %v865, 4294901760
        %v954 = vsub.f32 %v865, %v953
        %v955 = vand.u32 %v954, 4294901760
        %v956 = vsub.f32 %v954, %v955
        %v957 = vand.u32 %v956, 4294901760
        %958 = vmatpush1.msra.mxu0 %v957
        %959 = vmatprep.subr.mxu0 0.0
        %960 = vmatpush1.msra.mxu0 0.0
        %961 = vmatprep.subr.mxu0 0.0
        %962 = vmatpush1.msra.mxu0 0.0
        %963 = vmatprep.subr.mxu0 0.0
        %964 = vmatpush1.msra.mxu0 0.0
        %965 = vmatprep.subr.mxu0 0.0
        %966 = vmatpush1.msra.mxu0 0.0
        %967 = vmatprep.subr.mxu0 0.0
        %968 = vmatpush1.msra.mxu0 0.0
        %969 = vmatprep.subr.mxu0 0.0
        %970 = vmatpush1.msra.mxu0 0.0
        %971 = vmatprep.subr.mxu0 0.0
        %972 = vmatpush1.msra.mxu0 0.0
        %973 = vmatprep.subr.mxu0 0.0
        %974 = vmatpush1.msra.mxu0 0.0
        %975 = vmatprep.subr.mxu0 0.0
        %976 = vmatpush1.msra.mxu0 0.0
        %977 = vmatprep.subr.mxu0 0.0
        %978 = vmatpush1.msra.mxu0 0.0
        %979 = vmatprep.subr.mxu0 0.0
        %980 = vmatpush1.msra.mxu0 0.0
        %981 = vmatprep.subr.mxu0 0.0
        %982 = vmatpush1.msra.mxu0 0.0
        %983 = vmatprep.subr.mxu0 0.0
        %984 = vmatpush1.msra.mxu0 0.0
        %985 = vmatprep.subr.mxu0 0.0
        %986 = vmatpush1.msra.mxu0 0.0
        %987 = vmatprep.subr.mxu0 0.0
        %988 = vmatpush1.msra.mxu0 0.0
        %989 = vmatprep.subr.mxu0 0.0
        %990 = vmatpush1.msra.mxu0 0.0
        %991 = vmatprep.subr.mxu0 0.0
        %992 = vmatpush1.msra.mxu0 0.0
        %993 = vmatprep.subr.mxu0 0.0
        %994 = vmatpush1.msra.mxu0 0.0
        %995 = vmatprep.subr.mxu0 0.0
        %996 = vmatpush1.msra.mxu0 0.0
        %997 = vmatprep.subr.mxu0 0.0
        %998 = vmatpush1.msra.mxu0 0.0
        %999 = vmatprep.subr.mxu0 0.0
        %1000 = vmatpush1.msra.mxu0 0.0
        %1001 = vmatprep.subr.mxu0 0.0
        %1002 = vmatpush1.msra.mxu0 0.0
        %1003 = vmatprep.subr.mxu0 0.0
        %1004 = vmatpush1.msra.mxu0 0.0
        %1005 = vmatprep.subr.mxu0 0.0
        %1006 = vmatpush1.msra.mxu0 0.0
        %1007 = vmatprep.subr.mxu0 0.0
        %1008 = vmatpush1.msra.mxu0 0.0
        %1009 = vmatprep.subr.mxu0 0.0
        %1010 = vmatpush1.msra.mxu0 0.0
        %1011 = vmatprep.subr.mxu0 0.0
        %1012 = vmatpush1.msra.mxu0 0.0
        %1013 = vmatprep.subr.mxu0 0.0
        %1014 = vmatpush1.msra.mxu0 0.0
        %1015 = vmatprep.subr.mxu0 0.0
        %1016 = vmatpush1.msra.mxu0 0.0
        %1017 = vmatprep.subr.mxu0 0.0
        %1018 = vmatpush1.msra.mxu0 0.0
        %1019 = vmatprep.subr.mxu0 0.0
        %1020 = vmatpush1.msra.mxu0 0.0
        %1021 = vmatprep.mubr.f32.mxu0 0.0
        %v1022 = vand.u32 %v863, 4294901760
        %1023 = vmatmul.mubr.f32.gmra.mrb[0].mxu0 %v1022
        %v1024 = vpop.f32.mrb[0].mxu0
        %v1025 = vadd.f32 %v943, %v1024
        %v1026 = vpop.f32.mrb[0].mxu0
        %v1027 = vadd.f32 %v945, %v1026
        %1028 = vdwg.mxu0
        %v1029 = vand.u32 %v867, 4294901760
        %v1030 = vsub.f32 %v867, %v1029
        %1031 = vmatprep.subr.mxu0 %v1030
        %v1032 = vand.u32 %v865, 4294901760
        %v1033 = vsub.f32 %v865, %v1032
        %1034 = vmatpush1.msra.mxu0 %v1033
        %1035 = vmatprep.subr.mxu0 0.0
        %1036 = vmatpush1.msra.mxu0 0.0
        %1037 = vmatprep.subr.mxu0 0.0
        %1038 = vmatpush1.msra.mxu0 0.0
        %1039 = vmatprep.subr.mxu0 0.0
        %1040 = vmatpush1.msra.mxu0 0.0
        %1041 = vmatprep.subr.mxu0 0.0
        %1042 = vmatpush1.msra.mxu0 0.0
        %1043 = vmatprep.subr.mxu0 0.0
        %1044 = vmatpush1.msra.mxu0 0.0
        %1045 = vmatprep.subr.mxu0 0.0
        %1046 = vmatpush1.msra.mxu0 0.0
        %1047 = vmatprep.subr.mxu0 0.0
        %1048 = vmatpush1.msra.mxu0 0.0
        %1049 = vmatprep.subr.mxu0 0.0
        %1050 = vmatpush1.msra.mxu0 0.0
        %1051 = vmatprep.subr.mxu0 0.0
        %1052 = vmatpush1.msra.mxu0 0.0
        %1053 = vmatprep.subr.mxu0 0.0
        %1054 = vmatpush1.msra.mxu0 0.0
        %1055 = vmatprep.subr.mxu0 0.0
        %1056 = vmatpush1.msra.mxu0 0.0
        %1057 = vmatprep.subr.mxu0 0.0
        %1058 = vmatpush1.msra.mxu0 0.0
        %1059 = vmatprep.subr.mxu0 0.0
        %1060 = vmatpush1.msra.mxu0 0.0
        %1061 = vmatprep.subr.mxu0 0.0
        %1062 = vmatpush1.msra.mxu0 0.0
        %1063 = vmatprep.subr.mxu0 0.0
        %1064 = vmatpush1.msra.mxu0 0.0
        %1065 = vmatprep.subr.mxu0 0.0
        %1066 = vmatpush1.msra.mxu0 0.0
        %1067 = vmatprep.subr.mxu0 0.0
        %1068 = vmatpush1.msra.mxu0 0.0
        %1069 = vmatprep.subr.mxu0 0.0
        %1070 = vmatpush1.msra.mxu0 0.0
        %1071 = vmatprep.subr.mxu0 0.0
        %1072 = vmatpush1.msra.mxu0 0.0
        %1073 = vmatprep.subr.mxu0 0.0
        %1074 = vmatpush1.msra.mxu0 0.0
        %1075 = vmatprep.subr.mxu0 0.0
        %1076 = vmatpush1.msra.mxu0 0.0
        %1077 = vmatprep.subr.mxu0 0.0
        %1078 = vmatpush1.msra.mxu0 0.0
        %1079 = vmatprep.subr.mxu0 0.0
        %1080 = vmatpush1.msra.mxu0 0.0
        %1081 = vmatprep.subr.mxu0 0.0
        %1082 = vmatpush1.msra.mxu0 0.0
        %1083 = vmatprep.subr.mxu0 0.0
        %1084 = vmatpush1.msra.mxu0 0.0
        %1085 = vmatprep.subr.mxu0 0.0
        %1086 = vmatpush1.msra.mxu0 0.0
        %1087 = vmatprep.subr.mxu0 0.0
        %1088 = vmatpush1.msra.mxu0 0.0
        %1089 = vmatprep.subr.mxu0 0.0
        %1090 = vmatpush1.msra.mxu0 0.0
        %1091 = vmatprep.subr.mxu0 0.0
        %1092 = vmatpush1.msra.mxu0 0.0
        %1093 = vmatprep.subr.mxu0 0.0
        %1094 = vmatpush1.msra.mxu0 0.0
        %1095 = vmatprep.subr.mxu0 0.0
        %1096 = vmatpush1.msra.mxu0 0.0
        %1097 = vmatprep.mubr.f32.mxu0 0.0
        %v1098 = vand.u32 %v863, 4294901760
        %v1099 = vsub.f32 %v863, %v1098
        %1100 = vmatmul.mubr.f32.gmra.mrb[0].mxu0 %v1099
        %v1101 = vpop.f32.mrb[0].mxu0
        %v1102 = vadd.f32 %v1025, %v1101
        %v1103 = vpop.f32.mrb[0].mxu0
        %v1104 = vadd.f32 %v1027, %v1103
        %1105 = vdwg.mxu0
        %v1106 = vand.u32 %v867, 4294901760
        %1107 = vmatprep.subr.mxu0 %v1106
        %v1108 = vand.u32 %v865, 4294901760
        %1109 = vmatpush1.msra.mxu0 %v1108
        %1110 = vmatprep.subr.mxu0 0.0
        %1111 = vmatpush1.msra.mxu0 0.0
        %1112 = vmatprep.subr.mxu0 0.0
        %1113 = vmatpush1.msra.mxu0 0.0
        %1114 = vmatprep.subr.mxu0 0.0
        %1115 = vmatpush1.msra.mxu0 0.0
        %1116 = vmatprep.subr.mxu0 0.0
        %1117 = vmatpush1.msra.mxu0 0.0
        %1118 = vmatprep.subr.mxu0 0.0
        %1119 = vmatpush1.msra.mxu0 0.0
        %1120 = vmatprep.subr.mxu0 0.0
        %1121 = vmatpush1.msra.mxu0 0.0
        %1122 = vmatprep.subr.mxu0 0.0
        %1123 = vmatpush1.msra.mxu0 0.0
        %1124 = vmatprep.subr.mxu0 0.0
        %1125 = vmatpush1.msra.mxu0 0.0
        %1126 = vmatprep.subr.mxu0 0.0
        %1127 = vmatpush1.msra.mxu0 0.0
        %1128 = vmatprep.subr.mxu0 0.0
        %1129 = vmatpush1.msra.mxu0 0.0
        %1130 = vmatprep.subr.mxu0 0.0
        %1131 = vmatpush1.msra.mxu0 0.0
        %1132 = vmatprep.subr.mxu0 0.0
        %1133 = vmatpush1.msra.mxu0 0.0
        %1134 = vmatprep.subr.mxu0 0.0
        %1135 = vmatpush1.msra.mxu0 0.0
        %1136 = vmatprep.subr.mxu0 0.0
        %1137 = vmatpush1.msra.mxu0 0.0
        %1138 = vmatprep.subr.mxu0 0.0
        %1139 = vmatpush1.msra.mxu0 0.0
        %1140 = vmatprep.subr.mxu0 0.0
        %1141 = vmatpush1.msra.mxu0 0.0
        %1142 = vmatprep.subr.mxu0 0.0
        %1143 = vmatpush1.msra.mxu0 0.0
        %1144 = vmatprep.subr.mxu0 0.0
        %1145 = vmatpush1.msra.mxu0 0.0
        %1146 = vmatprep.subr.mxu0 0.0
        %1147 = vmatpush1.msra.mxu0 0.0
        %1148 = vmatprep.subr.mxu0 0.0
        %1149 = vmatpush1.msra.mxu0 0.0
        %1150 = vmatprep.subr.mxu0 0.0
        %1151 = vmatpush1.msra.mxu0 0.0
        %1152 = vmatprep.subr.mxu0 0.0
        %1153 = vmatpush1.msra.mxu0 0.0
        %1154 = vmatprep.subr.mxu0 0.0
        %1155 = vmatpush1.msra.mxu0 0.0
        %1156 = vmatprep.subr.mxu0 0.0
        %1157 = vmatpush1.msra.mxu0 0.0
        %1158 = vmatprep.subr.mxu0 0.0
        %1159 = vmatpush1.msra.mxu0 0.0
        %1160 = vmatprep.subr.mxu0 0.0
        %1161 = vmatpush1.msra.mxu0 0.0
        %1162 = vmatprep.subr.mxu0 0.0
        %1163 = vmatpush1.msra.mxu0 0.0
        %1164 = vmatprep.subr.mxu0 0.0
        %1165 = vmatpush1.msra.mxu0 0.0
        %1166 = vmatprep.subr.mxu0 0.0
        %1167 = vmatpush1.msra.mxu0 0.0
        %1168 = vmatprep.subr.mxu0 0.0
        %1169 = vmatpush1.msra.mxu0 0.0
        %1170 = vmatprep.subr.mxu0 0.0
        %1171 = vmatpush1.msra.mxu0 0.0
        %1172 = vmatprep.mubr.f32.mxu0 0.0
        %v1173 = vand.u32 %v863, 4294901760
        %v1174 = vsub.f32 %v863, %v1173
        %v1175 = vand.u32 %v1174, 4294901760
        %1176 = vmatmul.mubr.f32.gmra.mrb[0].mxu0 %v1175
        %v1177 = vpop.f32.mrb[0].mxu0
        %v1178 = vadd.f32 %v1102, %v1177
        %v1179 = vpop.f32.mrb[0].mxu0
        %v1180 = vadd.f32 %v1104, %v1179
        %1181 = vdwg.mxu0
        %v1182 = vand.u32 %v867, 4294901760
        %v1183 = vsub.f32 %v867, %v1182
        %v1184 = vand.u32 %v1183, 4294901760
        %1185 = vmatprep.subr.mxu0 %v1184
        %v1186 = vand.u32 %v865, 4294901760
        %v1187 = vsub.f32 %v865, %v1186
        %v1188 = vand.u32 %v1187, 4294901760
        %1189 = vmatpush1.msra.mxu0 %v1188
        %1190 = vmatprep.subr.mxu0 0.0
        %1191 = vmatpush1.msra.mxu0 0.0
        %1192 = vmatprep.subr.mxu0 0.0
        %1193 = vmatpush1.msra.mxu0 0.0
        %1194 = vmatprep.subr.mxu0 0.0
        %1195 = vmatpush1.msra.mxu0 0.0
        %1196 = vmatprep.subr.mxu0 0.0
        %1197 = vmatpush1.msra.mxu0 0.0
        %1198 = vmatprep.subr.mxu0 0.0
        %1199 = vmatpush1.msra.mxu0 0.0
        %1200 = vmatprep.subr.mxu0 0.0
        %1201 = vmatpush1.msra.mxu0 0.0
        %1202 = vmatprep.subr.mxu0 0.0
        %1203 = vmatpush1.msra.mxu0 0.0
        %1204 = vmatprep.subr.mxu0 0.0
        %1205 = vmatpush1.msra.mxu0 0.0
        %1206 = vmatprep.subr.mxu0 0.0
        %1207 = vmatpush1.msra.mxu0 0.0
        %1208 = vmatprep.subr.mxu0 0.0
        %1209 = vmatpush1.msra.mxu0 0.0
        %1210 = vmatprep.subr.mxu0 0.0
        %1211 = vmatpush1.msra.mxu0 0.0
        %1212 = vmatprep.subr.mxu0 0.0
        %1213 = vmatpush1.msra.mxu0 0.0
        %1214 = vmatprep.subr.mxu0 0.0
        %1215 = vmatpush1.msra.mxu0 0.0
        %1216 = vmatprep.subr.mxu0 0.0
        %1217 = vmatpush1.msra.mxu0 0.0
        %1218 = vmatprep.subr.mxu0 0.0
        %1219 = vmatpush1.msra.mxu0 0.0
        %1220 = vmatprep.subr.mxu0 0.0
        %1221 = vmatpush1.msra.mxu0 0.0
        %1222 = vmatprep.subr.mxu0 0.0
        %1223 = vmatpush1.msra.mxu0 0.0
        %1224 = vmatprep.subr.mxu0 0.0
        %1225 = vmatpush1.msra.mxu0 0.0
        %1226 = vmatprep.subr.mxu0 0.0
        %1227 = vmatpush1.msra.mxu0 0.0
        %1228 = vmatprep.subr.mxu0 0.0
        %1229 = vmatpush1.msra.mxu0 0.0
        %1230 = vmatprep.subr.mxu0 0.0
        %1231 = vmatpush1.msra.mxu0 0.0
        %1232 = vmatprep.subr.mxu0 0.0
        %1233 = vmatpush1.msra.mxu0 0.0
        %1234 = vmatprep.subr.mxu0 0.0
        %1235 = vmatpush1.msra.mxu0 0.0
        %1236 = vmatprep.subr.mxu0 0.0
        %1237 = vmatpush1.msra.mxu0 0.0
        %1238 = vmatprep.subr.mxu0 0.0
        %1239 = vmatpush1.msra.mxu0 0.0
        %1240 = vmatprep.subr.mxu0 0.0
        %1241 = vmatpush1.msra.mxu0 0.0
        %1242 = vmatprep.subr.mxu0 0.0
        %1243 = vmatpush1.msra.mxu0 0.0
        %1244 = vmatprep.subr.mxu0 0.0
        %1245 = vmatpush1.msra.mxu0 0.0
        %1246 = vmatprep.subr.mxu0 0.0
        %1247 = vmatpush1.msra.mxu0 0.0
        %1248 = vmatprep.subr.mxu0 0.0
        %1249 = vmatpush1.msra.mxu0 0.0
        %1250 = vmatprep.subr.mxu0 0.0
        %1251 = vmatpush1.msra.mxu0 0.0
        %1252 = vmatprep.mubr.f32.mxu0 0.0
        %v1253 = vand.u32 %v863, 4294901760
        %1254 = vmatmul.mubr.f32.gmra.mrb[0].mxu0 %v1253
        %v1255 = vpop.f32.mrb[0].mxu0
        %v1256 = vadd.f32 %v1178, %v1255
        %v1257 = vpop.f32.mrb[0].mxu0
        %v1258 = vadd.f32 %v1180, %v1257
        %1259 = vdwg.mxu0
        %v1260 = vand.u32 %v867, 4294901760
        %1261 = vmatprep.subr.mxu0 %v1260
        %v1262 = vand.u32 %v865, 4294901760
        %1263 = vmatpush1.msra.mxu0 %v1262
        %1264 = vmatprep.subr.mxu0 0.0
        %1265 = vmatpush1.msra.mxu0 0.0
        %1266 = vmatprep.subr.mxu0 0.0
        %1267 = vmatpush1.msra.mxu0 0.0
        %1268 = vmatprep.subr.mxu0 0.0
        %1269 = vmatpush1.msra.mxu0 0.0
        %1270 = vmatprep.subr.mxu0 0.0
        %1271 = vmatpush1.msra.mxu0 0.0
        %1272 = vmatprep.subr.mxu0 0.0
        %1273 = vmatpush1.msra.mxu0 0.0
        %1274 = vmatprep.subr.mxu0 0.0
        %1275 = vmatpush1.msra.mxu0 0.0
        %1276 = vmatprep.subr.mxu0 0.0
        %1277 = vmatpush1.msra.mxu0 0.0
        %1278 = vmatprep.subr.mxu0 0.0
        %1279 = vmatpush1.msra.mxu0 0.0
        %1280 = vmatprep.subr.mxu0 0.0
        %1281 = vmatpush1.msra.mxu0 0.0
        %1282 = vmatprep.subr.mxu0 0.0
        %1283 = vmatpush1.msra.mxu0 0.0
        %1284 = vmatprep.subr.mxu0 0.0
        %1285 = vmatpush1.msra.mxu0 0.0
        %1286 = vmatprep.subr.mxu0 0.0
        %1287 = vmatpush1.msra.mxu0 0.0
        %1288 = vmatprep.subr.mxu0 0.0
        %1289 = vmatpush1.msra.mxu0 0.0
        %1290 = vmatprep.subr.mxu0 0.0
        %1291 = vmatpush1.msra.mxu0 0.0
        %1292 = vmatprep.subr.mxu0 0.0
        %1293 = vmatpush1.msra.mxu0 0.0
        %1294 = vmatprep.subr.mxu0 0.0
        %1295 = vmatpush1.msra.mxu0 0.0
        %1296 = vmatprep.subr.mxu0 0.0
        %1297 = vmatpush1.msra.mxu0 0.0
        %1298 = vmatprep.subr.mxu0 0.0
        %1299 = vmatpush1.msra.mxu0 0.0
        %1300 = vmatprep.subr.mxu0 0.0
        %1301 = vmatpush1.msra.mxu0 0.0
        %1302 = vmatprep.subr.mxu0 0.0
        %1303 = vmatpush1.msra.mxu0 0.0
        %1304 = vmatprep.subr.mxu0 0.0
        %1305 = vmatpush1.msra.mxu0 0.0
        %1306 = vmatprep.subr.mxu0 0.0
        %1307 = vmatpush1.msra.mxu0 0.0
        %1308 = vmatprep.subr.mxu0 0.0
        %1309 = vmatpush1.msra.mxu0 0.0
        %1310 = vmatprep.subr.mxu0 0.0
        %1311 = vmatpush1.msra.mxu0 0.0
        %1312 = vmatprep.subr.mxu0 0.0
        %1313 = vmatpush1.msra.mxu0 0.0
        %1314 = vmatprep.subr.mxu0 0.0
        %1315 = vmatpush1.msra.mxu0 0.0
        %1316 = vmatprep.subr.mxu0 0.0
        %1317 = vmatpush1.msra.mxu0 0.0
        %1318 = vmatprep.subr.mxu0 0.0
        %1319 = vmatpush1.msra.mxu0 0.0
        %1320 = vmatprep.subr.mxu0 0.0
        %1321 = vmatpush1.msra.mxu0 0.0
        %1322 = vmatprep.subr.mxu0 0.0
        %1323 = vmatpush1.msra.mxu0 0.0
        %1324 = vmatprep.subr.mxu0 0.0
        %1325 = vmatpush1.msra.mxu0 0.0
        %1326 = vmatprep.mubr.f32.mxu0 0.0
        %v1327 = vand.u32 %v863, 4294901760
        %1328 = vmatmul.mubr.f32.gmra.mrb[0].mxu0 %v1327
        %v1329 = vpop.f32.mrb[0].mxu0
        %v1330 = vadd.f32 %v1256, %v1329
        %v1331 = vpop.f32.mrb[0].mxu0
        %v1332 = vadd.f32 %v1258, %v1331
        %1333 = vdwg.mxu0
        %v1336 = vcombine.low %v1330, %v1332
        %v1338 = vunpack.c.l.s4 1966171168
        %v1339 = vunpack.c.0.s8 %v1338
        %v1340 = vlaneseq
        %v1341 = vshrl.u32 %v1340, 7
        %v1342 = vsub.s32 %v1339, %v1341
        %v1343 = vrot.slane %v1336, %v1342
        %v1345 = vunpack.c.l.s4 1966171168
        %v1346 = vunpack.c.0.s8 %v1345
        %v1347 = vlaneseq
        %v1348 = vshrl.u32 %v1347, 7
        %v1349 = vsub.s32 %v1346, %v1348
        %v1350 = vrot.slane %v1343, %v1349
        %v1352 = vadd.f32 %v819, %v1350
        %vm1353 = vcmask 23553
        %v1354 = vsel %vm1353, %v222, 0.0
        %v1355 = vsel %vm1353, %v224, 0.0
        %v1356 = vadd.f32 %v1354, %v1355
        %v1357 = vsel %vm1353, %v226, 0.0
        %v1358 = vadd.f32 %v1356, %v1357
        %v1359 = vsel %vm1353, %v228, 0.0
        %v1360 = vadd.f32 %v1358, %v1359
        %v1361 = vsel %vm1353, %v230, 0.0
        %v1362 = vadd.f32 %v1360, %v1361
        %v1363 = vsel %vm1353, %v232, 0.0
        %v1364 = vadd.f32 %v1362, %v1363
        %v1365 = vsel %vm1353, %v234, 0.0
        %v1366 = vadd.f32 %v1364, %v1365
        %v1367 = vsel %vm1353, %v236, 0.0
        %v1368 = vadd.f32 %v1366, %v1367
        %v1369 = vsel %vm1353, %v238, 0.0
        %v1370 = vadd.f32 %v1368, %v1369
        %v1371 = vsel %vm1353, %v240, 0.0
        %v1372 = vadd.f32 %v1370, %v1371
        %v1373 = vsel %vm1353, %v242, 0.0
        %v1374 = vadd.f32 %v1372, %v1373
        %v1375 = vsel %vm1353, %v244, 0.0
        %v1376 = vadd.f32 %v1374, %v1375
        %v1377 = vsel %vm1353, %v246, 0.0
        %v1378 = vadd.f32 %v1376, %v1377
        %v1379 = vsel %vm1353, %v248, 0.0
        %v1380 = vadd.f32 %v1378, %v1379
        %v1381 = vsel %vm1353, %v250, 0.0
        %v1382 = vadd.f32 %v1380, %v1381
        %vm1385 = vcmask 1046528
        %v1386 = vrot.slane %v1382, 1
        %v1387 = vrot.slane %v848, 1
        %v1388 = vsel %vm1385, %v1386, %v1387
        %v1391 = vsel %vm255, %v1388, 0.0
        %v1392 = vsel %vm285, %v1387, 0.0
        %v1393 = vadd.f32 %v1391, %v1392
        %v1394 = vrot.slane %v1393, 4
        %v1395 = vadd.f32 %v1393, %v1394
        %v1396 = vrot.slane %v1395, 2
        %v1397 = vadd.f32 %v1395, %v1396
        %v1398 = vrot.slane %v1397, 1
        %v1399 = vadd.f32 %v1397, %v1398
        %v1400 = vmul.f32 %v1399, 0.00390625
        %s1401 = scalar_lea.vmem %s1, 16
        %v1402 = vld [vmem:[%s1401] sm:$0x77]
        %v1404 = vcombine.high %v1402, %v1402
        %v1406 = vsel %vm255, %v1400, 0
        %v1408 = vsel %vm331, %v1402, 0
        %v1410 = vsel %vm331, %v1404, 0
        %v1412 = vand.u32 %v1410, 4294901760
        %1413 = vmatprep.subr.mxu0 %v1412
        %v1414 = vand.u32 %v1408, 4294901760
        %1415 = vmatpush1.msra.mxu0 %v1414
        %1416 = vmatprep.subr.mxu0 0.0
        %1417 = vmatpush1.msra.mxu0 0.0
        %1418 = vmatprep.subr.mxu0 0.0
        %1419 = vmatpush1.msra.mxu0 0.0
        %1420 = vmatprep.subr.mxu0 0.0
        %1421 = vmatpush1.msra.mxu0 0.0
        %1422 = vmatprep.subr.mxu0 0.0
        %1423 = vmatpush1.msra.mxu0 0.0
        %1424 = vmatprep.subr.mxu0 0.0
        %1425 = vmatpush1.msra.mxu0 0.0
        %1426 = vmatprep.subr.mxu0 0.0
        %1427 = vmatpush1.msra.mxu0 0.0
        %1428 = vmatprep.subr.mxu0 0.0
        %1429 = vmatpush1.msra.mxu0 0.0
        %1430 = vmatprep.subr.mxu0 0.0
        %1431 = vmatpush1.msra.mxu0 0.0
        %1432 = vmatprep.subr.mxu0 0.0
        %1433 = vmatpush1.msra.mxu0 0.0
        %1434 = vmatprep.subr.mxu0 0.0
        %1435 = vmatpush1.msra.mxu0 0.0
        %1436 = vmatprep.subr.mxu0 0.0
        %1437 = vmatpush1.msra.mxu0 0.0
        %1438 = vmatprep.subr.mxu0 0.0
        %1439 = vmatpush1.msra.mxu0 0.0
        %1440 = vmatprep.subr.mxu0 0.0
        %1441 = vmatpush1.msra.mxu0 0.0
        %1442 = vmatprep.subr.mxu0 0.0
        %1443 = vmatpush1.msra.mxu0 0.0
        %1444 = vmatprep.subr.mxu0 0.0
        %1445 = vmatpush1.msra.mxu0 0.0
        %1446 = vmatprep.subr.mxu0 0.0
        %1447 = vmatpush1.msra.mxu0 0.0
        %1448 = vmatprep.subr.mxu0 0.0
        %1449 = vmatpush1.msra.mxu0 0.0
        %1450 = vmatprep.subr.mxu0 0.0
        %1451 = vmatpush1.msra.mxu0 0.0
        %1452 = vmatprep.subr.mxu0 0.0
        %1453 = vmatpush1.msra.mxu0 0.0
        %1454 = vmatprep.subr.mxu0 0.0
        %1455 = vmatpush1.msra.mxu0 0.0
        %1456 = vmatprep.subr.mxu0 0.0
        %1457 = vmatpush1.msra.mxu0 0.0
        %1458 = vmatprep.subr.mxu0 0.0
        %1459 = vmatpush1.msra.mxu0 0.0
        %1460 = vmatprep.subr.mxu0 0.0
        %1461 = vmatpush1.msra.mxu0 0.0
        %1462 = vmatprep.subr.mxu0 0.0
        %1463 = vmatpush1.msra.mxu0 0.0
        %1464 = vmatprep.subr.mxu0 0.0
        %1465 = vmatpush1.msra.mxu0 0.0
        %1466 = vmatprep.subr.mxu0 0.0
        %1467 = vmatpush1.msra.mxu0 0.0
        %1468 = vmatprep.subr.mxu0 0.0
        %1469 = vmatpush1.msra.mxu0 0.0
        %1470 = vmatprep.subr.mxu0 0.0
        %1471 = vmatpush1.msra.mxu0 0.0
        %1472 = vmatprep.subr.mxu0 0.0
        %1473 = vmatpush1.msra.mxu0 0.0
        %1474 = vmatprep.subr.mxu0 0.0
        %1475 = vmatpush1.msra.mxu0 0.0
        %1476 = vmatprep.subr.mxu0 0.0
        %1477 = vmatpush1.msra.mxu0 0.0
        %1478 = vmatprep.mubr.f32.mxu0 0.0
        %v1479 = vand.u32 %v1406, 4294901760
        %v1480 = vsub.f32 %v1406, %v1479
        %v1481 = vand.u32 %v1480, 4294901760
        %v1482 = vsub.f32 %v1480, %v1481
        %v1483 = vand.u32 %v1482, 4294901760
        %1484 = vmatmul.mubr.f32.gmra.mrb[0].mxu0 %v1483
        %v1485 = vpop.f32.mrb[0].mxu0
        %v1486 = vadd.f32 0.0, %v1485
        %v1487 = vpop.f32.mrb[0].mxu0
        %v1488 = vadd.f32 0.0, %v1487
        %1489 = vdwg.mxu0
        %v1490 = vand.u32 %v1410, 4294901760
        %v1491 = vsub.f32 %v1410, %v1490
        %v1492 = vand.u32 %v1491, 4294901760
        %v1493 = vsub.f32 %v1491, %v1492
        %v1494 = vand.u32 %v1493, 4294901760
        %1495 = vmatprep.subr.mxu0 %v1494
        %v1496 = vand.u32 %v1408, 4294901760
        %v1497 = vsub.f32 %v1408, %v1496
        %v1498 = vand.u32 %v1497, 4294901760
        %v1499 = vsub.f32 %v1497, %v1498
        %v1500 = vand.u32 %v1499, 4294901760
        %1501 = vmatpush1.msra.mxu0 %v1500
        %1502 = vmatprep.subr.mxu0 0.0
        %1503 = vmatpush1.msra.mxu0 0.0
        %1504 = vmatprep.subr.mxu0 0.0
        %1505 = vmatpush1.msra.mxu0 0.0
        %1506 = vmatprep.subr.mxu0 0.0
        %1507 = vmatpush1.msra.mxu0 0.0
        %1508 = vmatprep.subr.mxu0 0.0
        %1509 = vmatpush1.msra.mxu0 0.0
        %1510 = vmatprep.subr.mxu0 0.0
        %1511 = vmatpush1.msra.mxu0 0.0
        %1512 = vmatprep.subr.mxu0 0.0
        %1513 = vmatpush1.msra.mxu0 0.0
        %1514 = vmatprep.subr.mxu0 0.0
        %1515 = vmatpush1.msra.mxu0 0.0
        %1516 = vmatprep.subr.mxu0 0.0
        %1517 = vmatpush1.msra.mxu0 0.0
        %1518 = vmatprep.subr.mxu0 0.0
        %1519 = vmatpush1.msra.mxu0 0.0
        %1520 = vmatprep.subr.mxu0 0.0
        %1521 = vmatpush1.msra.mxu0 0.0
        %1522 = vmatprep.subr.mxu0 0.0
        %1523 = vmatpush1.msra.mxu0 0.0
        %1524 = vmatprep.subr.mxu0 0.0
        %1525 = vmatpush1.msra.mxu0 0.0
        %1526 = vmatprep.subr.mxu0 0.0
        %1527 = vmatpush1.msra.mxu0 0.0
        %1528 = vmatprep.subr.mxu0 0.0
        %1529 = vmatpush1.msra.mxu0 0.0
        %1530 = vmatprep.subr.mxu0 0.0
        %1531 = vmatpush1.msra.mxu0 0.0
        %1532 = vmatprep.subr.mxu0 0.0
        %1533 = vmatpush1.msra.mxu0 0.0
        %1534 = vmatprep.subr.mxu0 0.0
        %1535 = vmatpush1.msra.mxu0 0.0
        %1536 = vmatprep.subr.mxu0 0.0
        %1537 = vmatpush1.msra.mxu0 0.0
        %1538 = vmatprep.subr.mxu0 0.0
        %1539 = vmatpush1.msra.mxu0 0.0
        %1540 = vmatprep.subr.mxu0 0.0
        %1541 = vmatpush1.msra.mxu0 0.0
        %1542 = vmatprep.subr.mxu0 0.0
        %1543 = vmatpush1.msra.mxu0 0.0
        %1544 = vmatprep.subr.mxu0 0.0
        %1545 = vmatpush1.msra.mxu0 0.0
        %1546 = vmatprep.subr.mxu0 0.0
        %1547 = vmatpush1.msra.mxu0 0.0
        %1548 = vmatprep.subr.mxu0 0.0
        %1549 = vmatpush1.msra.mxu0 0.0
        %1550 = vmatprep.subr.mxu0 0.0
        %1551 = vmatpush1.msra.mxu0 0.0
        %1552 = vmatprep.subr.mxu0 0.0
        %1553 = vmatpush1.msra.mxu0 0.0
        %1554 = vmatprep.subr.mxu0 0.0
        %1555 = vmatpush1.msra.mxu0 0.0
        %1556 = vmatprep.subr.mxu0 0.0
        %1557 = vmatpush1.msra.mxu0 0.0
        %1558 = vmatprep.subr.mxu0 0.0
        %1559 = vmatpush1.msra.mxu0 0.0
        %1560 = vmatprep.subr.mxu0 0.0
        %1561 = vmatpush1.msra.mxu0 0.0
        %1562 = vmatprep.subr.mxu0 0.0
        %1563 = vmatpush1.msra.mxu0 0.0
        %1564 = vmatprep.mubr.f32.mxu0 0.0
        %v1565 = vand.u32 %v1406, 4294901760
        %1566 = vmatmul.mubr.f32.gmra.mrb[0].mxu0 %v1565
        %v1567 = vpop.f32.mrb[0].mxu0
        %v1568 = vadd.f32 %v1486, %v1567
        %v1569 = vpop.f32.mrb[0].mxu0
        %v1570 = vadd.f32 %v1488, %v1569
        %1571 = vdwg.mxu0
        %v1572 = vand.u32 %v1410, 4294901760
        %v1573 = vsub.f32 %v1410, %v1572
        %1574 = vmatprep.subr.mxu0 %v1573
        %v1575 = vand.u32 %v1408, 4294901760
        %v1576 = vsub.f32 %v1408, %v1575
        %1577 = vmatpush1.msra.mxu0 %v1576
        %1578 = vmatprep.subr.mxu0 0.0
        %1579 = vmatpush1.msra.mxu0 0.0
        %1580 = vmatprep.subr.mxu0 0.0
        %1581 = vmatpush1.msra.mxu0 0.0
        %1582 = vmatprep.subr.mxu0 0.0
        %1583 = vmatpush1.msra.mxu0 0.0
        %1584 = vmatprep.subr.mxu0 0.0
        %1585 = vmatpush1.msra.mxu0 0.0
        %1586 = vmatprep.subr.mxu0 0.0
        %1587 = vmatpush1.msra.mxu0 0.0
        %1588 = vmatprep.subr.mxu0 0.0
        %1589 = vmatpush1.msra.mxu0 0.0
        %1590 = vmatprep.subr.mxu0 0.0
        %1591 = vmatpush1.msra.mxu0 0.0
        %1592 = vmatprep.subr.mxu0 0.0
        %1593 = vmatpush1.msra.mxu0 0.0
        %1594 = vmatprep.subr.mxu0 0.0
        %1595 = vmatpush1.msra.mxu0 0.0
        %1596 = vmatprep.subr.mxu0 0.0
        %1597 = vmatpush1.msra.mxu0 0.0
        %1598 = vmatprep.subr.mxu0 0.0
        %1599 = vmatpush1.msra.mxu0 0.0
        %1600 = vmatprep.subr.mxu0 0.0
        %1601 = vmatpush1.msra.mxu0 0.0
        %1602 = vmatprep.subr.mxu0 0.0
        %1603 = vmatpush1.msra.mxu0 0.0
        %1604 = vmatprep.subr.mxu0 0.0
        %1605 = vmatpush1.msra.mxu0 0.0
        %1606 = vmatprep.subr.mxu0 0.0
        %1607 = vmatpush1.msra.mxu0 0.0
        %1608 = vmatprep.subr.mxu0 0.0
        %1609 = vmatpush1.msra.mxu0 0.0
        %1610 = vmatprep.subr.mxu0 0.0
        %1611 = vmatpush1.msra.mxu0 0.0
        %1612 = vmatprep.subr.mxu0 0.0
        %1613 = vmatpush1.msra.mxu0 0.0
        %1614 = vmatprep.subr.mxu0 0.0
        %1615 = vmatpush1.msra.mxu0 0.0
        %1616 = vmatprep.subr.mxu0 0.0
        %1617 = vmatpush1.msra.mxu0 0.0
        %1618 = vmatprep.subr.mxu0 0.0
        %1619 = vmatpush1.msra.mxu0 0.0
        %1620 = vmatprep.subr.mxu0 0.0
        %1621 = vmatpush1.msra.mxu0 0.0
        %1622 = vmatprep.subr.mxu0 0.0
        %1623 = vmatpush1.msra.mxu0 0.0
        %1624 = vmatprep.subr.mxu0 0.0
        %1625 = vmatpush1.msra.mxu0 0.0
        %1626 = vmatprep.subr.mxu0 0.0
        %1627 = vmatpush1.msra.mxu0 0.0
        %1628 = vmatprep.subr.mxu0 0.0
        %1629 = vmatpush1.msra.mxu0 0.0
        %1630 = vmatprep.subr.mxu0 0.0
        %1631 = vmatpush1.msra.mxu0 0.0
        %1632 = vmatprep.subr.mxu0 0.0
        %1633 = vmatpush1.msra.mxu0 0.0
        %1634 = vmatprep.subr.mxu0 0.0
        %1635 = vmatpush1.msra.mxu0 0.0
        %1636 = vmatprep.subr.mxu0 0.0
        %1637 = vmatpush1.msra.mxu0 0.0
        %1638 = vmatprep.subr.mxu0 0.0
        %1639 = vmatpush1.msra.mxu0 0.0
        %1640 = vmatprep.mubr.f32.mxu0 0.0
        %v1641 = vand.u32 %v1406, 4294901760
        %v1642 = vsub.f32 %v1406, %v1641
        %1643 = vmatmul.mubr.f32.gmra.mrb[0].mxu0 %v1642
        %v1644 = vpop.f32.mrb[0].mxu0
        %v1645 = vadd.f32 %v1568, %v1644
        %v1646 = vpop.f32.mrb[0].mxu0
        %v1647 = vadd.f32 %v1570, %v1646
        %1648 = vdwg.mxu0
        %v1649 = vand.u32 %v1410, 4294901760
        %1650 = vmatprep.subr.mxu0 %v1649
        %v1651 = vand.u32 %v1408, 4294901760
        %1652 = vmatpush1.msra.mxu0 %v1651
        %1653 = vmatprep.subr.mxu0 0.0
        %1654 = vmatpush1.msra.mxu0 0.0
        %1655 = vmatprep.subr.mxu0 0.0
        %1656 = vmatpush1.msra.mxu0 0.0
        %1657 = vmatprep.subr.mxu0 0.0
        %1658 = vmatpush1.msra.mxu0 0.0
        %1659 = vmatprep.subr.mxu0 0.0
        %1660 = vmatpush1.msra.mxu0 0.0
        %1661 = vmatprep.subr.mxu0 0.0
        %1662 = vmatpush1.msra.mxu0 0.0
        %1663 = vmatprep.subr.mxu0 0.0
        %1664 = vmatpush1.msra.mxu0 0.0
        %1665 = vmatprep.subr.mxu0 0.0
        %1666 = vmatpush1.msra.mxu0 0.0
        %1667 = vmatprep.subr.mxu0 0.0
        %1668 = vmatpush1.msra.mxu0 0.0
        %1669 = vmatprep.subr.mxu0 0.0
        %1670 = vmatpush1.msra.mxu0 0.0
        %1671 = vmatprep.subr.mxu0 0.0
        %1672 = vmatpush1.msra.mxu0 0.0
        %1673 = vmatprep.subr.mxu0 0.0
        %1674 = vmatpush1.msra.mxu0 0.0
        %1675 = vmatprep.subr.mxu0 0.0
        %1676 = vmatpush1.msra.mxu0 0.0
        %1677 = vmatprep.subr.mxu0 0.0
        %1678 = vmatpush1.msra.mxu0 0.0
        %1679 = vmatprep.subr.mxu0 0.0
        %1680 = vmatpush1.msra.mxu0 0.0
        %1681 = vmatprep.subr.mxu0 0.0
        %1682 = vmatpush1.msra.mxu0 0.0
        %1683 = vmatprep.subr.mxu0 0.0
        %1684 = vmatpush1.msra.mxu0 0.0
        %1685 = vmatprep.subr.mxu0 0.0
        %1686 = vmatpush1.msra.mxu0 0.0
        %1687 = vmatprep.subr.mxu0 0.0
        %1688 = vmatpush1.msra.mxu0 0.0
        %1689 = vmatprep.subr.mxu0 0.0
        %1690 = vmatpush1.msra.mxu0 0.0
        %1691 = vmatprep.subr.mxu0 0.0
        %1692 = vmatpush1.msra.mxu0 0.0
        %1693 = vmatprep.subr.mxu0 0.0
        %1694 = vmatpush1.msra.mxu0 0.0
        %1695 = vmatprep.subr.mxu0 0.0
        %1696 = vmatpush1.msra.mxu0 0.0
        %1697 = vmatprep.subr.mxu0 0.0
        %1698 = vmatpush1.msra.mxu0 0.0
        %1699 = vmatprep.subr.mxu0 0.0
        %1700 = vmatpush1.msra.mxu0 0.0
        %1701 = vmatprep.subr.mxu0 0.0
        %1702 = vmatpush1.msra.mxu0 0.0
        %1703 = vmatprep.subr.mxu0 0.0
        %1704 = vmatpush1.msra.mxu0 0.0
        %1705 = vmatprep.subr.mxu0 0.0
        %1706 = vmatpush1.msra.mxu0 0.0
        %1707 = vmatprep.subr.mxu0 0.0
        %1708 = vmatpush1.msra.mxu0 0.0
        %1709 = vmatprep.subr.mxu0 0.0
        %1710 = vmatpush1.msra.mxu0 0.0
        %1711 = vmatprep.subr.mxu0 0.0
        %1712 = vmatpush1.msra.mxu0 0.0
        %1713 = vmatprep.subr.mxu0 0.0
        %1714 = vmatpush1.msra.mxu0 0.0
        %1715 = vmatprep.mubr.f32.mxu0 0.0
        %v1716 = vand.u32 %v1406, 4294901760
        %v1717 = vsub.f32 %v1406, %v1716
        %v1718 = vand.u32 %v1717, 4294901760
        %1719 = vmatmul.mubr.f32.gmra.mrb[0].mxu0 %v1718
        %v1720 = vpop.f32.mrb[0].mxu0
        %v1721 = vadd.f32 %v1645, %v1720
        %v1722 = vpop.f32.mrb[0].mxu0
        %v1723 = vadd.f32 %v1647, %v1722
        %1724 = vdwg.mxu0
        %v1725 = vand.u32 %v1410, 4294901760
        %v1726 = vsub.f32 %v1410, %v1725
        %v1727 = vand.u32 %v1726, 4294901760
        %1728 = vmatprep.subr.mxu0 %v1727
        %v1729 = vand.u32 %v1408, 4294901760
        %v1730 = vsub.f32 %v1408, %v1729
        %v1731 = vand.u32 %v1730, 4294901760
        %1732 = vmatpush1.msra.mxu0 %v1731
        %1733 = vmatprep.subr.mxu0 0.0
        %1734 = vmatpush1.msra.mxu0 0.0
        %1735 = vmatprep.subr.mxu0 0.0
        %1736 = vmatpush1.msra.mxu0 0.0
        %1737 = vmatprep.subr.mxu0 0.0
        %1738 = vmatpush1.msra.mxu0 0.0
        %1739 = vmatprep.subr.mxu0 0.0
        %1740 = vmatpush1.msra.mxu0 0.0
        %1741 = vmatprep.subr.mxu0 0.0
        %1742 = vmatpush1.msra.mxu0 0.0
        %1743 = vmatprep.subr.mxu0 0.0
        %1744 = vmatpush1.msra.mxu0 0.0
        %1745 = vmatprep.subr.mxu0 0.0
        %1746 = vmatpush1.msra.mxu0 0.0
        %1747 = vmatprep.subr.mxu0 0.0
        %1748 = vmatpush1.msra.mxu0 0.0
        %1749 = vmatprep.subr.mxu0 0.0
        %1750 = vmatpush1.msra.mxu0 0.0
        %1751 = vmatprep.subr.mxu0 0.0
        %1752 = vmatpush1.msra.mxu0 0.0
        %1753 = vmatprep.subr.mxu0 0.0
        %1754 = vmatpush1.msra.mxu0 0.0
        %1755 = vmatprep.subr.mxu0 0.0
        %1756 = vmatpush1.msra.mxu0 0.0
        %1757 = vmatprep.subr.mxu0 0.0
        %1758 = vmatpush1.msra.mxu0 0.0
        %1759 = vmatprep.subr.mxu0 0.0
        %1760 = vmatpush1.msra.mxu0 0.0
        %1761 = vmatprep.subr.mxu0 0.0
        %1762 = vmatpush1.msra.mxu0 0.0
        %1763 = vmatprep.subr.mxu0 0.0
        %1764 = vmatpush1.msra.mxu0 0.0
        %1765 = vmatprep.subr.mxu0 0.0
        %1766 = vmatpush1.msra.mxu0 0.0
        %1767 = vmatprep.subr.mxu0 0.0
        %1768 = vmatpush1.msra.mxu0 0.0
        %1769 = vmatprep.subr.mxu0 0.0
        %1770 = vmatpush1.msra.mxu0 0.0
        %1771 = vmatprep.subr.mxu0 0.0
        %1772 = vmatpush1.msra.mxu0 0.0
        %1773 = vmatprep.subr.mxu0 0.0
        %1774 = vmatpush1.msra.mxu0 0.0
        %1775 = vmatprep.subr.mxu0 0.0
        %1776 = vmatpush1.msra.mxu0 0.0
        %1777 = vmatprep.subr.mxu0 0.0
        %1778 = vmatpush1.msra.mxu0 0.0
        %1779 = vmatprep.subr.mxu0 0.0
        %1780 = vmatpush1.msra.mxu0 0.0
        %1781 = vmatprep.subr.mxu0 0.0
        %1782 = vmatpush1.msra.mxu0 0.0
        %1783 = vmatprep.subr.mxu0 0.0
        %1784 = vmatpush1.msra.mxu0 0.0
        %1785 = vmatprep.subr.mxu0 0.0
        %1786 = vmatpush1.msra.mxu0 0.0
        %1787 = vmatprep.subr.mxu0 0.0
        %1788 = vmatpush1.msra.mxu0 0.0
        %1789 = vmatprep.subr.mxu0 0.0
        %1790 = vmatpush1.msra.mxu0 0.0
        %1791 = vmatprep.subr.mxu0 0.0
        %1792 = vmatpush1.msra.mxu0 0.0
        %1793 = vmatprep.subr.mxu0 0.0
        %1794 = vmatpush1.msra.mxu0 0.0
        %1795 = vmatprep.mubr.f32.mxu0 0.0
        %v1796 = vand.u32 %v1406, 4294901760
        %1797 = vmatmul.mubr.f32.gmra.mrb[0].mxu0 %v1796
        %v1798 = vpop.f32.mrb[0].mxu0
        %v1799 = vadd.f32 %v1721, %v1798
        %v1800 = vpop.f32.mrb[0].mxu0
        %v1801 = vadd.f32 %v1723, %v1800
        %1802 = vdwg.mxu0
        %v1803 = vand.u32 %v1410, 4294901760
        %1804 = vmatprep.subr.mxu0 %v1803
        %v1805 = vand.u32 %v1408, 4294901760
        %1806 = vmatpush1.msra.mxu0 %v1805
        %1807 = vmatprep.subr.mxu0 0.0
        %1808 = vmatpush1.msra.mxu0 0.0
        %1809 = vmatprep.subr.mxu0 0.0
        %1810 = vmatpush1.msra.mxu0 0.0
        %1811 = vmatprep.subr.mxu0 0.0
        %1812 = vmatpush1.msra.mxu0 0.0
        %1813 = vmatprep.subr.mxu0 0.0
        %1814 = vmatpush1.msra.mxu0 0.0
        %1815 = vmatprep.subr.mxu0 0.0
        %1816 = vmatpush1.msra.mxu0 0.0
        %1817 = vmatprep.subr.mxu0 0.0
        %1818 = vmatpush1.msra.mxu0 0.0
        %1819 = vmatprep.subr.mxu0 0.0
        %1820 = vmatpush1.msra.mxu0 0.0
        %1821 = vmatprep.subr.mxu0 0.0
        %1822 = vmatpush1.msra.mxu0 0.0
        %1823 = vmatprep.subr.mxu0 0.0
        %1824 = vmatpush1.msra.mxu0 0.0
        %1825 = vmatprep.subr.mxu0 0.0
        %1826 = vmatpush1.msra.mxu0 0.0
        %1827 = vmatprep.subr.mxu0 0.0
        %1828 = vmatpush1.msra.mxu0 0.0
        %1829 = vmatprep.subr.mxu0 0.0
        %1830 = vmatpush1.msra.mxu0 0.0
        %1831 = vmatprep.subr.mxu0 0.0
        %1832 = vmatpush1.msra.mxu0 0.0
        %1833 = vmatprep.subr.mxu0 0.0
        %1834 = vmatpush1.msra.mxu0 0.0
        %1835 = vmatprep.subr.mxu0 0.0
        %1836 = vmatpush1.msra.mxu0 0.0
        %1837 = vmatprep.subr.mxu0 0.0
        %1838 = vmatpush1.msra.mxu0 0.0
        %1839 = vmatprep.subr.mxu0 0.0
        %1840 = vmatpush1.msra.mxu0 0.0
        %1841 = vmatprep.subr.mxu0 0.0
        %1842 = vmatpush1.msra.mxu0 0.0
        %1843 = vmatprep.subr.mxu0 0.0
        %1844 = vmatpush1.msra.mxu0 0.0
        %1845 = vmatprep.subr.mxu0 0.0
        %1846 = vmatpush1.msra.mxu0 0.0
        %1847 = vmatprep.subr.mxu0 0.0
        %1848 = vmatpush1.msra.mxu0 0.0
        %1849 = vmatprep.subr.mxu0 0.0
        %1850 = vmatpush1.msra.mxu0 0.0
        %1851 = vmatprep.subr.mxu0 0.0
        %1852 = vmatpush1.msra.mxu0 0.0
        %1853 = vmatprep.subr.mxu0 0.0
        %1854 = vmatpush1.msra.mxu0 0.0
        %1855 = vmatprep.subr.mxu0 0.0
        %1856 = vmatpush1.msra.mxu0 0.0
        %1857 = vmatprep.subr.mxu0 0.0
        %1858 = vmatpush1.msra.mxu0 0.0
        %1859 = vmatprep.subr.mxu0 0.0
        %1860 = vmatpush1.msra.mxu0 0.0
        %1861 = vmatprep.subr.mxu0 0.0
        %1862 = vmatpush1.msra.mxu0 0.0
        %1863 = vmatprep.subr.mxu0 0.0
        %1864 = vmatpush1.msra.mxu0 0.0
        %1865 = vmatprep.subr.mxu0 0.0
        %1866 = vmatpush1.msra.mxu0 0.0
        %1867 = vmatprep.subr.mxu0 0.0
        %1868 = vmatpush1.msra.mxu0 0.0
        %1869 = vmatprep.mubr.f32.mxu0 0.0
        %v1870 = vand.u32 %v1406, 4294901760
        %1871 = vmatmul.mubr.f32.gmra.mrb[0].mxu0 %v1870
        %v1872 = vpop.f32.mrb[0].mxu0
        %v1873 = vadd.f32 %v1799, %v1872
        %v1874 = vpop.f32.mrb[0].mxu0
        %v1875 = vadd.f32 %v1801, %v1874
        %1876 = vdwg.mxu0
        %v1879 = vcombine.low %v1873, %v1875
        %v1881 = vunpack.c.l.s4 1966171168
        %v1882 = vunpack.c.0.s8 %v1881
        %v1883 = vlaneseq
        %v1884 = vshrl.u32 %v1883, 7
        %v1885 = vsub.s32 %v1882, %v1884
        %v1886 = vrot.slane %v1879, %v1885
        %v1888 = vunpack.c.l.s4 1966171168
        %v1889 = vunpack.c.0.s8 %v1888
        %v1890 = vlaneseq
        %v1891 = vshrl.u32 %v1890, 7
        %v1892 = vsub.s32 %v1889, %v1891
        %v1893 = vrot.slane %v1886, %v1892
        %v1895 = vadd.f32 %v1352, %v1893
        %v1896 = vsel %vm255, %v252, 0.0
        %v1897 = vadd.f32 %v284, %v1896
        %v1898 = vsel %vm285, %v253, 0.0
        %v1899 = vadd.f32 %v314, %v1898
        %v1900 = vsel %vm255, %v1897, 0.0
        %v1901 = vsel %vm285, %v1899, 0.0
        %v1902 = vadd.f32 %v1900, %v1901
        %v1903 = vrot.slane %v1902, 4
        %v1904 = vadd.f32 %v1902, %v1903
        %v1905 = vrot.slane %v1904, 2
        %v1906 = vadd.f32 %v1904, %v1905
        %v1907 = vrot.slane %v1906, 1
        %v1908 = vadd.f32 %v1906, %v1907
        %v1909 = vmul.f32 %v1908, 0.00390625
        %s1910 = scalar_lea.vmem %s1, 24
        %v1911 = vld [vmem:[%s1910] sm:$0x77]
        %v1913 = vcombine.high %v1911, %v1911
        %v1915 = vsel %vm255, %v1909, 0
        %v1917 = vsel %vm331, %v1911, 0
        %v1919 = vsel %vm331, %v1913, 0
        %v1921 = vand.u32 %v1919, 4294901760
        %1922 = vmatprep.subr.mxu0 %v1921
        %v1923 = vand.u32 %v1917, 4294901760
        %1924 = vmatpush1.msra.mxu0 %v1923
        %1925 = vmatprep.subr.mxu0 0.0
        %1926 = vmatpush1.msra.mxu0 0.0
        %1927 = vmatprep.subr.mxu0 0.0
        %1928 = vmatpush1.msra.mxu0 0.0
        %1929 = vmatprep.subr.mxu0 0.0
        %1930 = vmatpush1.msra.mxu0 0.0
        %1931 = vmatprep.subr.mxu0 0.0
        %1932 = vmatpush1.msra.mxu0 0.0
        %1933 = vmatprep.subr.mxu0 0.0
        %1934 = vmatpush1.msra.mxu0 0.0
        %1935 = vmatprep.subr.mxu0 0.0
        %1936 = vmatpush1.msra.mxu0 0.0
        %1937 = vmatprep.subr.mxu0 0.0
        %1938 = vmatpush1.msra.mxu0 0.0
        %1939 = vmatprep.subr.mxu0 0.0
        %1940 = vmatpush1.msra.mxu0 0.0
        %1941 = vmatprep.subr.mxu0 0.0
        %1942 = vmatpush1.msra.mxu0 0.0
        %1943 = vmatprep.subr.mxu0 0.0
        %1944 = vmatpush1.msra.mxu0 0.0
        %1945 = vmatprep.subr.mxu0 0.0
        %1946 = vmatpush1.msra.mxu0 0.0
        %1947 = vmatprep.subr.mxu0 0.0
        %1948 = vmatpush1.msra.mxu0 0.0
        %1949 = vmatprep.subr.mxu0 0.0
        %1950 = vmatpush1.msra.mxu0 0.0
        %1951 = vmatprep.subr.mxu0 0.0
        %1952 = vmatpush1.msra.mxu0 0.0
        %1953 = vmatprep.subr.mxu0 0.0
        %1954 = vmatpush1.msra.mxu0 0.0
        %1955 = vmatprep.subr.mxu0 0.0
        %1956 = vmatpush1.msra.mxu0 0.0
        %1957 = vmatprep.subr.mxu0 0.0
        %1958 = vmatpush1.msra.mxu0 0.0
        %1959 = vmatprep.subr.mxu0 0.0
        %1960 = vmatpush1.msra.mxu0 0.0
        %1961 = vmatprep.subr.mxu0 0.0
        %1962 = vmatpush1.msra.mxu0 0.0
        %1963 = vmatprep.subr.mxu0 0.0
        %1964 = vmatpush1.msra.mxu0 0.0
        %1965 = vmatprep.subr.mxu0 0.0
        %1966 = vmatpush1.msra.mxu0 0.0
        %1967 = vmatprep.subr.mxu0 0.0
        %1968 = vmatpush1.msra.mxu0 0.0
        %1969 = vmatprep.subr.mxu0 0.0
        %1970 = vmatpush1.msra.mxu0 0.0
        %1971 = vmatprep.subr.mxu0 0.0
        %1972 = vmatpush1.msra.mxu0 0.0
        %1973 = vmatprep.subr.mxu0 0.0
        %1974 = vmatpush1.msra.mxu0 0.0
        %1975 = vmatprep.subr.mxu0 0.0
        %1976 = vmatpush1.msra.mxu0 0.0
        %1977 = vmatprep.subr.mxu0 0.0
        %1978 = vmatpush1.msra.mxu0 0.0
        %1979 = vmatprep.subr.mxu0 0.0
        %1980 = vmatpush1.msra.mxu0 0.0
        %1981 = vmatprep.subr.mxu0 0.0
        %1982 = vmatpush1.msra.mxu0 0.0
        %1983 = vmatprep.subr.mxu0 0.0
        %1984 = vmatpush1.msra.mxu0 0.0
        %1985 = vmatprep.subr.mxu0 0.0
        %1986 = vmatpush1.msra.mxu0 0.0
        %1987 = vmatprep.mubr.f32.mxu0 0.0
        %v1988 = vand.u32 %v1915, 4294901760
        %v1989 = vsub.f32 %v1915, %v1988
        %v1990 = vand.u32 %v1989, 4294901760
        %v1991 = vsub.f32 %v1989, %v1990
        %v1992 = vand.u32 %v1991, 4294901760
        %1993 = vmatmul.mubr.f32.gmra.mrb[0].mxu0 %v1992
        %v1994 = vpop.f32.mrb[0].mxu0
        %v1995 = vadd.f32 0.0, %v1994
        %v1996 = vpop.f32.mrb[0].mxu0
        %v1997 = vadd.f32 0.0, %v1996
        %1998 = vdwg.mxu0
        %v1999 = vand.u32 %v1919, 4294901760
        %v2000 = vsub.f32 %v1919, %v1999
        %v2001 = vand.u32 %v2000, 4294901760
        %v2002 = vsub.f32 %v2000, %v2001
        %v2003 = vand.u32 %v2002, 4294901760
        %2004 = vmatprep.subr.mxu0 %v2003
        %v2005 = vand.u32 %v1917, 4294901760
        %v2006 = vsub.f32 %v1917, %v2005
        %v2007 = vand.u32 %v2006, 4294901760
        %v2008 = vsub.f32 %v2006, %v2007
        %v2009 = vand.u32 %v2008, 4294901760
        %2010 = vmatpush1.msra.mxu0 %v2009
        %2011 = vmatprep.subr.mxu0 0.0
        %2012 = vmatpush1.msra.mxu0 0.0
        %2013 = vmatprep.subr.mxu0 0.0
        %2014 = vmatpush1.msra.mxu0 0.0
        %2015 = vmatprep.subr.mxu0 0.0
        %2016 = vmatpush1.msra.mxu0 0.0
        %2017 = vmatprep.subr.mxu0 0.0
        %2018 = vmatpush1.msra.mxu0 0.0
        %2019 = vmatprep.subr.mxu0 0.0
        %2020 = vmatpush1.msra.mxu0 0.0
        %2021 = vmatprep.subr.mxu0 0.0
        %2022 = vmatpush1.msra.mxu0 0.0
        %2023 = vmatprep.subr.mxu0 0.0
        %2024 = vmatpush1.msra.mxu0 0.0
        %2025 = vmatprep.subr.mxu0 0.0
        %2026 = vmatpush1.msra.mxu0 0.0
        %2027 = vmatprep.subr.mxu0 0.0
        %2028 = vmatpush1.msra.mxu0 0.0
        %2029 = vmatprep.subr.mxu0 0.0
        %2030 = vmatpush1.msra.mxu0 0.0
        %2031 = vmatprep.subr.mxu0 0.0
        %2032 = vmatpush1.msra.mxu0 0.0
        %2033 = vmatprep.subr.mxu0 0.0
        %2034 = vmatpush1.msra.mxu0 0.0
        %2035 = vmatprep.subr.mxu0 0.0
        %2036 = vmatpush1.msra.mxu0 0.0
        %2037 = vmatprep.subr.mxu0 0.0
        %2038 = vmatpush1.msra.mxu0 0.0
        %2039 = vmatprep.subr.mxu0 0.0
        %2040 = vmatpush1.msra.mxu0 0.0
        %2041 = vmatprep.subr.mxu0 0.0
        %2042 = vmatpush1.msra.mxu0 0.0
        %2043 = vmatprep.subr.mxu0 0.0
        %2044 = vmatpush1.msra.mxu0 0.0
        %2045 = vmatprep.subr.mxu0 0.0
        %2046 = vmatpush1.msra.mxu0 0.0
        %2047 = vmatprep.subr.mxu0 0.0
        %2048 = vmatpush1.msra.mxu0 0.0
        %2049 = vmatprep.subr.mxu0 0.0
        %2050 = vmatpush1.msra.mxu0 0.0
        %2051 = vmatprep.subr.mxu0 0.0
        %2052 = vmatpush1.msra.mxu0 0.0
        %2053 = vmatprep.subr.mxu0 0.0
        %2054 = vmatpush1.msra.mxu0 0.0
        %2055 = vmatprep.subr.mxu0 0.0
        %2056 = vmatpush1.msra.mxu0 0.0
        %2057 = vmatprep.subr.mxu0 0.0
        %2058 = vmatpush1.msra.mxu0 0.0
        %2059 = vmatprep.subr.mxu0 0.0
        %2060 = vmatpush1.msra.mxu0 0.0
        %2061 = vmatprep.subr.mxu0 0.0
        %2062 = vmatpush1.msra.mxu0 0.0
        %2063 = vmatprep.subr.mxu0 0.0
        %2064 = vmatpush1.msra.mxu0 0.0
        %2065 = vmatprep.subr.mxu0 0.0
        %2066 = vmatpush1.msra.mxu0 0.0
        %2067 = vmatprep.subr.mxu0 0.0
        %2068 = vmatpush1.msra.mxu0 0.0
        %2069 = vmatprep.subr.mxu0 0.0
        %2070 = vmatpush1.msra.mxu0 0.0
        %2071 = vmatprep.subr.mxu0 0.0
        %2072 = vmatpush1.msra.mxu0 0.0
        %2073 = vmatprep.mubr.f32.mxu0 0.0
        %v2074 = vand.u32 %v1915, 4294901760
        %2075 = vmatmul.mubr.f32.gmra.mrb[0].mxu0 %v2074
        %v2076 = vpop.f32.mrb[0].mxu0
        %v2077 = vadd.f32 %v1995, %v2076
        %v2078 = vpop.f32.mrb[0].mxu0
        %v2079 = vadd.f32 %v1997, %v2078
        %2080 = vdwg.mxu0
        %v2081 = vand.u32 %v1919, 4294901760
        %v2082 = vsub.f32 %v1919, %v2081
        %2083 = vmatprep.subr.mxu0 %v2082
        %v2084 = vand.u32 %v1917, 4294901760
        %v2085 = vsub.f32 %v1917, %v2084
        %2086 = vmatpush1.msra.mxu0 %v2085
        %2087 = vmatprep.subr.mxu0 0.0
        %2088 = vmatpush1.msra.mxu0 0.0
        %2089 = vmatprep.subr.mxu0 0.0
        %2090 = vmatpush1.msra.mxu0 0.0
        %2091 = vmatprep.subr.mxu0 0.0
        %2092 = vmatpush1.msra.mxu0 0.0
        %2093 = vmatprep.subr.mxu0 0.0
        %2094 = vmatpush1.msra.mxu0 0.0
        %2095 = vmatprep.subr.mxu0 0.0
        %2096 = vmatpush1.msra.mxu0 0.0
        %2097 = vmatprep.subr.mxu0 0.0
        %2098 = vmatpush1.msra.mxu0 0.0
        %2099 = vmatprep.subr.mxu0 0.0
        %2100 = vmatpush1.msra.mxu0 0.0
        %2101 = vmatprep.subr.mxu0 0.0
        %2102 = vmatpush1.msra.mxu0 0.0
        %2103 = vmatprep.subr.mxu0 0.0
        %2104 = vmatpush1.msra.mxu0 0.0
        %2105 = vmatprep.subr.mxu0 0.0
        %2106 = vmatpush1.msra.mxu0 0.0
        %2107 = vmatprep.subr.mxu0 0.0
        %2108 = vmatpush1.msra.mxu0 0.0
        %2109 = vmatprep.subr.mxu0 0.0
        %2110 = vmatpush1.msra.mxu0 0.0
        %2111 = vmatprep.subr.mxu0 0.0
        %2112 = vmatpush1.msra.mxu0 0.0
        %2113 = vmatprep.subr.mxu0 0.0
        %2114 = vmatpush1.msra.mxu0 0.0
        %2115 = vmatprep.subr.mxu0 0.0
        %2116 = vmatpush1.msra.mxu0 0.0
        %2117 = vmatprep.subr.mxu0 0.0
        %2118 = vmatpush1.msra.mxu0 0.0
        %2119 = vmatprep.subr.mxu0 0.0
        %2120 = vmatpush1.msra.mxu0 0.0
        %2121 = vmatprep.subr.mxu0 0.0
        %2122 = vmatpush1.msra.mxu0 0.0
        %2123 = vmatprep.subr.mxu0 0.0
        %2124 = vmatpush1.msra.mxu0 0.0
        %2125 = vmatprep.subr.mxu0 0.0
        %2126 = vmatpush1.msra.mxu0 0.0
        %2127 = vmatprep.subr.mxu0 0.0
        %2128 = vmatpush1.msra.mxu0 0.0
        %2129 = vmatprep.subr.mxu0 0.0
        %2130 = vmatpush1.msra.mxu0 0.0
        %2131 = vmatprep.subr.mxu0 0.0
        %2132 = vmatpush1.msra.mxu0 0.0
        %2133 = vmatprep.subr.mxu0 0.0
        %2134 = vmatpush1.msra.mxu0 0.0
        %2135 = vmatprep.subr.mxu0 0.0
        %2136 = vmatpush1.msra.mxu0 0.0
        %2137 = vmatprep.subr.mxu0 0.0
        %2138 = vmatpush1.msra.mxu0 0.0
        %2139 = vmatprep.subr.mxu0 0.0
        %2140 = vmatpush1.msra.mxu0 0.0
        %2141 = vmatprep.subr.mxu0 0.0
        %2142 = vmatpush1.msra.mxu0 0.0
        %2143 = vmatprep.subr.mxu0 0.0
        %2144 = vmatpush1.msra.mxu0 0.0
        %2145 = vmatprep.subr.mxu0 0.0
        %2146 = vmatpush1.msra.mxu0 0.0
        %2147 = vmatprep.subr.mxu0 0.0
        %2148 = vmatpush1.msra.mxu0 0.0
        %2149 = vmatprep.mubr.f32.mxu0 0.0
        %v2150 = vand.u32 %v1915, 4294901760
        %v2151 = vsub.f32 %v1915, %v2150
        %2152 = vmatmul.mubr.f32.gmra.mrb[0].mxu0 %v2151
        %v2153 = vpop.f32.mrb[0].mxu0
        %v2154 = vadd.f32 %v2077, %v2153
        %v2155 = vpop.f32.mrb[0].mxu0
        %v2156 = vadd.f32 %v2079, %v2155
        %2157 = vdwg.mxu0
        %v2158 = vand.u32 %v1919, 4294901760
        %2159 = vmatprep.subr.mxu0 %v2158
        %v2160 = vand.u32 %v1917, 4294901760
        %2161 = vmatpush1.msra.mxu0 %v2160
        %2162 = vmatprep.subr.mxu0 0.0
        %2163 = vmatpush1.msra.mxu0 0.0
        %2164 = vmatprep.subr.mxu0 0.0
        %2165 = vmatpush1.msra.mxu0 0.0
        %2166 = vmatprep.subr.mxu0 0.0
        %2167 = vmatpush1.msra.mxu0 0.0
        %2168 = vmatprep.subr.mxu0 0.0
        %2169 = vmatpush1.msra.mxu0 0.0
        %2170 = vmatprep.subr.mxu0 0.0
        %2171 = vmatpush1.msra.mxu0 0.0
        %2172 = vmatprep.subr.mxu0 0.0
        %2173 = vmatpush1.msra.mxu0 0.0
        %2174 = vmatprep.subr.mxu0 0.0
        %2175 = vmatpush1.msra.mxu0 0.0
        %2176 = vmatprep.subr.mxu0 0.0
        %2177 = vmatpush1.msra.mxu0 0.0
        %2178 = vmatprep.subr.mxu0 0.0
        %2179 = vmatpush1.msra.mxu0 0.0
        %2180 = vmatprep.subr.mxu0 0.0
        %2181 = vmatpush1.msra.mxu0 0.0
        %2182 = vmatprep.subr.mxu0 0.0
        %2183 = vmatpush1.msra.mxu0 0.0
        %2184 = vmatprep.subr.mxu0 0.0
        %2185 = vmatpush1.msra.mxu0 0.0
        %2186 = vmatprep.subr.mxu0 0.0
        %2187 = vmatpush1.msra.mxu0 0.0
        %2188 = vmatprep.subr.mxu0 0.0
        %2189 = vmatpush1.msra.mxu0 0.0
        %2190 = vmatprep.subr.mxu0 0.0
        %2191 = vmatpush1.msra.mxu0 0.0
        %2192 = vmatprep.subr.mxu0 0.0
        %2193 = vmatpush1.msra.mxu0 0.0
        %2194 = vmatprep.subr.mxu0 0.0
        %2195 = vmatpush1.msra.mxu0 0.0
        %2196 = vmatprep.subr.mxu0 0.0
        %2197 = vmatpush1.msra.mxu0 0.0
        %2198 = vmatprep.subr.mxu0 0.0
        %2199 = vmatpush1.msra.mxu0 0.0
        %2200 = vmatprep.subr.mxu0 0.0
        %2201 = vmatpush1.msra.mxu0 0.0
        %2202 = vmatprep.subr.mxu0 0.0
        %2203 = vmatpush1.msra.mxu0 0.0
        %2204 = vmatprep.subr.mxu0 0.0
        %2205 = vmatpush1.msra.mxu0 0.0
        %2206 = vmatprep.subr.mxu0 0.0
        %2207 = vmatpush1.msra.mxu0 0.0
        %2208 = vmatprep.subr.mxu0 0.0
        %2209 = vmatpush1.msra.mxu0 0.0
        %2210 = vmatprep.subr.mxu0 0.0
        %2211 = vmatpush1.msra.mxu0 0.0
        %2212 = vmatprep.subr.mxu0 0.0
        %2213 = vmatpush1.msra.mxu0 0.0
        %2214 = vmatprep.subr.mxu0 0.0
        %2215 = vmatpush1.msra.mxu0 0.0
        %2216 = vmatprep.subr.mxu0 0.0
        %2217 = vmatpush1.msra.mxu0 0.0
        %2218 = vmatprep.subr.mxu0 0.0
        %2219 = vmatpush1.msra.mxu0 0.0
        %2220 = vmatprep.subr.mxu0 0.0
        %2221 = vmatpush1.msra.mxu0 0.0
        %2222 = vmatprep.subr.mxu0 0.0
        %2223 = vmatpush1.msra.mxu0 0.0
        %2224 = vmatprep.mubr.f32.mxu0 0.0
        %v2225 = vand.u32 %v1915, 4294901760
        %v2226 = vsub.f32 %v1915, %v2225
        %v2227 = vand.u32 %v2226, 4294901760
        %2228 = vmatmul.mubr.f32.gmra.mrb[0].mxu0 %v2227
        %v2229 = vpop.f32.mrb[0].mxu0
        %v2230 = vadd.f32 %v2154, %v2229
        %v2231 = vpop.f32.mrb[0].mxu0
        %v2232 = vadd.f32 %v2156, %v2231
        %2233 = vdwg.mxu0
        %v2234 = vand.u32 %v1919, 4294901760
        %v2235 = vsub.f32 %v1919, %v2234
        %v2236 = vand.u32 %v2235, 4294901760
        %2237 = vmatprep.subr.mxu0 %v2236
        %v2238 = vand.u32 %v1917, 4294901760
        %v2239 = vsub.f32 %v1917, %v2238
        %v2240 = vand.u32 %v2239, 4294901760
        %2241 = vmatpush1.msra.mxu0 %v2240
        %2242 = vmatprep.subr.mxu0 0.0
        %2243 = vmatpush1.msra.mxu0 0.0
        %2244 = vmatprep.subr.mxu0 0.0
        %2245 = vmatpush1.msra.mxu0 0.0
        %2246 = vmatprep.subr.mxu0 0.0
        %2247 = vmatpush1.msra.mxu0 0.0
        %2248 = vmatprep.subr.mxu0 0.0
        %2249 = vmatpush1.msra.mxu0 0.0
        %2250 = vmatprep.subr.mxu0 0.0
        %2251 = vmatpush1.msra.mxu0 0.0
        %2252 = vmatprep.subr.mxu0 0.0
        %2253 = vmatpush1.msra.mxu0 0.0
        %2254 = vmatprep.subr.mxu0 0.0
        %2255 = vmatpush1.msra.mxu0 0.0
        %2256 = vmatprep.subr.mxu0 0.0
        %2257 = vmatpush1.msra.mxu0 0.0
        %2258 = vmatprep.subr.mxu0 0.0
        %2259 = vmatpush1.msra.mxu0 0.0
        %2260 = vmatprep.subr.mxu0 0.0
        %2261 = vmatpush1.msra.mxu0 0.0
        %2262 = vmatprep.subr.mxu0 0.0
        %2263 = vmatpush1.msra.mxu0 0.0
        %2264 = vmatprep.subr.mxu0 0.0
        %2265 = vmatpush1.msra.mxu0 0.0
        %2266 = vmatprep.subr.mxu0 0.0
        %2267 = vmatpush1.msra.mxu0 0.0
        %2268 = vmatprep.subr.mxu0 0.0
        %2269 = vmatpush1.msra.mxu0 0.0
        %2270 = vmatprep.subr.mxu0 0.0
        %2271 = vmatpush1.msra.mxu0 0.0
        %2272 = vmatprep.subr.mxu0 0.0
        %2273 = vmatpush1.msra.mxu0 0.0
        %2274 = vmatprep.subr.mxu0 0.0
        %2275 = vmatpush1.msra.mxu0 0.0
        %2276 = vmatprep.subr.mxu0 0.0
        %2277 = vmatpush1.msra.mxu0 0.0
        %2278 = vmatprep.subr.mxu0 0.0
        %2279 = vmatpush1.msra.mxu0 0.0
        %2280 = vmatprep.subr.mxu0 0.0
        %2281 = vmatpush1.msra.mxu0 0.0
        %2282 = vmatprep.subr.mxu0 0.0
        %2283 = vmatpush1.msra.mxu0 0.0
        %2284 = vmatprep.subr.mxu0 0.0
        %2285 = vmatpush1.msra.mxu0 0.0
        %2286 = vmatprep.subr.mxu0 0.0
        %2287 = vmatpush1.msra.mxu0 0.0
        %2288 = vmatprep.subr.mxu0 0.0
        %2289 = vmatpush1.msra.mxu0 0.0
        %2290 = vmatprep.subr.mxu0 0.0
        %2291 = vmatpush1.msra.mxu0 0.0
        %2292 = vmatprep.subr.mxu0 0.0
        %2293 = vmatpush1.msra.mxu0 0.0
        %2294 = vmatprep.subr.mxu0 0.0
        %2295 = vmatpush1.msra.mxu0 0.0
        %2296 = vmatprep.subr.mxu0 0.0
        %2297 = vmatpush1.msra.mxu0 0.0
        %2298 = vmatprep.subr.mxu0 0.0
        %2299 = vmatpush1.msra.mxu0 0.0
        %2300 = vmatprep.subr.mxu0 0.0
        %2301 = vmatpush1.msra.mxu0 0.0
        %2302 = vmatprep.subr.mxu0 0.0
        %2303 = vmatpush1.msra.mxu0 0.0
        %2304 = vmatprep.mubr.f32.mxu0 0.0
        %v2305 = vand.u32 %v1915, 4294901760
        %2306 = vmatmul.mubr.f32.gmra.mrb[0].mxu0 %v2305
        %v2307 = vpop.f32.mrb[0].mxu0
        %v2308 = vadd.f32 %v2230, %v2307
        %v2309 = vpop.f32.mrb[0].mxu0
        %v2310 = vadd.f32 %v2232, %v2309
        %2311 = vdwg.mxu0
        %v2312 = vand.u32 %v1919, 4294901760
        %2313 = vmatprep.subr.mxu0 %v2312
        %v2314 = vand.u32 %v1917, 4294901760
        %2315 = vmatpush1.msra.mxu0 %v2314
        %2316 = vmatprep.subr.mxu0 0.0
        %2317 = vmatpush1.msra.mxu0 0.0
        %2318 = vmatprep.subr.mxu0 0.0
        %2319 = vmatpush1.msra.mxu0 0.0
        %2320 = vmatprep.subr.mxu0 0.0
        %2321 = vmatpush1.msra.mxu0 0.0
        %2322 = vmatprep.subr.mxu0 0.0
        %2323 = vmatpush1.msra.mxu0 0.0
        %2324 = vmatprep.subr.mxu0 0.0
        %2325 = vmatpush1.msra.mxu0 0.0
        %2326 = vmatprep.subr.mxu0 0.0
        %2327 = vmatpush1.msra.mxu0 0.0
        %2328 = vmatprep.subr.mxu0 0.0
        %2329 = vmatpush1.msra.mxu0 0.0
        %2330 = vmatprep.subr.mxu0 0.0
        %2331 = vmatpush1.msra.mxu0 0.0
        %2332 = vmatprep.subr.mxu0 0.0
        %2333 = vmatpush1.msra.mxu0 0.0
        %2334 = vmatprep.subr.mxu0 0.0
        %2335 = vmatpush1.msra.mxu0 0.0
        %2336 = vmatprep.subr.mxu0 0.0
        %2337 = vmatpush1.msra.mxu0 0.0
        %2338 = vmatprep.subr.mxu0 0.0
        %2339 = vmatpush1.msra.mxu0 0.0
        %2340 = vmatprep.subr.mxu0 0.0
        %2341 = vmatpush1.msra.mxu0 0.0
        %2342 = vmatprep.subr.mxu0 0.0
        %2343 = vmatpush1.msra.mxu0 0.0
        %2344 = vmatprep.subr.mxu0 0.0
        %2345 = vmatpush1.msra.mxu0 0.0
        %2346 = vmatprep.subr.mxu0 0.0
        %2347 = vmatpush1.msra.mxu0 0.0
        %2348 = vmatprep.subr.mxu0 0.0
        %2349 = vmatpush1.msra.mxu0 0.0
        %2350 = vmatprep.subr.mxu0 0.0
        %2351 = vmatpush1.msra.mxu0 0.0
        %2352 = vmatprep.subr.mxu0 0.0
        %2353 = vmatpush1.msra.mxu0 0.0
        %2354 = vmatprep.subr.mxu0 0.0
        %2355 = vmatpush1.msra.mxu0 0.0
        %2356 = vmatprep.subr.mxu0 0.0
        %2357 = vmatpush1.msra.mxu0 0.0
        %2358 = vmatprep.subr.mxu0 0.0
        %2359 = vmatpush1.msra.mxu0 0.0
        %2360 = vmatprep.subr.mxu0 0.0
        %2361 = vmatpush1.msra.mxu0 0.0
        %2362 = vmatprep.subr.mxu0 0.0
        %2363 = vmatpush1.msra.mxu0 0.0
        %2364 = vmatprep.subr.mxu0 0.0
        %2365 = vmatpush1.msra.mxu0 0.0
        %2366 = vmatprep.subr.mxu0 0.0
        %2367 = vmatpush1.msra.mxu0 0.0
        %2368 = vmatprep.subr.mxu0 0.0
        %2369 = vmatpush1.msra.mxu0 0.0
        %2370 = vmatprep.subr.mxu0 0.0
        %2371 = vmatpush1.msra.mxu0 0.0
        %2372 = vmatprep.subr.mxu0 0.0
        %2373 = vmatpush1.msra.mxu0 0.0
        %2374 = vmatprep.subr.mxu0 0.0
        %2375 = vmatpush1.msra.mxu0 0.0
        %2376 = vmatprep.subr.mxu0 0.0
        %2377 = vmatpush1.msra.mxu0 0.0
        %2378 = vmatprep.mubr.f32.mxu0 0.0
        %v2379 = vand.u32 %v1915, 4294901760
        %2380 = vmatmul.mubr.f32.gmra.mrb[0].mxu0 %v2379
        %v2381 = vpop.f32.mrb[0].mxu0
        %v2382 = vadd.f32 %v2308, %v2381
        %v2383 = vpop.f32.mrb[0].mxu0
        %v2384 = vadd.f32 %v2310, %v2383
        %2385 = vdwg.mxu0
        %v2388 = vcombine.low %v2382, %v2384
        %v2390 = vunpack.c.l.s4 1966171168
        %v2391 = vunpack.c.0.s8 %v2390
        %v2392 = vlaneseq
        %v2393 = vshrl.u32 %v2392, 7
        %v2394 = vsub.s32 %v2391, %v2393
        %v2395 = vrot.slane %v2388, %v2394
        %v2397 = vunpack.c.l.s4 1966171168
        %v2398 = vunpack.c.0.s8 %v2397
        %v2399 = vlaneseq
        %v2400 = vshrl.u32 %v2399, 7
        %v2401 = vsub.s32 %v2398, %v2400
        %v2402 = vrot.slane %v2395, %v2401
        %v2404 = vadd.f32 %v1895, %v2402
        %v2405 = vsel %vm255, %v253, 0.0
        %v2406 = vadd.f32 %v848, %v2405
        %v2407 = vsel %vm255, %v2406, 0.0
        %v2408 = vadd.f32 %v1900, %v2407
        %v2409 = vrot.slane %v2408, 4
        %v2410 = vadd.f32 %v2408, %v2409
        %v2411 = vrot.slane %v2410, 2
        %v2412 = vadd.f32 %v2410, %v2411
        %v2413 = vrot.slane %v2412, 1
        %v2414 = vadd.f32 %v2412, %v2413
        %v2415 = vmul.f32 %v2414, 0.00390625
        %s2416 = scalar_lea.vmem %s1, 32
        %v2417 = vld [vmem:[%s2416] sm:$0x77]
        %v2419 = vcombine.high %v2417, %v2417
        %v2421 = vsel %vm255, %v2415, 0
        %v2423 = vsel %vm331, %v2417, 0
        %v2425 = vsel %vm331, %v2419, 0
        %v2427 = vand.u32 %v2425, 4294901760
        %2428 = vmatprep.subr.mxu0 %v2427
        %v2429 = vand.u32 %v2423, 4294901760
        %2430 = vmatpush1.msra.mxu0 %v2429
        %2431 = vmatprep.subr.mxu0 0.0
        %2432 = vmatpush1.msra.mxu0 0.0
        %2433 = vmatprep.subr.mxu0 0.0
        %2434 = vmatpush1.msra.mxu0 0.0
        %2435 = vmatprep.subr.mxu0 0.0
        %2436 = vmatpush1.msra.mxu0 0.0
        %2437 = vmatprep.subr.mxu0 0.0
        %2438 = vmatpush1.msra.mxu0 0.0
        %2439 = vmatprep.subr.mxu0 0.0
        %2440 = vmatpush1.msra.mxu0 0.0
        %2441 = vmatprep.subr.mxu0 0.0
        %2442 = vmatpush1.msra.mxu0 0.0
        %2443 = vmatprep.subr.mxu0 0.0
        %2444 = vmatpush1.msra.mxu0 0.0
        %2445 = vmatprep.subr.mxu0 0.0
        %2446 = vmatpush1.msra.mxu0 0.0
        %2447 = vmatprep.subr.mxu0 0.0
        %2448 = vmatpush1.msra.mxu0 0.0
        %2449 = vmatprep.subr.mxu0 0.0
        %2450 = vmatpush1.msra.mxu0 0.0
        %2451 = vmatprep.subr.mxu0 0.0
        %2452 = vmatpush1.msra.mxu0 0.0
        %2453 = vmatprep.subr.mxu0 0.0
        %2454 = vmatpush1.msra.mxu0 0.0
        %2455 = vmatprep.subr.mxu0 0.0
        %2456 = vmatpush1.msra.mxu0 0.0
        %2457 = vmatprep.subr.mxu0 0.0
        %2458 = vmatpush1.msra.mxu0 0.0
        %2459 = vmatprep.subr.mxu0 0.0
        %2460 = vmatpush1.msra.mxu0 0.0
        %2461 = vmatprep.subr.mxu0 0.0
        %2462 = vmatpush1.msra.mxu0 0.0
        %2463 = vmatprep.subr.mxu0 0.0
        %2464 = vmatpush1.msra.mxu0 0.0
        %2465 = vmatprep.subr.mxu0 0.0
        %2466 = vmatpush1.msra.mxu0 0.0
        %2467 = vmatprep.subr.mxu0 0.0
        %2468 = vmatpush1.msra.mxu0 0.0
        %2469 = vmatprep.subr.mxu0 0.0
        %2470 = vmatpush1.msra.mxu0 0.0
        %2471 = vmatprep.subr.mxu0 0.0
        %2472 = vmatpush1.msra.mxu0 0.0
        %2473 = vmatprep.subr.mxu0 0.0
        %2474 = vmatpush1.msra.mxu0 0.0
        %2475 = vmatprep.subr.mxu0 0.0
        %2476 = vmatpush1.msra.mxu0 0.0
        %2477 = vmatprep.subr.mxu0 0.0
        %2478 = vmatpush1.msra.mxu0 0.0
        %2479 = vmatprep.subr.mxu0 0.0
        %2480 = vmatpush1.msra.mxu0 0.0
        %2481 = vmatprep.subr.mxu0 0.0
        %2482 = vmatpush1.msra.mxu0 0.0
        %2483 = vmatprep.subr.mxu0 0.0
        %2484 = vmatpush1.msra.mxu0 0.0
        %2485 = vmatprep.subr.mxu0 0.0
        %2486 = vmatpush1.msra.mxu0 0.0
        %2487 = vmatprep.subr.mxu0 0.0
        %2488 = vmatpush1.msra.mxu0 0.0
        %2489 = vmatprep.subr.mxu0 0.0
        %2490 = vmatpush1.msra.mxu0 0.0
        %2491 = vmatprep.subr.mxu0 0.0
        %2492 = vmatpush1.msra.mxu0 0.0
        %2493 = vmatprep.mubr.f32.mxu0 0.0
        %v2494 = vand.u32 %v2421, 4294901760
        %v2495 = vsub.f32 %v2421, %v2494
        %v2496 = vand.u32 %v2495, 4294901760
        %v2497 = vsub.f32 %v2495, %v2496
        %v2498 = vand.u32 %v2497, 4294901760
        %2499 = vmatmul.mubr.f32.gmra.mrb[0].mxu0 %v2498
        %v2500 = vpop.f32.mrb[0].mxu0
        %v2501 = vadd.f32 0.0, %v2500
        %v2502 = vpop.f32.mrb[0].mxu0
        %v2503 = vadd.f32 0.0, %v2502
        %2504 = vdwg.mxu0
        %v2505 = vand.u32 %v2425, 4294901760
        %v2506 = vsub.f32 %v2425, %v2505
        %v2507 = vand.u32 %v2506, 4294901760
        %v2508 = vsub.f32 %v2506, %v2507
        %v2509 = vand.u32 %v2508, 4294901760
        %2510 = vmatprep.subr.mxu0 %v2509
        %v2511 = vand.u32 %v2423, 4294901760
        %v2512 = vsub.f32 %v2423, %v2511
        %v2513 = vand.u32 %v2512, 4294901760
        %v2514 = vsub.f32 %v2512, %v2513
        %v2515 = vand.u32 %v2514, 4294901760
        %2516 = vmatpush1.msra.mxu0 %v2515
        %2517 = vmatprep.subr.mxu0 0.0
        %2518 = vmatpush1.msra.mxu0 0.0
        %2519 = vmatprep.subr.mxu0 0.0
        %2520 = vmatpush1.msra.mxu0 0.0
        %2521 = vmatprep.subr.mxu0 0.0
        %2522 = vmatpush1.msra.mxu0 0.0
        %2523 = vmatprep.subr.mxu0 0.0
        %2524 = vmatpush1.msra.mxu0 0.0
        %2525 = vmatprep.subr.mxu0 0.0
        %2526 = vmatpush1.msra.mxu0 0.0
        %2527 = vmatprep.subr.mxu0 0.0
        %2528 = vmatpush1.msra.mxu0 0.0
        %2529 = vmatprep.subr.mxu0 0.0
        %2530 = vmatpush1.msra.mxu0 0.0
        %2531 = vmatprep.subr.mxu0 0.0
        %2532 = vmatpush1.msra.mxu0 0.0
        %2533 = vmatprep.subr.mxu0 0.0
        %2534 = vmatpush1.msra.mxu0 0.0
        %2535 = vmatprep.subr.mxu0 0.0
        %2536 = vmatpush1.msra.mxu0 0.0
        %2537 = vmatprep.subr.mxu0 0.0
        %2538 = vmatpush1.msra.mxu0 0.0
        %2539 = vmatprep.subr.mxu0 0.0
        %2540 = vmatpush1.msra.mxu0 0.0
        %2541 = vmatprep.subr.mxu0 0.0
        %2542 = vmatpush1.msra.mxu0 0.0
        %2543 = vmatprep.subr.mxu0 0.0
        %2544 = vmatpush1.msra.mxu0 0.0
        %2545 = vmatprep.subr.mxu0 0.0
        %2546 = vmatpush1.msra.mxu0 0.0
        %2547 = vmatprep.subr.mxu0 0.0
        %2548 = vmatpush1.msra.mxu0 0.0
        %2549 = vmatprep.subr.mxu0 0.0
        %2550 = vmatpush1.msra.mxu0 0.0
        %2551 = vmatprep.subr.mxu0 0.0
        %2552 = vmatpush1.msra.mxu0 0.0
        %2553 = vmatprep.subr.mxu0 0.0
        %2554 = vmatpush1.msra.mxu0 0.0
        %2555 = vmatprep.subr.mxu0 0.0
        %2556 = vmatpush1.msra.mxu0 0.0
        %2557 = vmatprep.subr.mxu0 0.0
        %2558 = vmatpush1.msra.mxu0 0.0
        %2559 = vmatprep.subr.mxu0 0.0
        %2560 = vmatpush1.msra.mxu0 0.0
        %2561 = vmatprep.subr.mxu0 0.0
        %2562 = vmatpush1.msra.mxu0 0.0
        %2563 = vmatprep.subr.mxu0 0.0
        %2564 = vmatpush1.msra.mxu0 0.0
        %2565 = vmatprep.subr.mxu0 0.0
        %2566 = vmatpush1.msra.mxu0 0.0
        %2567 = vmatprep.subr.mxu0 0.0
        %2568 = vmatpush1.msra.mxu0 0.0
        %2569 = vmatprep.subr.mxu0 0.0
        %2570 = vmatpush1.msra.mxu0 0.0
        %2571 = vmatprep.subr.mxu0 0.0
        %2572 = vmatpush1.msra.mxu0 0.0
        %2573 = vmatprep.subr.mxu0 0.0
        %2574 = vmatpush1.msra.mxu0 0.0
        %2575 = vmatprep.subr.mxu0 0.0
        %2576 = vmatpush1.msra.mxu0 0.0
        %2577 = vmatprep.subr.mxu0 0.0
        %2578 = vmatpush1.msra.mxu0 0.0
        %2579 = vmatprep.mubr.f32.mxu0 0.0
        %v2580 = vand.u32 %v2421, 4294901760
        %2581 = vmatmul.mubr.f32.gmra.mrb[0].mxu0 %v2580
        %v2582 = vpop.f32.mrb[0].mxu0
        %v2583 = vadd.f32 %v2501, %v2582
        %v2584 = vpop.f32.mrb[0].mxu0
        %v2585 = vadd.f32 %v2503, %v2584
        %2586 = vdwg.mxu0
        %v2587 = vand.u32 %v2425, 4294901760
        %v2588 = vsub.f32 %v2425, %v2587
        %2589 = vmatprep.subr.mxu0 %v2588
        %v2590 = vand.u32 %v2423, 4294901760
        %v2591 = vsub.f32 %v2423, %v2590
        %2592 = vmatpush1.msra.mxu0 %v2591
        %2593 = vmatprep.subr.mxu0 0.0
        %2594 = vmatpush1.msra.mxu0 0.0
        %2595 = vmatprep.subr.mxu0 0.0
        %2596 = vmatpush1.msra.mxu0 0.0
        %2597 = vmatprep.subr.mxu0 0.0
        %2598 = vmatpush1.msra.mxu0 0.0
        %2599 = vmatprep.subr.mxu0 0.0
        %2600 = vmatpush1.msra.mxu0 0.0
        %2601 = vmatprep.subr.mxu0 0.0
        %2602 = vmatpush1.msra.mxu0 0.0
        %2603 = vmatprep.subr.mxu0 0.0
        %2604 = vmatpush1.msra.mxu0 0.0
        %2605 = vmatprep.subr.mxu0 0.0
        %2606 = vmatpush1.msra.mxu0 0.0
        %2607 = vmatprep.subr.mxu0 0.0
        %2608 = vmatpush1.msra.mxu0 0.0
        %2609 = vmatprep.subr.mxu0 0.0
        %2610 = vmatpush1.msra.mxu0 0.0
        %2611 = vmatprep.subr.mxu0 0.0
        %2612 = vmatpush1.msra.mxu0 0.0
        %2613 = vmatprep.subr.mxu0 0.0
        %2614 = vmatpush1.msra.mxu0 0.0
        %2615 = vmatprep.subr.mxu0 0.0
        %2616 = vmatpush1.msra.mxu0 0.0
        %2617 = vmatprep.subr.mxu0 0.0
        %2618 = vmatpush1.msra.mxu0 0.0
        %2619 = vmatprep.subr.mxu0 0.0
        %2620 = vmatpush1.msra.mxu0 0.0
        %2621 = vmatprep.subr.mxu0 0.0
        %2622 = vmatpush1.msra.mxu0 0.0
        %2623 = vmatprep.subr.mxu0 0.0
        %2624 = vmatpush1.msra.mxu0 0.0
        %2625 = vmatprep.subr.mxu0 0.0
        %2626 = vmatpush1.msra.mxu0 0.0
        %2627 = vmatprep.subr.mxu0 0.0
        %2628 = vmatpush1.msra.mxu0 0.0
        %2629 = vmatprep.subr.mxu0 0.0
        %2630 = vmatpush1.msra.mxu0 0.0
        %2631 = vmatprep.subr.mxu0 0.0
        %2632 = vmatpush1.msra.mxu0 0.0
        %2633 = vmatprep.subr.mxu0 0.0
        %2634 = vmatpush1.msra.mxu0 0.0
        %2635 = vmatprep.subr.mxu0 0.0
        %2636 = vmatpush1.msra.mxu0 0.0
        %2637 = vmatprep.subr.mxu0 0.0
        %2638 = vmatpush1.msra.mxu0 0.0
        %2639 = vmatprep.subr.mxu0 0.0
        %2640 = vmatpush1.msra.mxu0 0.0
        %2641 = vmatprep.subr.mxu0 0.0
        %2642 = vmatpush1.msra.mxu0 0.0
        %2643 = vmatprep.subr.mxu0 0.0
        %2644 = vmatpush1.msra.mxu0 0.0
        %2645 = vmatprep.subr.mxu0 0.0
        %2646 = vmatpush1.msra.mxu0 0.0
        %2647 = vmatprep.subr.mxu0 0.0
        %2648 = vmatpush1.msra.mxu0 0.0
        %2649 = vmatprep.subr.mxu0 0.0
        %2650 = vmatpush1.msra.mxu0 0.0
        %2651 = vmatprep.subr.mxu0 0.0
        %2652 = vmatpush1.msra.mxu0 0.0
        %2653 = vmatprep.subr.mxu0 0.0
        %2654 = vmatpush1.msra.mxu0 0.0
        %2655 = vmatprep.mubr.f32.mxu0 0.0
        %v2656 = vand.u32 %v2421, 4294901760
        %v2657 = vsub.f32 %v2421, %v2656
        %2658 = vmatmul.mubr.f32.gmra.mrb[0].mxu0 %v2657
        %v2659 = vpop.f32.mrb[0].mxu0
        %v2660 = vadd.f32 %v2583, %v2659
        %v2661 = vpop.f32.mrb[0].mxu0
        %v2662 = vadd.f32 %v2585, %v2661
        %2663 = vdwg.mxu0
        %v2664 = vand.u32 %v2425, 4294901760
        %2665 = vmatprep.subr.mxu0 %v2664
        %v2666 = vand.u32 %v2423, 4294901760
        %2667 = vmatpush1.msra.mxu0 %v2666
        %2668 = vmatprep.subr.mxu0 0.0
        %2669 = vmatpush1.msra.mxu0 0.0
        %2670 = vmatprep.subr.mxu0 0.0
        %2671 = vmatpush1.msra.mxu0 0.0
        %2672 = vmatprep.subr.mxu0 0.0
        %2673 = vmatpush1.msra.mxu0 0.0
        %2674 = vmatprep.subr.mxu0 0.0
        %2675 = vmatpush1.msra.mxu0 0.0
        %2676 = vmatprep.subr.mxu0 0.0
        %2677 = vmatpush1.msra.mxu0 0.0
        %2678 = vmatprep.subr.mxu0 0.0
        %2679 = vmatpush1.msra.mxu0 0.0
        %2680 = vmatprep.subr.mxu0 0.0
        %2681 = vmatpush1.msra.mxu0 0.0
        %2682 = vmatprep.subr.mxu0 0.0
        %2683 = vmatpush1.msra.mxu0 0.0
        %2684 = vmatprep.subr.mxu0 0.0
        %2685 = vmatpush1.msra.mxu0 0.0
        %2686 = vmatprep.subr.mxu0 0.0
        %2687 = vmatpush1.msra.mxu0 0.0
        %2688 = vmatprep.subr.mxu0 0.0
        %2689 = vmatpush1.msra.mxu0 0.0
        %2690 = vmatprep.subr.mxu0 0.0
        %2691 = vmatpush1.msra.mxu0 0.0
        %2692 = vmatprep.subr.mxu0 0.0
        %2693 = vmatpush1.msra.mxu0 0.0
        %2694 = vmatprep.subr.mxu0 0.0
        %2695 = vmatpush1.msra.mxu0 0.0
        %2696 = vmatprep.subr.mxu0 0.0
        %2697 = vmatpush1.msra.mxu0 0.0
        %2698 = vmatprep.subr.mxu0 0.0
        %2699 = vmatpush1.msra.mxu0 0.0
        %2700 = vmatprep.subr.mxu0 0.0
        %2701 = vmatpush1.msra.mxu0 0.0
        %2702 = vmatprep.subr.mxu0 0.0
        %2703 = vmatpush1.msra.mxu0 0.0
        %2704 = vmatprep.subr.mxu0 0.0
        %2705 = vmatpush1.msra.mxu0 0.0
        %2706 = vmatprep.subr.mxu0 0.0
        %2707 = vmatpush1.msra.mxu0 0.0
        %2708 = vmatprep.subr.mxu0 0.0
        %2709 = vmatpush1.msra.mxu0 0.0
        %2710 = vmatprep.subr.mxu0 0.0
        %2711 = vmatpush1.msra.mxu0 0.0
        %2712 = vmatprep.subr.mxu0 0.0
        %2713 = vmatpush1.msra.mxu0 0.0
        %2714 = vmatprep.subr.mxu0 0.0
        %2715 = vmatpush1.msra.mxu0 0.0
        %2716 = vmatprep.subr.mxu0 0.0
        %2717 = vmatpush1.msra.mxu0 0.0
        %2718 = vmatprep.subr.mxu0 0.0
        %2719 = vmatpush1.msra.mxu0 0.0
        %2720 = vmatprep.subr.mxu0 0.0
        %2721 = vmatpush1.msra.mxu0 0.0
        %2722 = vmatprep.subr.mxu0 0.0
        %2723 = vmatpush1.msra.mxu0 0.0
        %2724 = vmatprep.subr.mxu0 0.0
        %2725 = vmatpush1.msra.mxu0 0.0
        %2726 = vmatprep.subr.mxu0 0.0
        %2727 = vmatpush1.msra.mxu0 0.0
        %2728 = vmatprep.subr.mxu0 0.0
        %2729 = vmatpush1.msra.mxu0 0.0
        %2730 = vmatprep.mubr.f32.mxu0 0.0
        %v2731 = vand.u32 %v2421, 4294901760
        %v2732 = vsub.f32 %v2421, %v2731
        %v2733 = vand.u32 %v2732, 4294901760
        %2734 = vmatmul.mubr.f32.gmra.mrb[0].mxu0 %v2733
        %v2735 = vpop.f32.mrb[0].mxu0
        %v2736 = vadd.f32 %v2660, %v2735
        %v2737 = vpop.f32.mrb[0].mxu0
        %v2738 = vadd.f32 %v2662, %v2737
        %2739 = vdwg.mxu0
        %v2740 = vand.u32 %v2425, 4294901760
        %v2741 = vsub.f32 %v2425, %v2740
        %v2742 = vand.u32 %v2741, 4294901760
        %2743 = vmatprep.subr.mxu0 %v2742
        %v2744 = vand.u32 %v2423, 4294901760
        %v2745 = vsub.f32 %v2423, %v2744
        %v2746 = vand.u32 %v2745, 4294901760
        %2747 = vmatpush1.msra.mxu0 %v2746
        %2748 = vmatprep.subr.mxu0 0.0
        %2749 = vmatpush1.msra.mxu0 0.0
        %2750 = vmatprep.subr.mxu0 0.0
        %2751 = vmatpush1.msra.mxu0 0.0
        %2752 = vmatprep.subr.mxu0 0.0
        %2753 = vmatpush1.msra.mxu0 0.0
        %2754 = vmatprep.subr.mxu0 0.0
        %2755 = vmatpush1.msra.mxu0 0.0
        %2756 = vmatprep.subr.mxu0 0.0
        %2757 = vmatpush1.msra.mxu0 0.0
        %2758 = vmatprep.subr.mxu0 0.0
        %2759 = vmatpush1.msra.mxu0 0.0
        %2760 = vmatprep.subr.mxu0 0.0
        %2761 = vmatpush1.msra.mxu0 0.0
        %2762 = vmatprep.subr.mxu0 0.0
        %2763 = vmatpush1.msra.mxu0 0.0
        %2764 = vmatprep.subr.mxu0 0.0
        %2765 = vmatpush1.msra.mxu0 0.0
        %2766 = vmatprep.subr.mxu0 0.0
        %2767 = vmatpush1.msra.mxu0 0.0
        %2768 = vmatprep.subr.mxu0 0.0
        %2769 = vmatpush1.msra.mxu0 0.0
        %2770 = vmatprep.subr.mxu0 0.0
        %2771 = vmatpush1.msra.mxu0 0.0
        %2772 = vmatprep.subr.mxu0 0.0
        %2773 = vmatpush1.msra.mxu0 0.0
        %2774 = vmatprep.subr.mxu0 0.0
        %2775 = vmatpush1.msra.mxu0 0.0
        %2776 = vmatprep.subr.mxu0 0.0
        %2777 = vmatpush1.msra.mxu0 0.0
        %2778 = vmatprep.subr.mxu0 0.0
        %2779 = vmatpush1.msra.mxu0 0.0
        %2780 = vmatprep.subr.mxu0 0.0
        %2781 = vmatpush1.msra.mxu0 0.0
        %2782 = vmatprep.subr.mxu0 0.0
        %2783 = vmatpush1.msra.mxu0 0.0
        %2784 = vmatprep.subr.mxu0 0.0
        %2785 = vmatpush1.msra.mxu0 0.0
        %2786 = vmatprep.subr.mxu0 0.0
        %2787 = vmatpush1.msra.mxu0 0.0
        %2788 = vmatprep.subr.mxu0 0.0
        %2789 = vmatpush1.msra.mxu0 0.0
        %2790 = vmatprep.subr.mxu0 0.0
        %2791 = vmatpush1.msra.mxu0 0.0
        %2792 = vmatprep.subr.mxu0 0.0
        %2793 = vmatpush1.msra.mxu0 0.0
        %2794 = vmatprep.subr.mxu0 0.0
        %2795 = vmatpush1.msra.mxu0 0.0
        %2796 = vmatprep.subr.mxu0 0.0
        %2797 = vmatpush1.msra.mxu0 0.0
        %2798 = vmatprep.subr.mxu0 0.0
        %2799 = vmatpush1.msra.mxu0 0.0
        %2800 = vmatprep.subr.mxu0 0.0
        %2801 = vmatpush1.msra.mxu0 0.0
        %2802 = vmatprep.subr.mxu0 0.0
        %2803 = vmatpush1.msra.mxu0 0.0
        %2804 = vmatprep.subr.mxu0 0.0
        %2805 = vmatpush1.msra.mxu0 0.0
        %2806 = vmatprep.subr.mxu0 0.0
        %2807 = vmatpush1.msra.mxu0 0.0
        %2808 = vmatprep.subr.mxu0 0.0
        %2809 = vmatpush1.msra.mxu0 0.0
        %2810 = vmatprep.mubr.f32.mxu0 0.0
        %v2811 = vand.u32 %v2421, 4294901760
        %2812 = vmatmul.mubr.f32.gmra.mrb[0].mxu0 %v2811
        %v2813 = vpop.f32.mrb[0].mxu0
        %v2814 = vadd.f32 %v2736, %v2813
        %v2815 = vpop.f32.mrb[0].mxu0
        %v2816 = vadd.f32 %v2738, %v2815
        %2817 = vdwg.mxu0
        %v2818 = vand.u32 %v2425, 4294901760
        %2819 = vmatprep.subr.mxu0 %v2818
        %v2820 = vand.u32 %v2423, 4294901760
        %2821 = vmatpush1.msra.mxu0 %v2820
        %2822 = vmatprep.subr.mxu0 0.0
        %2823 = vmatpush1.msra.mxu0 0.0
        %2824 = vmatprep.subr.mxu0 0.0
        %2825 = vmatpush1.msra.mxu0 0.0
        %2826 = vmatprep.subr.mxu0 0.0
        %2827 = vmatpush1.msra.mxu0 0.0
        %2828 = vmatprep.subr.mxu0 0.0
        %2829 = vmatpush1.msra.mxu0 0.0
        %2830 = vmatprep.subr.mxu0 0.0
        %2831 = vmatpush1.msra.mxu0 0.0
        %2832 = vmatprep.subr.mxu0 0.0
        %2833 = vmatpush1.msra.mxu0 0.0
        %2834 = vmatprep.subr.mxu0 0.0
        %2835 = vmatpush1.msra.mxu0 0.0
        %2836 = vmatprep.subr.mxu0 0.0
        %2837 = vmatpush1.msra.mxu0 0.0
        %2838 = vmatprep.subr.mxu0 0.0
        %2839 = vmatpush1.msra.mxu0 0.0
        %2840 = vmatprep.subr.mxu0 0.0
        %2841 = vmatpush1.msra.mxu0 0.0
        %2842 = vmatprep.subr.mxu0 0.0
        %2843 = vmatpush1.msra.mxu0 0.0
        %2844 = vmatprep.subr.mxu0 0.0
        %2845 = vmatpush1.msra.mxu0 0.0
        %2846 = vmatprep.subr.mxu0 0.0
        %2847 = vmatpush1.msra.mxu0 0.0
        %2848 = vmatprep.subr.mxu0 0.0
        %2849 = vmatpush1.msra.mxu0 0.0
        %2850 = vmatprep.subr.mxu0 0.0
        %2851 = vmatpush1.msra.mxu0 0.0
        %2852 = vmatprep.subr.mxu0 0.0
        %2853 = vmatpush1.msra.mxu0 0.0
        %2854 = vmatprep.subr.mxu0 0.0
        %2855 = vmatpush1.msra.mxu0 0.0
        %2856 = vmatprep.subr.mxu0 0.0
        %2857 = vmatpush1.msra.mxu0 0.0
        %2858 = vmatprep.subr.mxu0 0.0
        %2859 = vmatpush1.msra.mxu0 0.0
        %2860 = vmatprep.subr.mxu0 0.0
        %2861 = vmatpush1.msra.mxu0 0.0
        %2862 = vmatprep.subr.mxu0 0.0
        %2863 = vmatpush1.msra.mxu0 0.0
        %2864 = vmatprep.subr.mxu0 0.0
        %2865 = vmatpush1.msra.mxu0 0.0
        %2866 = vmatprep.subr.mxu0 0.0
        %2867 = vmatpush1.msra.mxu0 0.0
        %2868 = vmatprep.subr.mxu0 0.0
        %2869 = vmatpush1.msra.mxu0 0.0
        %2870 = vmatprep.subr.mxu0 0.0
        %2871 = vmatpush1.msra.mxu0 0.0
        %2872 = vmatprep.subr.mxu0 0.0
        %2873 = vmatpush1.msra.mxu0 0.0
        %2874 = vmatprep.subr.mxu0 0.0
        %2875 = vmatpush1.msra.mxu0 0.0
        %2876 = vmatprep.subr.mxu0 0.0
        %2877 = vmatpush1.msra.mxu0 0.0
        %2878 = vmatprep.subr.mxu0 0.0
        %2879 = vmatpush1.msra.mxu0 0.0
        %2880 = vmatprep.subr.mxu0 0.0
        %2881 = vmatpush1.msra.mxu0 0.0
        %2882 = vmatprep.subr.mxu0 0.0
        %2883 = vmatpush1.msra.mxu0 0.0
        %2884 = vmatprep.mubr.f32.mxu0 0.0
        %v2885 = vand.u32 %v2421, 4294901760
        %2886 = vmatmul.mubr.f32.gmra.mrb[0].mxu0 %v2885
        %v2887 = vpop.f32.mrb[0].mxu0
        %v2888 = vadd.f32 %v2814, %v2887
        %v2889 = vpop.f32.mrb[0].mxu0
        %v2890 = vadd.f32 %v2816, %v2889
        %2891 = vdwg.mxu0
        %v2894 = vcombine.low %v2888, %v2890
        %v2896 = vunpack.c.l.s4 1966171168
        %v2897 = vunpack.c.0.s8 %v2896
        %v2898 = vlaneseq
        %v2899 = vshrl.u32 %v2898, 7
        %v2900 = vsub.s32 %v2897, %v2899
        %v2901 = vrot.slane %v2894, %v2900
        %v2903 = vunpack.c.l.s4 1966171168
        %v2904 = vunpack.c.0.s8 %v2903
        %v2905 = vlaneseq
        %v2906 = vshrl.u32 %v2905, 7
        %v2907 = vsub.s32 %v2904, %v2906
        %v2908 = vrot.slane %v2901, %v2907
        %v2910 = vadd.f32 %v2404, %v2908
        %v2911 = vsel %vm1353, %v252, 0.0
        %v2912 = vadd.f32 %v1382, %v2911
        %v2915 = vrot.slane %v2912, 1
        %v2916 = vrot.slane %v2406, 1
        %v2917 = vsel %vm1385, %v2915, %v2916
        %v2920 = vsel %vm255, %v2917, 0.0
        %v2921 = vsel %vm285, %v2916, 0.0
        %v2922 = vadd.f32 %v2920, %v2921
        %v2923 = vrot.slane %v2922, 4
        %v2924 = vadd.f32 %v2922, %v2923
        %v2925 = vrot.slane %v2924, 2
        %v2926 = vadd.f32 %v2924, %v2925
        %v2927 = vrot.slane %v2926, 1
        %v2928 = vadd.f32 %v2926, %v2927
        %v2929 = vmul.f32 %v2928, 0.00390625
        %s2930 = scalar_lea.vmem %s1, 40
        %v2931 = vld [vmem:[%s2930] sm:$0x77]
        %v2933 = vcombine.high %v2931, %v2931
        %v2935 = vsel %vm255, %v2929, 0
        %v2937 = vsel %vm331, %v2931, 0
        %v2939 = vsel %vm331, %v2933, 0
        %v2941 = vand.u32 %v2939, 4294901760
        %2942 = vmatprep.subr.mxu0 %v2941
        %v2943 = vand.u32 %v2937, 4294901760
        %2944 = vmatpush1.msra.mxu0 %v2943
        %2945 = vmatprep.subr.mxu0 0.0
        %2946 = vmatpush1.msra.mxu0 0.0
        %2947 = vmatprep.subr.mxu0 0.0
        %2948 = vmatpush1.msra.mxu0 0.0
        %2949 = vmatprep.subr.mxu0 0.0
        %2950 = vmatpush1.msra.mxu0 0.0
        %2951 = vmatprep.subr.mxu0 0.0
        %2952 = vmatpush1.msra.mxu0 0.0
        %2953 = vmatprep.subr.mxu0 0.0
        %2954 = vmatpush1.msra.mxu0 0.0
        %2955 = vmatprep.subr.mxu0 0.0
        %2956 = vmatpush1.msra.mxu0 0.0
        %2957 = vmatprep.subr.mxu0 0.0
        %2958 = vmatpush1.msra.mxu0 0.0
        %2959 = vmatprep.subr.mxu0 0.0
        %2960 = vmatpush1.msra.mxu0 0.0
        %2961 = vmatprep.subr.mxu0 0.0
        %2962 = vmatpush1.msra.mxu0 0.0
        %2963 = vmatprep.subr.mxu0 0.0
        %2964 = vmatpush1.msra.mxu0 0.0
        %2965 = vmatprep.subr.mxu0 0.0
        %2966 = vmatpush1.msra.mxu0 0.0
        %2967 = vmatprep.subr.mxu0 0.0
        %2968 = vmatpush1.msra.mxu0 0.0
        %2969 = vmatprep.subr.mxu0 0.0
        %2970 = vmatpush1.msra.mxu0 0.0
        %2971 = vmatprep.subr.mxu0 0.0
        %2972 = vmatpush1.msra.mxu0 0.0
        %2973 = vmatprep.subr.mxu0 0.0
        %2974 = vmatpush1.msra.mxu0 0.0
        %2975 = vmatprep.subr.mxu0 0.0
        %2976 = vmatpush1.msra.mxu0 0.0
        %2977 = vmatprep.subr.mxu0 0.0
        %2978 = vmatpush1.msra.mxu0 0.0
        %2979 = vmatprep.subr.mxu0 0.0
        %2980 = vmatpush1.msra.mxu0 0.0
        %2981 = vmatprep.subr.mxu0 0.0
        %2982 = vmatpush1.msra.mxu0 0.0
        %2983 = vmatprep.subr.mxu0 0.0
        %2984 = vmatpush1.msra.mxu0 0.0
        %2985 = vmatprep.subr.mxu0 0.0
        %2986 = vmatpush1.msra.mxu0 0.0
        %2987 = vmatprep.subr.mxu0 0.0
        %2988 = vmatpush1.msra.mxu0 0.0
        %2989 = vmatprep.subr.mxu0 0.0
        %2990 = vmatpush1.msra.mxu0 0.0
        %2991 = vmatprep.subr.mxu0 0.0
        %2992 = vmatpush1.msra.mxu0 0.0
        %2993 = vmatprep.subr.mxu0 0.0
        %2994 = vmatpush1.msra.mxu0 0.0
        %2995 = vmatprep.subr.mxu0 0.0
        %2996 = vmatpush1.msra.mxu0 0.0
        %2997 = vmatprep.subr.mxu0 0.0
        %2998 = vmatpush1.msra.mxu0 0.0
        %2999 = vmatprep.subr.mxu0 0.0
        %3000 = vmatpush1.msra.mxu0 0.0
        %3001 = vmatprep.subr.mxu0 0.0
        %3002 = vmatpush1.msra.mxu0 0.0
        %3003 = vmatprep.subr.mxu0 0.0
        %3004 = vmatpush1.msra.mxu0 0.0
        %3005 = vmatprep.subr.mxu0 0.0
        %3006 = vmatpush1.msra.mxu0 0.0
        %3007 = vmatprep.mubr.f32.mxu0 0.0
        %v3008 = vand.u32 %v2935, 4294901760
        %v3009 = vsub.f32 %v2935, %v3008
        %v3010 = vand.u32 %v3009, 4294901760
        %v3011 = vsub.f32 %v3009, %v3010
        %v3012 = vand.u32 %v3011, 4294901760
        %3013 = vmatmul.mubr.f32.gmra.mrb[0].mxu0 %v3012
        %v3014 = vpop.f32.mrb[0].mxu0
        %v3015 = vadd.f32 0.0, %v3014
        %v3016 = vpop.f32.mrb[0].mxu0
        %v3017 = vadd.f32 0.0, %v3016
        %3018 = vdwg.mxu0
        %v3019 = vand.u32 %v2939, 4294901760
        %v3020 = vsub.f32 %v2939, %v3019
        %v3021 = vand.u32 %v3020, 4294901760
        %v3022 = vsub.f32 %v3020, %v3021
        %v3023 = vand.u32 %v3022, 4294901760
        %3024 = vmatprep.subr.mxu0 %v3023
        %v3025 = vand.u32 %v2937, 4294901760
        %v3026 = vsub.f32 %v2937, %v3025
        %v3027 = vand.u32 %v3026, 4294901760
        %v3028 = vsub.f32 %v3026, %v3027
        %v3029 = vand.u32 %v3028, 4294901760
        %3030 = vmatpush1.msra.mxu0 %v3029
        %3031 = vmatprep.subr.mxu0 0.0
        %3032 = vmatpush1.msra.mxu0 0.0
        %3033 = vmatprep.subr.mxu0 0.0
        %3034 = vmatpush1.msra.mxu0 0.0
        %3035 = vmatprep.subr.mxu0 0.0
        %3036 = vmatpush1.msra.mxu0 0.0
        %3037 = vmatprep.subr.mxu0 0.0
        %3038 = vmatpush1.msra.mxu0 0.0
        %3039 = vmatprep.subr.mxu0 0.0
        %3040 = vmatpush1.msra.mxu0 0.0
        %3041 = vmatprep.subr.mxu0 0.0
        %3042 = vmatpush1.msra.mxu0 0.0
        %3043 = vmatprep.subr.mxu0 0.0
        %3044 = vmatpush1.msra.mxu0 0.0
        %3045 = vmatprep.subr.mxu0 0.0
        %3046 = vmatpush1.msra.mxu0 0.0
        %3047 = vmatprep.subr.mxu0 0.0
        %3048 = vmatpush1.msra.mxu0 0.0
        %3049 = vmatprep.subr.mxu0 0.0
        %3050 = vmatpush1.msra.mxu0 0.0
        %3051 = vmatprep.subr.mxu0 0.0
        %3052 = vmatpush1.msra.mxu0 0.0
        %3053 = vmatprep.subr.mxu0 0.0
        %3054 = vmatpush1.msra.mxu0 0.0
        %3055 = vmatprep.subr.mxu0 0.0
        %3056 = vmatpush1.msra.mxu0 0.0
        %3057 = vmatprep.subr.mxu0 0.0
        %3058 = vmatpush1.msra.mxu0 0.0
        %3059 = vmatprep.subr.mxu0 0.0
        %3060 = vmatpush1.msra.mxu0 0.0
        %3061 = vmatprep.subr.mxu0 0.0
        %3062 = vmatpush1.msra.mxu0 0.0
        %3063 = vmatprep.subr.mxu0 0.0
        %3064 = vmatpush1.msra.mxu0 0.0
        %3065 = vmatprep.subr.mxu0 0.0
        %3066 = vmatpush1.msra.mxu0 0.0
        %3067 = vmatprep.subr.mxu0 0.0
        %3068 = vmatpush1.msra.mxu0 0.0
        %3069 = vmatprep.subr.mxu0 0.0
        %3070 = vmatpush1.msra.mxu0 0.0
        %3071 = vmatprep.subr.mxu0 0.0
        %3072 = vmatpush1.msra.mxu0 0.0
        %3073 = vmatprep.subr.mxu0 0.0
        %3074 = vmatpush1.msra.mxu0 0.0
        %3075 = vmatprep.subr.mxu0 0.0
        %3076 = vmatpush1.msra.mxu0 0.0
        %3077 = vmatprep.subr.mxu0 0.0
        %3078 = vmatpush1.msra.mxu0 0.0
        %3079 = vmatprep.subr.mxu0 0.0
        %3080 = vmatpush1.msra.mxu0 0.0
        %3081 = vmatprep.subr.mxu0 0.0
        %3082 = vmatpush1.msra.mxu0 0.0
        %3083 = vmatprep.subr.mxu0 0.0
        %3084 = vmatpush1.msra.mxu0 0.0
        %3085 = vmatprep.subr.mxu0 0.0
        %3086 = vmatpush1.msra.mxu0 0.0
        %3087 = vmatprep.subr.mxu0 0.0
        %3088 = vmatpush1.msra.mxu0 0.0
        %3089 = vmatprep.subr.mxu0 0.0
        %3090 = vmatpush1.msra.mxu0 0.0
        %3091 = vmatprep.subr.mxu0 0.0
        %3092 = vmatpush1.msra.mxu0 0.0
        %3093 = vmatprep.mubr.f32.mxu0 0.0
        %v3094 = vand.u32 %v2935, 4294901760
        %3095 = vmatmul.mubr.f32.gmra.mrb[0].mxu0 %v3094
        %v3096 = vpop.f32.mrb[0].mxu0
        %v3097 = vadd.f32 %v3015, %v3096
        %v3098 = vpop.f32.mrb[0].mxu0
        %v3099 = vadd.f32 %v3017, %v3098
        %3100 = vdwg.mxu0
        %v3101 = vand.u32 %v2939, 4294901760
        %v3102 = vsub.f32 %v2939, %v3101
        %3103 = vmatprep.subr.mxu0 %v3102
        %v3104 = vand.u32 %v2937, 4294901760
        %v3105 = vsub.f32 %v2937, %v3104
        %3106 = vmatpush1.msra.mxu0 %v3105
        %3107 = vmatprep.subr.mxu0 0.0
        %3108 = vmatpush1.msra.mxu0 0.0
        %3109 = vmatprep.subr.mxu0 0.0
        %3110 = vmatpush1.msra.mxu0 0.0
        %3111 = vmatprep.subr.mxu0 0.0
        %3112 = vmatpush1.msra.mxu0 0.0
        %3113 = vmatprep.subr.mxu0 0.0
        %3114 = vmatpush1.msra.mxu0 0.0
        %3115 = vmatprep.subr.mxu0 0.0
        %3116 = vmatpush1.msra.mxu0 0.0
        %3117 = vmatprep.subr.mxu0 0.0
        %3118 = vmatpush1.msra.mxu0 0.0
        %3119 = vmatprep.subr.mxu0 0.0
        %3120 = vmatpush1.msra.mxu0 0.0
        %3121 = vmatprep.subr.mxu0 0.0
        %3122 = vmatpush1.msra.mxu0 0.0
        %3123 = vmatprep.subr.mxu0 0.0
        %3124 = vmatpush1.msra.mxu0 0.0
        %3125 = vmatprep.subr.mxu0 0.0
        %3126 = vmatpush1.msra.mxu0 0.0
        %3127 = vmatprep.subr.mxu0 0.0
        %3128 = vmatpush1.msra.mxu0 0.0
        %3129 = vmatprep.subr.mxu0 0.0
        %3130 = vmatpush1.msra.mxu0 0.0
        %3131 = vmatprep.subr.mxu0 0.0
        %3132 = vmatpush1.msra.mxu0 0.0
        %3133 = vmatprep.subr.mxu0 0.0
        %3134 = vmatpush1.msra.mxu0 0.0
        %3135 = vmatprep.subr.mxu0 0.0
        %3136 = vmatpush1.msra.mxu0 0.0
        %3137 = vmatprep.subr.mxu0 0.0
        %3138 = vmatpush1.msra.mxu0 0.0
        %3139 = vmatprep.subr.mxu0 0.0
        %3140 = vmatpush1.msra.mxu0 0.0
        %3141 = vmatprep.subr.mxu0 0.0
        %3142 = vmatpush1.msra.mxu0 0.0
        %3143 = vmatprep.subr.mxu0 0.0
        %3144 = vmatpush1.msra.mxu0 0.0
        %3145 = vmatprep.subr.mxu0 0.0
        %3146 = vmatpush1.msra.mxu0 0.0
        %3147 = vmatprep.subr.mxu0 0.0
        %3148 = vmatpush1.msra.mxu0 0.0
        %3149 = vmatprep.subr.mxu0 0.0
        %3150 = vmatpush1.msra.mxu0 0.0
        %3151 = vmatprep.subr.mxu0 0.0
        %3152 = vmatpush1.msra.mxu0 0.0
        %3153 = vmatprep.subr.mxu0 0.0
        %3154 = vmatpush1.msra.mxu0 0.0
        %3155 = vmatprep.subr.mxu0 0.0
        %3156 = vmatpush1.msra.mxu0 0.0
        %3157 = vmatprep.subr.mxu0 0.0
        %3158 = vmatpush1.msra.mxu0 0.0
        %3159 = vmatprep.subr.mxu0 0.0
        %3160 = vmatpush1.msra.mxu0 0.0
        %3161 = vmatprep.subr.mxu0 0.0
        %3162 = vmatpush1.msra.mxu0 0.0
        %3163 = vmatprep.subr.mxu0 0.0
        %3164 = vmatpush1.msra.mxu0 0.0
        %3165 = vmatprep.subr.mxu0 0.0
        %3166 = vmatpush1.msra.mxu0 0.0
        %3167 = vmatprep.subr.mxu0 0.0
        %3168 = vmatpush1.msra.mxu0 0.0
        %3169 = vmatprep.mubr.f32.mxu0 0.0
        %v3170 = vand.u32 %v2935, 4294901760
        %v3171 = vsub.f32 %v2935, %v3170
        %3172 = vmatmul.mubr.f32.gmra.mrb[0].mxu0 %v3171
        %v3173 = vpop.f32.mrb[0].mxu0
        %v3174 = vadd.f32 %v3097, %v3173
        %v3175 = vpop.f32.mrb[0].mxu0
        %v3176 = vadd.f32 %v3099, %v3175
        %3177 = vdwg.mxu0
        %v3178 = vand.u32 %v2939, 4294901760
        %3179 = vmatprep.subr.mxu0 %v3178
        %v3180 = vand.u32 %v2937, 4294901760
        %3181 = vmatpush1.msra.mxu0 %v3180
        %3182 = vmatprep.subr.mxu0 0.0
        %3183 = vmatpush1.msra.mxu0 0.0
        %3184 = vmatprep.subr.mxu0 0.0
        %3185 = vmatpush1.msra.mxu0 0.0
        %3186 = vmatprep.subr.mxu0 0.0
        %3187 = vmatpush1.msra.mxu0 0.0
        %3188 = vmatprep.subr.mxu0 0.0
        %3189 = vmatpush1.msra.mxu0 0.0
        %3190 = vmatprep.subr.mxu0 0.0
        %3191 = vmatpush1.msra.mxu0 0.0
        %3192 = vmatprep.subr.mxu0 0.0
        %3193 = vmatpush1.msra.mxu0 0.0
        %3194 = vmatprep.subr.mxu0 0.0
        %3195 = vmatpush1.msra.mxu0 0.0
        %3196 = vmatprep.subr.mxu0 0.0
        %3197 = vmatpush1.msra.mxu0 0.0
        %3198 = vmatprep.subr.mxu0 0.0
        %3199 = vmatpush1.msra.mxu0 0.0
        %3200 = vmatprep.subr.mxu0 0.0
        %3201 = vmatpush1.msra.mxu0 0.0
        %3202 = vmatprep.subr.mxu0 0.0
        %3203 = vmatpush1.msra.mxu0 0.0
        %3204 = vmatprep.subr.mxu0 0.0
        %3205 = vmatpush1.msra.mxu0 0.0
        %3206 = vmatprep.subr.mxu0 0.0
        %3207 = vmatpush1.msra.mxu0 0.0
        %3208 = vmatprep.subr.mxu0 0.0
        %3209 = vmatpush1.msra.mxu0 0.0
        %3210 = vmatprep.subr.mxu0 0.0
        %3211 = vmatpush1.msra.mxu0 0.0
        %3212 = vmatprep.subr.mxu0 0.0
        %3213 = vmatpush1.msra.mxu0 0.0
        %3214 = vmatprep.subr.mxu0 0.0
        %3215 = vmatpush1.msra.mxu0 0.0
        %3216 = vmatprep.subr.mxu0 0.0
        %3217 = vmatpush1.msra.mxu0 0.0
        %3218 = vmatprep.subr.mxu0 0.0
        %3219 = vmatpush1.msra.mxu0 0.0
        %3220 = vmatprep.subr.mxu0 0.0
        %3221 = vmatpush1.msra.mxu0 0.0
        %3222 = vmatprep.subr.mxu0 0.0
        %3223 = vmatpush1.msra.mxu0 0.0
        %3224 = vmatprep.subr.mxu0 0.0
        %3225 = vmatpush1.msra.mxu0 0.0
        %3226 = vmatprep.subr.mxu0 0.0
        %3227 = vmatpush1.msra.mxu0 0.0
        %3228 = vmatprep.subr.mxu0 0.0
        %3229 = vmatpush1.msra.mxu0 0.0
        %3230 = vmatprep.subr.mxu0 0.0
        %3231 = vmatpush1.msra.mxu0 0.0
        %3232 = vmatprep.subr.mxu0 0.0
        %3233 = vmatpush1.msra.mxu0 0.0
        %3234 = vmatprep.subr.mxu0 0.0
        %3235 = vmatpush1.msra.mxu0 0.0
        %3236 = vmatprep.subr.mxu0 0.0
        %3237 = vmatpush1.msra.mxu0 0.0
        %3238 = vmatprep.subr.mxu0 0.0
        %3239 = vmatpush1.msra.mxu0 0.0
        %3240 = vmatprep.subr.mxu0 0.0
        %3241 = vmatpush1.msra.mxu0 0.0
        %3242 = vmatprep.subr.mxu0 0.0
        %3243 = vmatpush1.msra.mxu0 0.0
        %3244 = vmatprep.mubr.f32.mxu0 0.0
        %v3245 = vand.u32 %v2935, 4294901760
        %v3246 = vsub.f32 %v2935, %v3245
        %v3247 = vand.u32 %v3246, 4294901760
        %3248 = vmatmul.mubr.f32.gmra.mrb[0].mxu0 %v3247
        %v3249 = vpop.f32.mrb[0].mxu0
        %v3250 = vadd.f32 %v3174, %v3249
        %v3251 = vpop.f32.mrb[0].mxu0
        %v3252 = vadd.f32 %v3176, %v3251
        %3253 = vdwg.mxu0
        %v3254 = vand.u32 %v2939, 4294901760
        %v3255 = vsub.f32 %v2939, %v3254
        %v3256 = vand.u32 %v3255, 4294901760
        %3257 = vmatprep.subr.mxu0 %v3256
        %v3258 = vand.u32 %v2937, 4294901760
        %v3259 = vsub.f32 %v2937, %v3258
        %v3260 = vand.u32 %v3259, 4294901760
        %3261 = vmatpush1.msra.mxu0 %v3260
        %3262 = vmatprep.subr.mxu0 0.0
        %3263 = vmatpush1.msra.mxu0 0.0
        %3264 = vmatprep.subr.mxu0 0.0
        %3265 = vmatpush1.msra.mxu0 0.0
        %3266 = vmatprep.subr.mxu0 0.0
        %3267 = vmatpush1.msra.mxu0 0.0
        %3268 = vmatprep.subr.mxu0 0.0
        %3269 = vmatpush1.msra.mxu0 0.0
        %3270 = vmatprep.subr.mxu0 0.0
        %3271 = vmatpush1.msra.mxu0 0.0
        %3272 = vmatprep.subr.mxu0 0.0
        %3273 = vmatpush1.msra.mxu0 0.0
        %3274 = vmatprep.subr.mxu0 0.0
        %3275 = vmatpush1.msra.mxu0 0.0
        %3276 = vmatprep.subr.mxu0 0.0
        %3277 = vmatpush1.msra.mxu0 0.0
        %3278 = vmatprep.subr.mxu0 0.0
        %3279 = vmatpush1.msra.mxu0 0.0
        %3280 = vmatprep.subr.mxu0 0.0
        %3281 = vmatpush1.msra.mxu0 0.0
        %3282 = vmatprep.subr.mxu0 0.0
        %3283 = vmatpush1.msra.mxu0 0.0
        %3284 = vmatprep.subr.mxu0 0.0
        %3285 = vmatpush1.msra.mxu0 0.0
        %3286 = vmatprep.subr.mxu0 0.0
        %3287 = vmatpush1.msra.mxu0 0.0
        %3288 = vmatprep.subr.mxu0 0.0
        %3289 = vmatpush1.msra.mxu0 0.0
        %3290 = vmatprep.subr.mxu0 0.0
        %3291 = vmatpush1.msra.mxu0 0.0
        %3292 = vmatprep.subr.mxu0 0.0
        %3293 = vmatpush1.msra.mxu0 0.0
        %3294 = vmatprep.subr.mxu0 0.0
        %3295 = vmatpush1.msra.mxu0 0.0
        %3296 = vmatprep.subr.mxu0 0.0
        %3297 = vmatpush1.msra.mxu0 0.0
        %3298 = vmatprep.subr.mxu0 0.0
        %3299 = vmatpush1.msra.mxu0 0.0
        %3300 = vmatprep.subr.mxu0 0.0
        %3301 = vmatpush1.msra.mxu0 0.0
        %3302 = vmatprep.subr.mxu0 0.0
        %3303 = vmatpush1.msra.mxu0 0.0
        %3304 = vmatprep.subr.mxu0 0.0
        %3305 = vmatpush1.msra.mxu0 0.0
        %3306 = vmatprep.subr.mxu0 0.0
        %3307 = vmatpush1.msra.mxu0 0.0
        %3308 = vmatprep.subr.mxu0 0.0
        %3309 = vmatpush1.msra.mxu0 0.0
        %3310 = vmatprep.subr.mxu0 0.0
        %3311 = vmatpush1.msra.mxu0 0.0
        %3312 = vmatprep.subr.mxu0 0.0
        %3313 = vmatpush1.msra.mxu0 0.0
        %3314 = vmatprep.subr.mxu0 0.0
        %3315 = vmatpush1.msra.mxu0 0.0
        %3316 = vmatprep.subr.mxu0 0.0
        %3317 = vmatpush1.msra.mxu0 0.0
        %3318 = vmatprep.subr.mxu0 0.0
        %3319 = vmatpush1.msra.mxu0 0.0
        %3320 = vmatprep.subr.mxu0 0.0
        %3321 = vmatpush1.msra.mxu0 0.0
        %3322 = vmatprep.subr.mxu0 0.0
        %3323 = vmatpush1.msra.mxu0 0.0
        %3324 = vmatprep.mubr.f32.mxu0 0.0
        %v3325 = vand.u32 %v2935, 4294901760
        %3326 = vmatmul.mubr.f32.gmra.mrb[0].mxu0 %v3325
        %v3327 = vpop.f32.mrb[0].mxu0
        %v3328 = vadd.f32 %v3250, %v3327
        %v3329 = vpop.f32.mrb[0].mxu0
        %v3330 = vadd.f32 %v3252, %v3329
        %3331 = vdwg.mxu0
        %v3332 = vand.u32 %v2939, 4294901760
        %3333 = vmatprep.subr.mxu0 %v3332
        %v3334 = vand.u32 %v2937, 4294901760
        %3335 = vmatpush1.msra.mxu0 %v3334
        %3336 = vmatprep.subr.mxu0 0.0
        %3337 = vmatpush1.msra.mxu0 0.0
        %3338 = vmatprep.subr.mxu0 0.0
        %3339 = vmatpush1.msra.mxu0 0.0
        %3340 = vmatprep.subr.mxu0 0.0
        %3341 = vmatpush1.msra.mxu0 0.0
        %3342 = vmatprep.subr.mxu0 0.0
        %3343 = vmatpush1.msra.mxu0 0.0
        %3344 = vmatprep.subr.mxu0 0.0
        %3345 = vmatpush1.msra.mxu0 0.0
        %3346 = vmatprep.subr.mxu0 0.0
        %3347 = vmatpush1.msra.mxu0 0.0
        %3348 = vmatprep.subr.mxu0 0.0
        %3349 = vmatpush1.msra.mxu0 0.0
        %3350 = vmatprep.subr.mxu0 0.0
        %3351 = vmatpush1.msra.mxu0 0.0
        %3352 = vmatprep.subr.mxu0 0.0
        %3353 = vmatpush1.msra.mxu0 0.0
        %3354 = vmatprep.subr.mxu0 0.0
        %3355 = vmatpush1.msra.mxu0 0.0
        %3356 = vmatprep.subr.mxu0 0.0
        %3357 = vmatpush1.msra.mxu0 0.0
        %3358 = vmatprep.subr.mxu0 0.0
        %3359 = vmatpush1.msra.mxu0 0.0
        %3360 = vmatprep.subr.mxu0 0.0
        %3361 = vmatpush1.msra.mxu0 0.0
        %3362 = vmatprep.subr.mxu0 0.0
        %3363 = vmatpush1.msra.mxu0 0.0
        %3364 = vmatprep.subr.mxu0 0.0
        %3365 = vmatpush1.msra.mxu0 0.0
        %3366 = vmatprep.subr.mxu0 0.0
        %3367 = vmatpush1.msra.mxu0 0.0
        %3368 = vmatprep.subr.mxu0 0.0
        %3369 = vmatpush1.msra.mxu0 0.0
        %3370 = vmatprep.subr.mxu0 0.0
        %3371 = vmatpush1.msra.mxu0 0.0
        %3372 = vmatprep.subr.mxu0 0.0
        %3373 = vmatpush1.msra.mxu0 0.0
        %3374 = vmatprep.subr.mxu0 0.0
        %3375 = vmatpush1.msra.mxu0 0.0
        %3376 = vmatprep.subr.mxu0 0.0
        %3377 = vmatpush1.msra.mxu0 0.0
        %3378 = vmatprep.subr.mxu0 0.0
        %3379 = vmatpush1.msra.mxu0 0.0
        %3380 = vmatprep.subr.mxu0 0.0
        %3381 = vmatpush1.msra.mxu0 0.0
        %3382 = vmatprep.subr.mxu0 0.0
        %3383 = vmatpush1.msra.mxu0 0.0
        %3384 = vmatprep.subr.mxu0 0.0
        %3385 = vmatpush1.msra.mxu0 0.0
        %3386 = vmatprep.subr.mxu0 0.0
        %3387 = vmatpush1.msra.mxu0 0.0
        %3388 = vmatprep.subr.mxu0 0.0
        %3389 = vmatpush1.msra.mxu0 0.0
        %3390 = vmatprep.subr.mxu0 0.0
        %3391 = vmatpush1.msra.mxu0 0.0
        %3392 = vmatprep.subr.mxu0 0.0
        %3393 = vmatpush1.msra.mxu0 0.0
        %3394 = vmatprep.subr.mxu0 0.0
        %3395 = vmatpush1.msra.mxu0 0.0
        %3396 = vmatprep.subr.mxu0 0.0
        %3397 = vmatpush1.msra.mxu0 0.0
        %3398 = vmatprep.mubr.f32.mxu0 0.0
        %v3399 = vand.u32 %v2935, 4294901760
        %3400 = vmatmul.mubr.f32.gmra.mrb[0].mxu0 %v3399
        %v3401 = vpop.f32.mrb[0].mxu0
        %v3402 = vadd.f32 %v3328, %v3401
        %v3403 = vpop.f32.mrb[0].mxu0
        %v3404 = vadd.f32 %v3330, %v3403
        %3405 = vdwg.mxu0
        %v3408 = vcombine.low %v3402, %v3404
        %v3410 = vunpack.c.l.s4 1966171168
        %v3411 = vunpack.c.0.s8 %v3410
        %v3412 = vlaneseq
        %v3413 = vshrl.u32 %v3412, 7
        %v3414 = vsub.s32 %v3411, %v3413
        %v3415 = vrot.slane %v3408, %v3414
        %v3417 = vunpack.c.l.s4 1966171168
        %v3418 = vunpack.c.0.s8 %v3417
        %v3419 = vlaneseq
        %v3420 = vshrl.u32 %v3419, 7
        %v3421 = vsub.s32 %v3418, %v3420
        %v3422 = vrot.slane %v3415, %v3421
        %v3424 = vadd.f32 %v2910, %v3422
        %v3425 = vadd.f32 %v257, %v259
        %v3426 = vadd.f32 %v3425, %v261
        %v3427 = vadd.f32 %v3426, %v263
        %v3428 = vadd.f32 %v3427, %v265
        %v3429 = vadd.f32 %v3428, %v267
        %v3430 = vadd.f32 %v3429, %v269
        %v3431 = vadd.f32 %v3430, %v271
        %v3432 = vadd.f32 %v3431, %v273
        %v3433 = vadd.f32 %v3432, %v275
        %v3434 = vadd.f32 %v3433, %v277
        %v3435 = vadd.f32 %v3434, %v279
        %v3436 = vadd.f32 %v3435, %v281
        %v3437 = vadd.f32 %v3436, %v283
        %v3438 = vadd.f32 %v3437, %v1896
        %v3439 = vadd.f32 %v287, %v289
        %v3440 = vadd.f32 %v3439, %v291
        %v3441 = vadd.f32 %v3440, %v293
        %v3442 = vadd.f32 %v3441, %v295
        %v3443 = vadd.f32 %v3442, %v297
        %v3444 = vadd.f32 %v3443, %v299
        %v3445 = vadd.f32 %v3444, %v301
        %v3446 = vadd.f32 %v3445, %v303
        %v3447 = vadd.f32 %v3446, %v305
        %v3448 = vadd.f32 %v3447, %v307
        %v3449 = vadd.f32 %v3448, %v309
        %v3450 = vadd.f32 %v3449, %v311
        %v3451 = vadd.f32 %v3450, %v313
        %v3452 = vadd.f32 %v3451, %v1898
        %v3453 = vsel %vm255, %v3438, 0.0
        %v3454 = vsel %vm285, %v3452, 0.0
        %v3455 = vadd.f32 %v3453, %v3454
        %v3456 = vrot.slane %v3455, 4
        %v3457 = vadd.f32 %v3455, %v3456
        %v3458 = vrot.slane %v3457, 2
        %v3459 = vadd.f32 %v3457, %v3458
        %v3460 = vrot.slane %v3459, 1
        %v3461 = vadd.f32 %v3459, %v3460
        %v3462 = vmul.f32 %v3461, 0.00390625
        %s3463 = scalar_lea.vmem %s1, 48
        %v3464 = vld [vmem:[%s3463] sm:$0x77]
        %v3466 = vcombine.high %v3464, %v3464
        %v3468 = vsel %vm255, %v3462, 0
        %v3470 = vsel %vm331, %v3464, 0
        %v3472 = vsel %vm331, %v3466, 0
        %v3474 = vand.u32 %v3472, 4294901760
        %3475 = vmatprep.subr.mxu0 %v3474
        %v3476 = vand.u32 %v3470, 4294901760
        %3477 = vmatpush1.msra.mxu0 %v3476
        %3478 = vmatprep.subr.mxu0 0.0
        %3479 = vmatpush1.msra.mxu0 0.0
        %3480 = vmatprep.subr.mxu0 0.0
        %3481 = vmatpush1.msra.mxu0 0.0
        %3482 = vmatprep.subr.mxu0 0.0
        %3483 = vmatpush1.msra.mxu0 0.0
        %3484 = vmatprep.subr.mxu0 0.0
        %3485 = vmatpush1.msra.mxu0 0.0
        %3486 = vmatprep.subr.mxu0 0.0
        %3487 = vmatpush1.msra.mxu0 0.0
        %3488 = vmatprep.subr.mxu0 0.0
        %3489 = vmatpush1.msra.mxu0 0.0
        %3490 = vmatprep.subr.mxu0 0.0
        %3491 = vmatpush1.msra.mxu0 0.0
        %3492 = vmatprep.subr.mxu0 0.0
        %3493 = vmatpush1.msra.mxu0 0.0
        %3494 = vmatprep.subr.mxu0 0.0
        %3495 = vmatpush1.msra.mxu0 0.0
        %3496 = vmatprep.subr.mxu0 0.0
        %3497 = vmatpush1.msra.mxu0 0.0
        %3498 = vmatprep.subr.mxu0 0.0
        %3499 = vmatpush1.msra.mxu0 0.0
        %3500 = vmatprep.subr.mxu0 0.0
        %3501 = vmatpush1.msra.mxu0 0.0
        %3502 = vmatprep.subr.mxu0 0.0
        %3503 = vmatpush1.msra.mxu0 0.0
        %3504 = vmatprep.subr.mxu0 0.0
        %3505 = vmatpush1.msra.mxu0 0.0
        %3506 = vmatprep.subr.mxu0 0.0
        %3507 = vmatpush1.msra.mxu0 0.0
        %3508 = vmatprep.subr.mxu0 0.0
        %3509 = vmatpush1.msra.mxu0 0.0
        %3510 = vmatprep.subr.mxu0 0.0
        %3511 = vmatpush1.msra.mxu0 0.0
        %3512 = vmatprep.subr.mxu0 0.0
        %3513 = vmatpush1.msra.mxu0 0.0
        %3514 = vmatprep.subr.mxu0 0.0
        %3515 = vmatpush1.msra.mxu0 0.0
        %3516 = vmatprep.subr.mxu0 0.0
        %3517 = vmatpush1.msra.mxu0 0.0
        %3518 = vmatprep.subr.mxu0 0.0
        %3519 = vmatpush1.msra.mxu0 0.0
        %3520 = vmatprep.subr.mxu0 0.0
        %3521 = vmatpush1.msra.mxu0 0.0
        %3522 = vmatprep.subr.mxu0 0.0
        %3523 = vmatpush1.msra.mxu0 0.0
        %3524 = vmatprep.subr.mxu0 0.0
        %3525 = vmatpush1.msra.mxu0 0.0
        %3526 = vmatprep.subr.mxu0 0.0
        %3527 = vmatpush1.msra.mxu0 0.0
        %3528 = vmatprep.subr.mxu0 0.0
        %3529 = vmatpush1.msra.mxu0 0.0
        %3530 = vmatprep.subr.mxu0 0.0
        %3531 = vmatpush1.msra.mxu0 0.0
        %3532 = vmatprep.subr.mxu0 0.0
        %3533 = vmatpush1.msra.mxu0 0.0
        %3534 = vmatprep.subr.mxu0 0.0
        %3535 = vmatpush1.msra.mxu0 0.0
        %3536 = vmatprep.subr.mxu0 0.0
        %3537 = vmatpush1.msra.mxu0 0.0
        %3538 = vmatprep.subr.mxu0 0.0
        %3539 = vmatpush1.msra.mxu0 0.0
        %3540 = vmatprep.mubr.f32.mxu0 0.0
        %v3541 = vand.u32 %v3468, 4294901760
        %v3542 = vsub.f32 %v3468, %v3541
        %v3543 = vand.u32 %v3542, 4294901760
        %v3544 = vsub.f32 %v3542, %v3543
        %v3545 = vand.u32 %v3544, 4294901760
        %3546 = vmatmul.mubr.f32.gmra.mrb[0].mxu0 %v3545
        %v3547 = vpop.f32.mrb[0].mxu0
        %v3548 = vadd.f32 0.0, %v3547
        %v3549 = vpop.f32.mrb[0].mxu0
        %v3550 = vadd.f32 0.0, %v3549
        %3551 = vdwg.mxu0
        %v3552 = vand.u32 %v3472, 4294901760
        %v3553 = vsub.f32 %v3472, %v3552
        %v3554 = vand.u32 %v3553, 4294901760
        %v3555 = vsub.f32 %v3553, %v3554
        %v3556 = vand.u32 %v3555, 4294901760
        %3557 = vmatprep.subr.mxu0 %v3556
        %v3558 = vand.u32 %v3470, 4294901760
        %v3559 = vsub.f32 %v3470, %v3558
        %v3560 = vand.u32 %v3559, 4294901760
        %v3561 = vsub.f32 %v3559, %v3560
        %v3562 = vand.u32 %v3561, 4294901760
        %3563 = vmatpush1.msra.mxu0 %v3562
        %3564 = vmatprep.subr.mxu0 0.0
        %3565 = vmatpush1.msra.mxu0 0.0
        %3566 = vmatprep.subr.mxu0 0.0
        %3567 = vmatpush1.msra.mxu0 0.0
        %3568 = vmatprep.subr.mxu0 0.0
        %3569 = vmatpush1.msra.mxu0 0.0
        %3570 = vmatprep.subr.mxu0 0.0
        %3571 = vmatpush1.msra.mxu0 0.0
        %3572 = vmatprep.subr.mxu0 0.0
        %3573 = vmatpush1.msra.mxu0 0.0
        %3574 = vmatprep.subr.mxu0 0.0
        %3575 = vmatpush1.msra.mxu0 0.0
        %3576 = vmatprep.subr.mxu0 0.0
        %3577 = vmatpush1.msra.mxu0 0.0
        %3578 = vmatprep.subr.mxu0 0.0
        %3579 = vmatpush1.msra.mxu0 0.0
        %3580 = vmatprep.subr.mxu0 0.0
        %3581 = vmatpush1.msra.mxu0 0.0
        %3582 = vmatprep.subr.mxu0 0.0
        %3583 = vmatpush1.msra.mxu0 0.0
        %3584 = vmatprep.subr.mxu0 0.0
        %3585 = vmatpush1.msra.mxu0 0.0
        %3586 = vmatprep.subr.mxu0 0.0
        %3587 = vmatpush1.msra.mxu0 0.0
        %3588 = vmatprep.subr.mxu0 0.0
        %3589 = vmatpush1.msra.mxu0 0.0
        %3590 = vmatprep.subr.mxu0 0.0
        %3591 = vmatpush1.msra.mxu0 0.0
        %3592 = vmatprep.subr.mxu0 0.0
        %3593 = vmatpush1.msra.mxu0 0.0
        %3594 = vmatprep.subr.mxu0 0.0
        %3595 = vmatpush1.msra.mxu0 0.0
        %3596 = vmatprep.subr.mxu0 0.0
        %3597 = vmatpush1.msra.mxu0 0.0
        %3598 = vmatprep.subr.mxu0 0.0
        %3599 = vmatpush1.msra.mxu0 0.0
        %3600 = vmatprep.subr.mxu0 0.0
        %3601 = vmatpush1.msra.mxu0 0.0
        %3602 = vmatprep.subr.mxu0 0.0
        %3603 = vmatpush1.msra.mxu0 0.0
        %3604 = vmatprep.subr.mxu0 0.0
        %3605 = vmatpush1.msra.mxu0 0.0
        %3606 = vmatprep.subr.mxu0 0.0
        %3607 = vmatpush1.msra.mxu0 0.0
        %3608 = vmatprep.subr.mxu0 0.0
        %3609 = vmatpush1.msra.mxu0 0.0
        %3610 = vmatprep.subr.mxu0 0.0
        %3611 = vmatpush1.msra.mxu0 0.0
        %3612 = vmatprep.subr.mxu0 0.0
        %3613 = vmatpush1.msra.mxu0 0.0
        %3614 = vmatprep.subr.mxu0 0.0
        %3615 = vmatpush1.msra.mxu0 0.0
        %3616 = vmatprep.subr.mxu0 0.0
        %3617 = vmatpush1.msra.mxu0 0.0
        %3618 = vmatprep.subr.mxu0 0.0
        %3619 = vmatpush1.msra.mxu0 0.0
        %3620 = vmatprep.subr.mxu0 0.0
        %3621 = vmatpush1.msra.mxu0 0.0
        %3622 = vmatprep.subr.mxu0 0.0
        %3623 = vmatpush1.msra.mxu0 0.0
        %3624 = vmatprep.subr.mxu0 0.0
        %3625 = vmatpush1.msra.mxu0 0.0
        %3626 = vmatprep.mubr.f32.mxu0 0.0
        %v3627 = vand.u32 %v3468, 4294901760
        %3628 = vmatmul.mubr.f32.gmra.mrb[0].mxu0 %v3627
        %v3629 = vpop.f32.mrb[0].mxu0
        %v3630 = vadd.f32 %v3548, %v3629
        %v3631 = vpop.f32.mrb[0].mxu0
        %v3632 = vadd.f32 %v3550, %v3631
        %3633 = vdwg.mxu0
        %v3634 = vand.u32 %v3472, 4294901760
        %v3635 = vsub.f32 %v3472, %v3634
        %3636 = vmatprep.subr.mxu0 %v3635
        %v3637 = vand.u32 %v3470, 4294901760
        %v3638 = vsub.f32 %v3470, %v3637
        %3639 = vmatpush1.msra.mxu0 %v3638
        %3640 = vmatprep.subr.mxu0 0.0
        %3641 = vmatpush1.msra.mxu0 0.0
        %3642 = vmatprep.subr.mxu0 0.0
        %3643 = vmatpush1.msra.mxu0 0.0
        %3644 = vmatprep.subr.mxu0 0.0
        %3645 = vmatpush1.msra.mxu0 0.0
        %3646 = vmatprep.subr.mxu0 0.0
        %3647 = vmatpush1.msra.mxu0 0.0
        %3648 = vmatprep.subr.mxu0 0.0
        %3649 = vmatpush1.msra.mxu0 0.0
        %3650 = vmatprep.subr.mxu0 0.0
        %3651 = vmatpush1.msra.mxu0 0.0
        %3652 = vmatprep.subr.mxu0 0.0
        %3653 = vmatpush1.msra.mxu0 0.0
        %3654 = vmatprep.subr.mxu0 0.0
        %3655 = vmatpush1.msra.mxu0 0.0
        %3656 = vmatprep.subr.mxu0 0.0
        %3657 = vmatpush1.msra.mxu0 0.0
        %3658 = vmatprep.subr.mxu0 0.0
        %3659 = vmatpush1.msra.mxu0 0.0
        %3660 = vmatprep.subr.mxu0 0.0
        %3661 = vmatpush1.msra.mxu0 0.0
        %3662 = vmatprep.subr.mxu0 0.0
        %3663 = vmatpush1.msra.mxu0 0.0
        %3664 = vmatprep.subr.mxu0 0.0
        %3665 = vmatpush1.msra.mxu0 0.0
        %3666 = vmatprep.subr.mxu0 0.0
        %3667 = vmatpush1.msra.mxu0 0.0
        %3668 = vmatprep.subr.mxu0 0.0
        %3669 = vmatpush1.msra.mxu0 0.0
        %3670 = vmatprep.subr.mxu0 0.0
        %3671 = vmatpush1.msra.mxu0 0.0
        %3672 = vmatprep.subr.mxu0 0.0
        %3673 = vmatpush1.msra.mxu0 0.0
        %3674 = vmatprep.subr.mxu0 0.0
        %3675 = vmatpush1.msra.mxu0 0.0
        %3676 = vmatprep.subr.mxu0 0.0
        %3677 = vmatpush1.msra.mxu0 0.0
        %3678 = vmatprep.subr.mxu0 0.0
        %3679 = vmatpush1.msra.mxu0 0.0
        %3680 = vmatprep.subr.mxu0 0.0
        %3681 = vmatpush1.msra.mxu0 0.0
        %3682 = vmatprep.subr.mxu0 0.0
        %3683 = vmatpush1.msra.mxu0 0.0
        %3684 = vmatprep.subr.mxu0 0.0
        %3685 = vmatpush1.msra.mxu0 0.0
        %3686 = vmatprep.subr.mxu0 0.0
        %3687 = vmatpush1.msra.mxu0 0.0
        %3688 = vmatprep.subr.mxu0 0.0
        %3689 = vmatpush1.msra.mxu0 0.0
        %3690 = vmatprep.subr.mxu0 0.0
        %3691 = vmatpush1.msra.mxu0 0.0
        %3692 = vmatprep.subr.mxu0 0.0
        %3693 = vmatpush1.msra.mxu0 0.0
        %3694 = vmatprep.subr.mxu0 0.0
        %3695 = vmatpush1.msra.mxu0 0.0
        %3696 = vmatprep.subr.mxu0 0.0
        %3697 = vmatpush1.msra.mxu0 0.0
        %3698 = vmatprep.subr.mxu0 0.0
        %3699 = vmatpush1.msra.mxu0 0.0
        %3700 = vmatprep.subr.mxu0 0.0
        %3701 = vmatpush1.msra.mxu0 0.0
        %3702 = vmatprep.mubr.f32.mxu0 0.0
        %v3703 = vand.u32 %v3468, 4294901760
        %v3704 = vsub.f32 %v3468, %v3703
        %3705 = vmatmul.mubr.f32.gmra.mrb[0].mxu0 %v3704
        %v3706 = vpop.f32.mrb[0].mxu0
        %v3707 = vadd.f32 %v3630, %v3706
        %v3708 = vpop.f32.mrb[0].mxu0
        %v3709 = vadd.f32 %v3632, %v3708
        %3710 = vdwg.mxu0
        %v3711 = vand.u32 %v3472, 4294901760
        %3712 = vmatprep.subr.mxu0 %v3711
        %v3713 = vand.u32 %v3470, 4294901760
        %3714 = vmatpush1.msra.mxu0 %v3713
        %3715 = vmatprep.subr.mxu0 0.0
        %3716 = vmatpush1.msra.mxu0 0.0
        %3717 = vmatprep.subr.mxu0 0.0
        %3718 = vmatpush1.msra.mxu0 0.0
        %3719 = vmatprep.subr.mxu0 0.0
        %3720 = vmatpush1.msra.mxu0 0.0
        %3721 = vmatprep.subr.mxu0 0.0
        %3722 = vmatpush1.msra.mxu0 0.0
        %3723 = vmatprep.subr.mxu0 0.0
        %3724 = vmatpush1.msra.mxu0 0.0
        %3725 = vmatprep.subr.mxu0 0.0
        %3726 = vmatpush1.msra.mxu0 0.0
        %3727 = vmatprep.subr.mxu0 0.0
        %3728 = vmatpush1.msra.mxu0 0.0
        %3729 = vmatprep.subr.mxu0 0.0
        %3730 = vmatpush1.msra.mxu0 0.0
        %3731 = vmatprep.subr.mxu0 0.0
        %3732 = vmatpush1.msra.mxu0 0.0
        %3733 = vmatprep.subr.mxu0 0.0
        %3734 = vmatpush1.msra.mxu0 0.0
        %3735 = vmatprep.subr.mxu0 0.0
        %3736 = vmatpush1.msra.mxu0 0.0
        %3737 = vmatprep.subr.mxu0 0.0
        %3738 = vmatpush1.msra.mxu0 0.0
        %3739 = vmatprep.subr.mxu0 0.0
        %3740 = vmatpush1.msra.mxu0 0.0
        %3741 = vmatprep.subr.mxu0 0.0
        %3742 = vmatpush1.msra.mxu0 0.0
        %3743 = vmatprep.subr.mxu0 0.0
        %3744 = vmatpush1.msra.mxu0 0.0
        %3745 = vmatprep.subr.mxu0 0.0
        %3746 = vmatpush1.msra.mxu0 0.0
        %3747 = vmatprep.subr.mxu0 0.0
        %3748 = vmatpush1.msra.mxu0 0.0
        %3749 = vmatprep.subr.mxu0 0.0
        %3750 = vmatpush1.msra.mxu0 0.0
        %3751 = vmatprep.subr.mxu0 0.0
        %3752 = vmatpush1.msra.mxu0 0.0
        %3753 = vmatprep.subr.mxu0 0.0
        %3754 = vmatpush1.msra.mxu0 0.0
        %3755 = vmatprep.subr.mxu0 0.0
        %3756 = vmatpush1.msra.mxu0 0.0
        %3757 = vmatprep.subr.mxu0 0.0
        %3758 = vmatpush1.msra.mxu0 0.0
        %3759 = vmatprep.subr.mxu0 0.0
        %3760 = vmatpush1.msra.mxu0 0.0
        %3761 = vmatprep.subr.mxu0 0.0
        %3762 = vmatpush1.msra.mxu0 0.0
        %3763 = vmatprep.subr.mxu0 0.0
        %3764 = vmatpush1.msra.mxu0 0.0
        %3765 = vmatprep.subr.mxu0 0.0
        %3766 = vmatpush1.msra.mxu0 0.0
        %3767 = vmatprep.subr.mxu0 0.0
        %3768 = vmatpush1.msra.mxu0 0.0
        %3769 = vmatprep.subr.mxu0 0.0
        %3770 = vmatpush1.msra.mxu0 0.0
        %3771 = vmatprep.subr.mxu0 0.0
        %3772 = vmatpush1.msra.mxu0 0.0
        %3773 = vmatprep.subr.mxu0 0.0
        %3774 = vmatpush1.msra.mxu0 0.0
        %3775 = vmatprep.subr.mxu0 0.0
        %3776 = vmatpush1.msra.mxu0 0.0
        %3777 = vmatprep.mubr.f32.mxu0 0.0
        %v3778 = vand.u32 %v3468, 4294901760
        %v3779 = vsub.f32 %v3468, %v3778
        %v3780 = vand.u32 %v3779, 4294901760
        %3781 = vmatmul.mubr.f32.gmra.mrb[0].mxu0 %v3780
        %v3782 = vpop.f32.mrb[0].mxu0
        %v3783 = vadd.f32 %v3707, %v3782
        %v3784 = vpop.f32.mrb[0].mxu0
        %v3785 = vadd.f32 %v3709, %v3784
        %3786 = vdwg.mxu0
        %v3787 = vand.u32 %v3472, 4294901760
        %v3788 = vsub.f32 %v3472, %v3787
        %v3789 = vand.u32 %v3788, 4294901760
        %3790 = vmatprep.subr.mxu0 %v3789
        %v3791 = vand.u32 %v3470, 4294901760
        %v3792 = vsub.f32 %v3470, %v3791
        %v3793 = vand.u32 %v3792, 4294901760
        %3794 = vmatpush1.msra.mxu0 %v3793
        %3795 = vmatprep.subr.mxu0 0.0
        %3796 = vmatpush1.msra.mxu0 0.0
        %3797 = vmatprep.subr.mxu0 0.0
        %3798 = vmatpush1.msra.mxu0 0.0
        %3799 = vmatprep.subr.mxu0 0.0
        %3800 = vmatpush1.msra.mxu0 0.0
        %3801 = vmatprep.subr.mxu0 0.0
        %3802 = vmatpush1.msra.mxu0 0.0
        %3803 = vmatprep.subr.mxu0 0.0
        %3804 = vmatpush1.msra.mxu0 0.0
        %3805 = vmatprep.subr.mxu0 0.0
        %3806 = vmatpush1.msra.mxu0 0.0
        %3807 = vmatprep.subr.mxu0 0.0
        %3808 = vmatpush1.msra.mxu0 0.0
        %3809 = vmatprep.subr.mxu0 0.0
        %3810 = vmatpush1.msra.mxu0 0.0
        %3811 = vmatprep.subr.mxu0 0.0
        %3812 = vmatpush1.msra.mxu0 0.0
        %3813 = vmatprep.subr.mxu0 0.0
        %3814 = vmatpush1.msra.mxu0 0.0
        %3815 = vmatprep.subr.mxu0 0.0
        %3816 = vmatpush1.msra.mxu0 0.0
        %3817 = vmatprep.subr.mxu0 0.0
        %3818 = vmatpush1.msra.mxu0 0.0
        %3819 = vmatprep.subr.mxu0 0.0
        %3820 = vmatpush1.msra.mxu0 0.0
        %3821 = vmatprep.subr.mxu0 0.0
        %3822 = vmatpush1.msra.mxu0 0.0
        %3823 = vmatprep.subr.mxu0 0.0
        %3824 = vmatpush1.msra.mxu0 0.0
        %3825 = vmatprep.subr.mxu0 0.0
        %3826 = vmatpush1.msra.mxu0 0.0
        %3827 = vmatprep.subr.mxu0 0.0
        %3828 = vmatpush1.msra.mxu0 0.0
        %3829 = vmatprep.subr.mxu0 0.0
        %3830 = vmatpush1.msra.mxu0 0.0
        %3831 = vmatprep.subr.mxu0 0.0
        %3832 = vmatpush1.msra.mxu0 0.0
        %3833 = vmatprep.subr.mxu0 0.0
        %3834 = vmatpush1.msra.mxu0 0.0
        %3835 = vmatprep.subr.mxu0 0.0
        %3836 = vmatpush1.msra.mxu0 0.0
        %3837 = vmatprep.subr.mxu0 0.0
        %3838 = vmatpush1.msra.mxu0 0.0
        %3839 = vmatprep.subr.mxu0 0.0
        %3840 = vmatpush1.msra.mxu0 0.0
        %3841 = vmatprep.subr.mxu0 0.0
        %3842 = vmatpush1.msra.mxu0 0.0
        %3843 = vmatprep.subr.mxu0 0.0
        %3844 = vmatpush1.msra.mxu0 0.0
        %3845 = vmatprep.subr.mxu0 0.0
        %3846 = vmatpush1.msra.mxu0 0.0
        %3847 = vmatprep.subr.mxu0 0.0
        %3848 = vmatpush1.msra.mxu0 0.0
        %3849 = vmatprep.subr.mxu0 0.0
        %3850 = vmatpush1.msra.mxu0 0.0
        %3851 = vmatprep.subr.mxu0 0.0
        %3852 = vmatpush1.msra.mxu0 0.0
        %3853 = vmatprep.subr.mxu0 0.0
        %3854 = vmatpush1.msra.mxu0 0.0
        %3855 = vmatprep.subr.mxu0 0.0
        %3856 = vmatpush1.msra.mxu0 0.0
        %3857 = vmatprep.mubr.f32.mxu0 0.0
        %v3858 = vand.u32 %v3468, 4294901760
        %3859 = vmatmul.mubr.f32.gmra.mrb[0].mxu0 %v3858
        %v3860 = vpop.f32.mrb[0].mxu0
        %v3861 = vadd.f32 %v3783, %v3860
        %v3862 = vpop.f32.mrb[0].mxu0
        %v3863 = vadd.f32 %v3785, %v3862
        %3864 = vdwg.mxu0
        %v3865 = vand.u32 %v3472, 4294901760
        %3866 = vmatprep.subr.mxu0 %v3865
        %v3867 = vand.u32 %v3470, 4294901760
        %3868 = vmatpush1.msra.mxu0 %v3867
        %3869 = vmatprep.subr.mxu0 0.0
        %3870 = vmatpush1.msra.mxu0 0.0
        %3871 = vmatprep.subr.mxu0 0.0
        %3872 = vmatpush1.msra.mxu0 0.0
        %3873 = vmatprep.subr.mxu0 0.0
        %3874 = vmatpush1.msra.mxu0 0.0
        %3875 = vmatprep.subr.mxu0 0.0
        %3876 = vmatpush1.msra.mxu0 0.0
        %3877 = vmatprep.subr.mxu0 0.0
        %3878 = vmatpush1.msra.mxu0 0.0
        %3879 = vmatprep.subr.mxu0 0.0
        %3880 = vmatpush1.msra.mxu0 0.0
        %3881 = vmatprep.subr.mxu0 0.0
        %3882 = vmatpush1.msra.mxu0 0.0
        %3883 = vmatprep.subr.mxu0 0.0
        %3884 = vmatpush1.msra.mxu0 0.0
        %3885 = vmatprep.subr.mxu0 0.0
        %3886 = vmatpush1.msra.mxu0 0.0
        %3887 = vmatprep.subr.mxu0 0.0
        %3888 = vmatpush1.msra.mxu0 0.0
        %3889 = vmatprep.subr.mxu0 0.0
        %3890 = vmatpush1.msra.mxu0 0.0
        %3891 = vmatprep.subr.mxu0 0.0
        %3892 = vmatpush1.msra.mxu0 0.0
        %3893 = vmatprep.subr.mxu0 0.0
        %3894 = vmatpush1.msra.mxu0 0.0
        %3895 = vmatprep.subr.mxu0 0.0
        %3896 = vmatpush1.msra.mxu0 0.0
        %3897 = vmatprep.subr.mxu0 0.0
        %3898 = vmatpush1.msra.mxu0 0.0
        %3899 = vmatprep.subr.mxu0 0.0
        %3900 = vmatpush1.msra.mxu0 0.0
        %3901 = vmatprep.subr.mxu0 0.0
        %3902 = vmatpush1.msra.mxu0 0.0
        %3903 = vmatprep.subr.mxu0 0.0
        %3904 = vmatpush1.msra.mxu0 0.0
        %3905 = vmatprep.subr.mxu0 0.0
        %3906 = vmatpush1.msra.mxu0 0.0
        %3907 = vmatprep.subr.mxu0 0.0
        %3908 = vmatpush1.msra.mxu0 0.0
        %3909 = vmatprep.subr.mxu0 0.0
        %3910 = vmatpush1.msra.mxu0 0.0
        %3911 = vmatprep.subr.mxu0 0.0
        %3912 = vmatpush1.msra.mxu0 0.0
        %3913 = vmatprep.subr.mxu0 0.0
        %3914 = vmatpush1.msra.mxu0 0.0
        %3915 = vmatprep.subr.mxu0 0.0
        %3916 = vmatpush1.msra.mxu0 0.0
        %3917 = vmatprep.subr.mxu0 0.0
        %3918 = vmatpush1.msra.mxu0 0.0
        %3919 = vmatprep.subr.mxu0 0.0
        %3920 = vmatpush1.msra.mxu0 0.0
        %3921 = vmatprep.subr.mxu0 0.0
        %3922 = vmatpush1.msra.mxu0 0.0
        %3923 = vmatprep.subr.mxu0 0.0
        %3924 = vmatpush1.msra.mxu0 0.0
        %3925 = vmatprep.subr.mxu0 0.0
        %3926 = vmatpush1.msra.mxu0 0.0
        %3927 = vmatprep.subr.mxu0 0.0
        %3928 = vmatpush1.msra.mxu0 0.0
        %3929 = vmatprep.subr.mxu0 0.0
        %3930 = vmatpush1.msra.mxu0 0.0
        %3931 = vmatprep.mubr.f32.mxu0 0.0
        %v3932 = vand.u32 %v3468, 4294901760
        %3933 = vmatmul.mubr.f32.gmra.mrb[0].mxu0 %v3932
        %v3934 = vpop.f32.mrb[0].mxu0
        %v3935 = vadd.f32 %v3861, %v3934
        %v3936 = vpop.f32.mrb[0].mxu0
        %v3937 = vadd.f32 %v3863, %v3936
        %3938 = vdwg.mxu0
        %v3941 = vcombine.low %v3935, %v3937
        %v3943 = vunpack.c.l.s4 1966171168
        %v3944 = vunpack.c.0.s8 %v3943
        %v3945 = vlaneseq
        %v3946 = vshrl.u32 %v3945, 7
        %v3947 = vsub.s32 %v3944, %v3946
        %v3948 = vrot.slane %v3941, %v3947
        %v3950 = vunpack.c.l.s4 1966171168
        %v3951 = vunpack.c.0.s8 %v3950
        %v3952 = vlaneseq
        %v3953 = vshrl.u32 %v3952, 7
        %v3954 = vsub.s32 %v3951, %v3953
        %v3955 = vrot.slane %v3948, %v3954
        %v3957 = vadd.f32 %v3424, %v3955
        %v3958 = vadd.f32 %v821, %v823
        %v3959 = vadd.f32 %v3958, %v825
        %v3960 = vadd.f32 %v3959, %v827
        %v3961 = vadd.f32 %v3960, %v829
        %v3962 = vadd.f32 %v3961, %v831
        %v3963 = vadd.f32 %v3962, %v833
        %v3964 = vadd.f32 %v3963, %v835
        %v3965 = vadd.f32 %v3964, %v837
        %v3966 = vadd.f32 %v3965, %v839
        %v3967 = vadd.f32 %v3966, %v841
        %v3968 = vadd.f32 %v3967, %v843
        %v3969 = vadd.f32 %v3968, %v845
        %v3970 = vadd.f32 %v3969, %v847
        %v3971 = vadd.f32 %v3970, %v2405
        %v3972 = vsel %vm255, %v3971, 0.0
        %v3973 = vadd.f32 %v3453, %v3972
        %v3974 = vrot.slane %v3973, 4
        %v3975 = vadd.f32 %v3973, %v3974
        %v3976 = vrot.slane %v3975, 2
        %v3977 = vadd.f32 %v3975, %v3976
        %v3978 = vrot.slane %v3977, 1
        %v3979 = vadd.f32 %v3977, %v3978
        %v3980 = vmul.f32 %v3979, 0.00390625
        %s3981 = scalar_lea.vmem %s1, 56
        %v3982 = vld [vmem:[%s3981] sm:$0x77]
        %v3984 = vcombine.high %v3982, %v3982
        %v3986 = vsel %vm255, %v3980, 0
        %v3988 = vsel %vm331, %v3982, 0
        %v3990 = vsel %vm331, %v3984, 0
        %v3992 = vand.u32 %v3990, 4294901760
        %3993 = vmatprep.subr.mxu0 %v3992
        %v3994 = vand.u32 %v3988, 4294901760
        %3995 = vmatpush1.msra.mxu0 %v3994
        %3996 = vmatprep.subr.mxu0 0.0
        %3997 = vmatpush1.msra.mxu0 0.0
        %3998 = vmatprep.subr.mxu0 0.0
        %3999 = vmatpush1.msra.mxu0 0.0
        %4000 = vmatprep.subr.mxu0 0.0
        %4001 = vmatpush1.msra.mxu0 0.0
        %4002 = vmatprep.subr.mxu0 0.0
        %4003 = vmatpush1.msra.mxu0 0.0
        %4004 = vmatprep.subr.mxu0 0.0
        %4005 = vmatpush1.msra.mxu0 0.0
        %4006 = vmatprep.subr.mxu0 0.0
        %4007 = vmatpush1.msra.mxu0 0.0
        %4008 = vmatprep.subr.mxu0 0.0
        %4009 = vmatpush1.msra.mxu0 0.0
        %4010 = vmatprep.subr.mxu0 0.0
        %4011 = vmatpush1.msra.mxu0 0.0
        %4012 = vmatprep.subr.mxu0 0.0
        %4013 = vmatpush1.msra.mxu0 0.0
        %4014 = vmatprep.subr.mxu0 0.0
        %4015 = vmatpush1.msra.mxu0 0.0
        %4016 = vmatprep.subr.mxu0 0.0
        %4017 = vmatpush1.msra.mxu0 0.0
        %4018 = vmatprep.subr.mxu0 0.0
        %4019 = vmatpush1.msra.mxu0 0.0
        %4020 = vmatprep.subr.mxu0 0.0
        %4021 = vmatpush1.msra.mxu0 0.0
        %4022 = vmatprep.subr.mxu0 0.0
        %4023 = vmatpush1.msra.mxu0 0.0
        %4024 = vmatprep.subr.mxu0 0.0
        %4025 = vmatpush1.msra.mxu0 0.0
        %4026 = vmatprep.subr.mxu0 0.0
        %4027 = vmatpush1.msra.mxu0 0.0
        %4028 = vmatprep.subr.mxu0 0.0
        %4029 = vmatpush1.msra.mxu0 0.0
        %4030 = vmatprep.subr.mxu0 0.0
        %4031 = vmatpush1.msra.mxu0 0.0
        %4032 = vmatprep.subr.mxu0 0.0
        %4033 = vmatpush1.msra.mxu0 0.0
        %4034 = vmatprep.subr.mxu0 0.0
        %4035 = vmatpush1.msra.mxu0 0.0
        %4036 = vmatprep.subr.mxu0 0.0
        %4037 = vmatpush1.msra.mxu0 0.0
        %4038 = vmatprep.subr.mxu0 0.0
        %4039 = vmatpush1.msra.mxu0 0.0
        %4040 = vmatprep.subr.mxu0 0.0
        %4041 = vmatpush1.msra.mxu0 0.0
        %4042 = vmatprep.subr.mxu0 0.0
        %4043 = vmatpush1.msra.mxu0 0.0
        %4044 = vmatprep.subr.mxu0 0.0
        %4045 = vmatpush1.msra.mxu0 0.0
        %4046 = vmatprep.subr.mxu0 0.0
        %4047 = vmatpush1.msra.mxu0 0.0
        %4048 = vmatprep.subr.mxu0 0.0
        %4049 = vmatpush1.msra.mxu0 0.0
        %4050 = vmatprep.subr.mxu0 0.0
        %4051 = vmatpush1.msra.mxu0 0.0
        %4052 = vmatprep.subr.mxu0 0.0
        %4053 = vmatpush1.msra.mxu0 0.0
        %4054 = vmatprep.subr.mxu0 0.0
        %4055 = vmatpush1.msra.mxu0 0.0
        %4056 = vmatprep.subr.mxu0 0.0
        %4057 = vmatpush1.msra.mxu0 0.0
        %4058 = vmatprep.mubr.f32.mxu0 0.0
        %v4059 = vand.u32 %v3986, 4294901760
        %v4060 = vsub.f32 %v3986, %v4059
        %v4061 = vand.u32 %v4060, 4294901760
        %v4062 = vsub.f32 %v4060, %v4061
        %v4063 = vand.u32 %v4062, 4294901760
        %4064 = vmatmul.mubr.f32.gmra.mrb[0].mxu0 %v4063
        %v4065 = vpop.f32.mrb[0].mxu0
        %v4066 = vadd.f32 0.0, %v4065
        %v4067 = vpop.f32.mrb[0].mxu0
        %v4068 = vadd.f32 0.0, %v4067
        %4069 = vdwg.mxu0
        %v4070 = vand.u32 %v3990, 4294901760
        %v4071 = vsub.f32 %v3990, %v4070
        %v4072 = vand.u32 %v4071, 4294901760
        %v4073 = vsub.f32 %v4071, %v4072
        %v4074 = vand.u32 %v4073, 4294901760
        %4075 = vmatprep.subr.mxu0 %v4074
        %v4076 = vand.u32 %v3988, 4294901760
        %v4077 = vsub.f32 %v3988, %v4076
        %v4078 = vand.u32 %v4077, 4294901760
        %v4079 = vsub.f32 %v4077, %v4078
        %v4080 = vand.u32 %v4079, 4294901760
        %4081 = vmatpush1.msra.mxu0 %v4080
        %4082 = vmatprep.subr.mxu0 0.0
        %4083 = vmatpush1.msra.mxu0 0.0
        %4084 = vmatprep.subr.mxu0 0.0
        %4085 = vmatpush1.msra.mxu0 0.0
        %4086 = vmatprep.subr.mxu0 0.0
        %4087 = vmatpush1.msra.mxu0 0.0
        %4088 = vmatprep.subr.mxu0 0.0
        %4089 = vmatpush1.msra.mxu0 0.0
        %4090 = vmatprep.subr.mxu0 0.0
        %4091 = vmatpush1.msra.mxu0 0.0
        %4092 = vmatprep.subr.mxu0 0.0
        %4093 = vmatpush1.msra.mxu0 0.0
        %4094 = vmatprep.subr.mxu0 0.0
        %4095 = vmatpush1.msra.mxu0 0.0
        %4096 = vmatprep.subr.mxu0 0.0
        %4097 = vmatpush1.msra.mxu0 0.0
        %4098 = vmatprep.subr.mxu0 0.0
        %4099 = vmatpush1.msra.mxu0 0.0
        %4100 = vmatprep.subr.mxu0 0.0
        %4101 = vmatpush1.msra.mxu0 0.0
        %4102 = vmatprep.subr.mxu0 0.0
        %4103 = vmatpush1.msra.mxu0 0.0
        %4104 = vmatprep.subr.mxu0 0.0
        %4105 = vmatpush1.msra.mxu0 0.0
        %4106 = vmatprep.subr.mxu0 0.0
        %4107 = vmatpush1.msra.mxu0 0.0
        %4108 = vmatprep.subr.mxu0 0.0
        %4109 = vmatpush1.msra.mxu0 0.0
        %4110 = vmatprep.subr.mxu0 0.0
        %4111 = vmatpush1.msra.mxu0 0.0
        %4112 = vmatprep.subr.mxu0 0.0
        %4113 = vmatpush1.msra.mxu0 0.0
        %4114 = vmatprep.subr.mxu0 0.0
        %4115 = vmatpush1.msra.mxu0 0.0
        %4116 = vmatprep.subr.mxu0 0.0
        %4117 = vmatpush1.msra.mxu0 0.0
        %4118 = vmatprep.subr.mxu0 0.0
        %4119 = vmatpush1.msra.mxu0 0.0
        %4120 = vmatprep.subr.mxu0 0.0
        %4121 = vmatpush1.msra.mxu0 0.0
        %4122 = vmatprep.subr.mxu0 0.0
        %4123 = vmatpush1.msra.mxu0 0.0
        %4124 = vmatprep.subr.mxu0 0.0
        %4125 = vmatpush1.msra.mxu0 0.0
        %4126 = vmatprep.subr.mxu0 0.0
        %4127 = vmatpush1.msra.mxu0 0.0
        %4128 = vmatprep.subr.mxu0 0.0
        %4129 = vmatpush1.msra.mxu0 0.0
        %4130 = vmatprep.subr.mxu0 0.0
        %4131 = vmatpush1.msra.mxu0 0.0
        %4132 = vmatprep.subr.mxu0 0.0
        %4133 = vmatpush1.msra.mxu0 0.0
        %4134 = vmatprep.subr.mxu0 0.0
        %4135 = vmatpush1.msra.mxu0 0.0
        %4136 = vmatprep.subr.mxu0 0.0
        %4137 = vmatpush1.msra.mxu0 0.0
        %4138 = vmatprep.subr.mxu0 0.0
        %4139 = vmatpush1.msra.mxu0 0.0
        %4140 = vmatprep.subr.mxu0 0.0
        %4141 = vmatpush1.msra.mxu0 0.0
        %4142 = vmatprep.subr.mxu0 0.0
        %4143 = vmatpush1.msra.mxu0 0.0
        %4144 = vmatprep.mubr.f32.mxu0 0.0
        %v4145 = vand.u32 %v3986, 4294901760
        %4146 = vmatmul.mubr.f32.gmra.mrb[0].mxu0 %v4145
        %v4147 = vpop.f32.mrb[0].mxu0
        %v4148 = vadd.f32 %v4066, %v4147
        %v4149 = vpop.f32.mrb[0].mxu0
        %v4150 = vadd.f32 %v4068, %v4149
        %4151 = vdwg.mxu0
        %v4152 = vand.u32 %v3990, 4294901760
        %v4153 = vsub.f32 %v3990, %v4152
        %4154 = vmatprep.subr.mxu0 %v4153
        %v4155 = vand.u32 %v3988, 4294901760
        %v4156 = vsub.f32 %v3988, %v4155
        %4157 = vmatpush1.msra.mxu0 %v4156
        %4158 = vmatprep.subr.mxu0 0.0
        %4159 = vmatpush1.msra.mxu0 0.0
        %4160 = vmatprep.subr.mxu0 0.0
        %4161 = vmatpush1.msra.mxu0 0.0
        %4162 = vmatprep.subr.mxu0 0.0
        %4163 = vmatpush1.msra.mxu0 0.0
        %4164 = vmatprep.subr.mxu0 0.0
        %4165 = vmatpush1.msra.mxu0 0.0
        %4166 = vmatprep.subr.mxu0 0.0
        %4167 = vmatpush1.msra.mxu0 0.0
        %4168 = vmatprep.subr.mxu0 0.0
        %4169 = vmatpush1.msra.mxu0 0.0
        %4170 = vmatprep.subr.mxu0 0.0
        %4171 = vmatpush1.msra.mxu0 0.0
        %4172 = vmatprep.subr.mxu0 0.0
        %4173 = vmatpush1.msra.mxu0 0.0
        %4174 = vmatprep.subr.mxu0 0.0
        %4175 = vmatpush1.msra.mxu0 0.0
        %4176 = vmatprep.subr.mxu0 0.0
        %4177 = vmatpush1.msra.mxu0 0.0
        %4178 = vmatprep.subr.mxu0 0.0
        %4179 = vmatpush1.msra.mxu0 0.0
        %4180 = vmatprep.subr.mxu0 0.0
        %4181 = vmatpush1.msra.mxu0 0.0
        %4182 = vmatprep.subr.mxu0 0.0
        %4183 = vmatpush1.msra.mxu0 0.0
        %4184 = vmatprep.subr.mxu0 0.0
        %4185 = vmatpush1.msra.mxu0 0.0
        %4186 = vmatprep.subr.mxu0 0.0
        %4187 = vmatpush1.msra.mxu0 0.0
        %4188 = vmatprep.subr.mxu0 0.0
        %4189 = vmatpush1.msra.mxu0 0.0
        %4190 = vmatprep.subr.mxu0 0.0
        %4191 = vmatpush1.msra.mxu0 0.0
        %4192 = vmatprep.subr.mxu0 0.0
        %4193 = vmatpush1.msra.mxu0 0.0
        %4194 = vmatprep.subr.mxu0 0.0
        %4195 = vmatpush1.msra.mxu0 0.0
        %4196 = vmatprep.subr.mxu0 0.0
        %4197 = vmatpush1.msra.mxu0 0.0
        %4198 = vmatprep.subr.mxu0 0.0
        %4199 = vmatpush1.msra.mxu0 0.0
        %4200 = vmatprep.subr.mxu0 0.0
        %4201 = vmatpush1.msra.mxu0 0.0
        %4202 = vmatprep.subr.mxu0 0.0
        %4203 = vmatpush1.msra.mxu0 0.0
        %4204 = vmatprep.subr.mxu0 0.0
        %4205 = vmatpush1.msra.mxu0 0.0
        %4206 = vmatprep.subr.mxu0 0.0
        %4207 = vmatpush1.msra.mxu0 0.0
        %4208 = vmatprep.subr.mxu0 0.0
        %4209 = vmatpush1.msra.mxu0 0.0
        %4210 = vmatprep.subr.mxu0 0.0
        %4211 = vmatpush1.msra.mxu0 0.0
        %4212 = vmatprep.subr.mxu0 0.0
        %4213 = vmatpush1.msra.mxu0 0.0
        %4214 = vmatprep.subr.mxu0 0.0
        %4215 = vmatpush1.msra.mxu0 0.0
        %4216 = vmatprep.subr.mxu0 0.0
        %4217 = vmatpush1.msra.mxu0 0.0
        %4218 = vmatprep.subr.mxu0 0.0
        %4219 = vmatpush1.msra.mxu0 0.0
        %4220 = vmatprep.mubr.f32.mxu0 0.0
        %v4221 = vand.u32 %v3986, 4294901760
        %v4222 = vsub.f32 %v3986, %v4221
        %4223 = vmatmul.mubr.f32.gmra.mrb[0].mxu0 %v4222
        %v4224 = vpop.f32.mrb[0].mxu0
        %v4225 = vadd.f32 %v4148, %v4224
        %v4226 = vpop.f32.mrb[0].mxu0
        %v4227 = vadd.f32 %v4150, %v4226
        %4228 = vdwg.mxu0
        %v4229 = vand.u32 %v3990, 4294901760
        %4230 = vmatprep.subr.mxu0 %v4229
        %v4231 = vand.u32 %v3988, 4294901760
        %4232 = vmatpush1.msra.mxu0 %v4231
        %4233 = vmatprep.subr.mxu0 0.0
        %4234 = vmatpush1.msra.mxu0 0.0
        %4235 = vmatprep.subr.mxu0 0.0
        %4236 = vmatpush1.msra.mxu0 0.0
        %4237 = vmatprep.subr.mxu0 0.0
        %4238 = vmatpush1.msra.mxu0 0.0
        %4239 = vmatprep.subr.mxu0 0.0
        %4240 = vmatpush1.msra.mxu0 0.0
        %4241 = vmatprep.subr.mxu0 0.0
        %4242 = vmatpush1.msra.mxu0 0.0
        %4243 = vmatprep.subr.mxu0 0.0
        %4244 = vmatpush1.msra.mxu0 0.0
        %4245 = vmatprep.subr.mxu0 0.0
        %4246 = vmatpush1.msra.mxu0 0.0
        %4247 = vmatprep.subr.mxu0 0.0
        %4248 = vmatpush1.msra.mxu0 0.0
        %4249 = vmatprep.subr.mxu0 0.0
        %4250 = vmatpush1.msra.mxu0 0.0
        %4251 = vmatprep.subr.mxu0 0.0
        %4252 = vmatpush1.msra.mxu0 0.0
        %4253 = vmatprep.subr.mxu0 0.0
        %4254 = vmatpush1.msra.mxu0 0.0
        %4255 = vmatprep.subr.mxu0 0.0
        %4256 = vmatpush1.msra.mxu0 0.0
        %4257 = vmatprep.subr.mxu0 0.0
        %4258 = vmatpush1.msra.mxu0 0.0
        %4259 = vmatprep.subr.mxu0 0.0
        %4260 = vmatpush1.msra.mxu0 0.0
        %4261 = vmatprep.subr.mxu0 0.0
        %4262 = vmatpush1.msra.mxu0 0.0
        %4263 = vmatprep.subr.mxu0 0.0
        %4264 = vmatpush1.msra.mxu0 0.0
        %4265 = vmatprep.subr.mxu0 0.0
        %4266 = vmatpush1.msra.mxu0 0.0
        %4267 = vmatprep.subr.mxu0 0.0
        %4268 = vmatpush1.msra.mxu0 0.0
        %4269 = vmatprep.subr.mxu0 0.0
        %4270 = vmatpush1.msra.mxu0 0.0
        %4271 = vmatprep.subr.mxu0 0.0
        %4272 = vmatpush1.msra.mxu0 0.0
        %4273 = vmatprep.subr.mxu0 0.0
        %4274 = vmatpush1.msra.mxu0 0.0
        %4275 = vmatprep.subr.mxu0 0.0
        %4276 = vmatpush1.msra.mxu0 0.0
        %4277 = vmatprep.subr.mxu0 0.0
        %4278 = vmatpush1.msra.mxu0 0.0
        %4279 = vmatprep.subr.mxu0 0.0
        %4280 = vmatpush1.msra.mxu0 0.0
        %4281 = vmatprep.subr.mxu0 0.0
        %4282 = vmatpush1.msra.mxu0 0.0
        %4283 = vmatprep.subr.mxu0 0.0
        %4284 = vmatpush1.msra.mxu0 0.0
        %4285 = vmatprep.subr.mxu0 0.0
        %4286 = vmatpush1.msra.mxu0 0.0
        %4287 = vmatprep.subr.mxu0 0.0
        %4288 = vmatpush1.msra.mxu0 0.0
        %4289 = vmatprep.subr.mxu0 0.0
        %4290 = vmatpush1.msra.mxu0 0.0
        %4291 = vmatprep.subr.mxu0 0.0
        %4292 = vmatpush1.msra.mxu0 0.0
        %4293 = vmatprep.subr.mxu0 0.0
        %4294 = vmatpush1.msra.mxu0 0.0
        %4295 = vmatprep.mubr.f32.mxu0 0.0
        %v4296 = vand.u32 %v3986, 4294901760
        %v4297 = vsub.f32 %v3986, %v4296
        %v4298 = vand.u32 %v4297, 4294901760
        %4299 = vmatmul.mubr.f32.gmra.mrb[0].mxu0 %v4298
        %v4300 = vpop.f32.mrb[0].mxu0
        %v4301 = vadd.f32 %v4225, %v4300
        %v4302 = vpop.f32.mrb[0].mxu0
        %v4303 = vadd.f32 %v4227, %v4302
        %4304 = vdwg.mxu0
        %v4305 = vand.u32 %v3990, 4294901760
        %v4306 = vsub.f32 %v3990, %v4305
        %v4307 = vand.u32 %v4306, 4294901760
        %4308 = vmatprep.subr.mxu0 %v4307
        %v4309 = vand.u32 %v3988, 4294901760
        %v4310 = vsub.f32 %v3988, %v4309
        %v4311 = vand.u32 %v4310, 4294901760
        %4312 = vmatpush1.msra.mxu0 %v4311
        %4313 = vmatprep.subr.mxu0 0.0
        %4314 = vmatpush1.msra.mxu0 0.0
        %4315 = vmatprep.subr.mxu0 0.0
        %4316 = vmatpush1.msra.mxu0 0.0
        %4317 = vmatprep.subr.mxu0 0.0
        %4318 = vmatpush1.msra.mxu0 0.0
        %4319 = vmatprep.subr.mxu0 0.0
        %4320 = vmatpush1.msra.mxu0 0.0
        %4321 = vmatprep.subr.mxu0 0.0
        %4322 = vmatpush1.msra.mxu0 0.0
        %4323 = vmatprep.subr.mxu0 0.0
        %4324 = vmatpush1.msra.mxu0 0.0
        %4325 = vmatprep.subr.mxu0 0.0
        %4326 = vmatpush1.msra.mxu0 0.0
        %4327 = vmatprep.subr.mxu0 0.0
        %4328 = vmatpush1.msra.mxu0 0.0
        %4329 = vmatprep.subr.mxu0 0.0
        %4330 = vmatpush1.msra.mxu0 0.0
        %4331 = vmatprep.subr.mxu0 0.0
        %4332 = vmatpush1.msra.mxu0 0.0
        %4333 = vmatprep.subr.mxu0 0.0
        %4334 = vmatpush1.msra.mxu0 0.0
        %4335 = vmatprep.subr.mxu0 0.0
        %4336 = vmatpush1.msra.mxu0 0.0
        %4337 = vmatprep.subr.mxu0 0.0
        %4338 = vmatpush1.msra.mxu0 0.0
        %4339 = vmatprep.subr.mxu0 0.0
        %4340 = vmatpush1.msra.mxu0 0.0
        %4341 = vmatprep.subr.mxu0 0.0
        %4342 = vmatpush1.msra.mxu0 0.0
        %4343 = vmatprep.subr.mxu0 0.0
        %4344 = vmatpush1.msra.mxu0 0.0
        %4345 = vmatprep.subr.mxu0 0.0
        %4346 = vmatpush1.msra.mxu0 0.0
        %4347 = vmatprep.subr.mxu0 0.0
        %4348 = vmatpush1.msra.mxu0 0.0
        %4349 = vmatprep.subr.mxu0 0.0
        %4350 = vmatpush1.msra.mxu0 0.0
        %4351 = vmatprep.subr.mxu0 0.0
        %4352 = vmatpush1.msra.mxu0 0.0
        %4353 = vmatprep.subr.mxu0 0.0
        %4354 = vmatpush1.msra.mxu0 0.0
        %4355 = vmatprep.subr.mxu0 0.0
        %4356 = vmatpush1.msra.mxu0 0.0
        %4357 = vmatprep.subr.mxu0 0.0
        %4358 = vmatpush1.msra.mxu0 0.0
        %4359 = vmatprep.subr.mxu0 0.0
        %4360 = vmatpush1.msra.mxu0 0.0
        %4361 = vmatprep.subr.mxu0 0.0
        %4362 = vmatpush1.msra.mxu0 0.0
        %4363 = vmatprep.subr.mxu0 0.0
        %4364 = vmatpush1.msra.mxu0 0.0
        %4365 = vmatprep.subr.mxu0 0.0
        %4366 = vmatpush1.msra.mxu0 0.0
        %4367 = vmatprep.subr.mxu0 0.0
        %4368 = vmatpush1.msra.mxu0 0.0
        %4369 = vmatprep.subr.mxu0 0.0
        %4370 = vmatpush1.msra.mxu0 0.0
        %4371 = vmatprep.subr.mxu0 0.0
        %4372 = vmatpush1.msra.mxu0 0.0
        %4373 = vmatprep.subr.mxu0 0.0
        %4374 = vmatpush1.msra.mxu0 0.0
        %4375 = vmatprep.mubr.f32.mxu0 0.0
        %v4376 = vand.u32 %v3986, 4294901760
        %4377 = vmatmul.mubr.f32.gmra.mrb[0].mxu0 %v4376
        %v4378 = vpop.f32.mrb[0].mxu0
        %v4379 = vadd.f32 %v4301, %v4378
        %v4380 = vpop.f32.mrb[0].mxu0
        %v4381 = vadd.f32 %v4303, %v4380
        %4382 = vdwg.mxu0
        %v4383 = vand.u32 %v3990, 4294901760
        %4384 = vmatprep.subr.mxu0 %v4383
        %v4385 = vand.u32 %v3988, 4294901760
        %4386 = vmatpush1.msra.mxu0 %v4385
        %4387 = vmatprep.subr.mxu0 0.0
        %4388 = vmatpush1.msra.mxu0 0.0
        %4389 = vmatprep.subr.mxu0 0.0
        %4390 = vmatpush1.msra.mxu0 0.0
        %4391 = vmatprep.subr.mxu0 0.0
        %4392 = vmatpush1.msra.mxu0 0.0
        %4393 = vmatprep.subr.mxu0 0.0
        %4394 = vmatpush1.msra.mxu0 0.0
        %4395 = vmatprep.subr.mxu0 0.0
        %4396 = vmatpush1.msra.mxu0 0.0
        %4397 = vmatprep.subr.mxu0 0.0
        %4398 = vmatpush1.msra.mxu0 0.0
        %4399 = vmatprep.subr.mxu0 0.0
        %4400 = vmatpush1.msra.mxu0 0.0
        %4401 = vmatprep.subr.mxu0 0.0
        %4402 = vmatpush1.msra.mxu0 0.0
        %4403 = vmatprep.subr.mxu0 0.0
        %4404 = vmatpush1.msra.mxu0 0.0
        %4405 = vmatprep.subr.mxu0 0.0
        %4406 = vmatpush1.msra.mxu0 0.0
        %4407 = vmatprep.subr.mxu0 0.0
        %4408 = vmatpush1.msra.mxu0 0.0
        %4409 = vmatprep.subr.mxu0 0.0
        %4410 = vmatpush1.msra.mxu0 0.0
        %4411 = vmatprep.subr.mxu0 0.0
        %4412 = vmatpush1.msra.mxu0 0.0
        %4413 = vmatprep.subr.mxu0 0.0
        %4414 = vmatpush1.msra.mxu0 0.0
        %4415 = vmatprep.subr.mxu0 0.0
        %4416 = vmatpush1.msra.mxu0 0.0
        %4417 = vmatprep.subr.mxu0 0.0
        %4418 = vmatpush1.msra.mxu0 0.0
        %4419 = vmatprep.subr.mxu0 0.0
        %4420 = vmatpush1.msra.mxu0 0.0
        %4421 = vmatprep.subr.mxu0 0.0
        %4422 = vmatpush1.msra.mxu0 0.0
        %4423 = vmatprep.subr.mxu0 0.0
        %4424 = vmatpush1.msra.mxu0 0.0
        %4425 = vmatprep.subr.mxu0 0.0
        %4426 = vmatpush1.msra.mxu0 0.0
        %4427 = vmatprep.subr.mxu0 0.0
        %4428 = vmatpush1.msra.mxu0 0.0
        %4429 = vmatprep.subr.mxu0 0.0
        %4430 = vmatpush1.msra.mxu0 0.0
        %4431 = vmatprep.subr.mxu0 0.0
        %4432 = vmatpush1.msra.mxu0 0.0
        %4433 = vmatprep.subr.mxu0 0.0
        %4434 = vmatpush1.msra.mxu0 0.0
        %4435 = vmatprep.subr.mxu0 0.0
        %4436 = vmatpush1.msra.mxu0 0.0
        %4437 = vmatprep.subr.mxu0 0.0
        %4438 = vmatpush1.msra.mxu0 0.0
        %4439 = vmatprep.subr.mxu0 0.0
        %4440 = vmatpush1.msra.mxu0 0.0
        %4441 = vmatprep.subr.mxu0 0.0
        %4442 = vmatpush1.msra.mxu0 0.0
        %4443 = vmatprep.subr.mxu0 0.0
        %4444 = vmatpush1.msra.mxu0 0.0
        %4445 = vmatprep.subr.mxu0 0.0
        %4446 = vmatpush1.msra.mxu0 0.0
        %4447 = vmatprep.subr.mxu0 0.0
        %4448 = vmatpush1.msra.mxu0 0.0
        %4449 = vmatprep.mubr.f32.mxu0 0.0
        %v4450 = vand.u32 %v3986, 4294901760
        %4451 = vmatmul.mubr.f32.gmra.mrb[0].mxu0 %v4450
        %v4452 = vpop.f32.mrb[0].mxu0
        %v4453 = vadd.f32 %v4379, %v4452
        %v4454 = vpop.f32.mrb[0].mxu0
        %v4455 = vadd.f32 %v4381, %v4454
        %4456 = vdwg.mxu0
        %v4459 = vcombine.low %v4453, %v4455
        %v4461 = vunpack.c.l.s4 1966171168
        %v4462 = vunpack.c.0.s8 %v4461
        %v4463 = vlaneseq
        %v4464 = vshrl.u32 %v4463, 7
        %v4465 = vsub.s32 %v4462, %v4464
        %v4466 = vrot.slane %v4459, %v4465
        %v4468 = vunpack.c.l.s4 1966171168
        %v4469 = vunpack.c.0.s8 %v4468
        %v4470 = vlaneseq
        %v4471 = vshrl.u32 %v4470, 7
        %v4472 = vsub.s32 %v4469, %v4471
        %v4473 = vrot.slane %v4466, %v4472
        %v4475 = vadd.f32 %v3957, %v4473
        %v4476 = vadd.f32 %v1355, %v1357
        %v4477 = vadd.f32 %v4476, %v1359
        %v4478 = vadd.f32 %v4477, %v1361
        %v4479 = vadd.f32 %v4478, %v1363
        %v4480 = vadd.f32 %v4479, %v1365
        %v4481 = vadd.f32 %v4480, %v1367
        %v4482 = vadd.f32 %v4481, %v1369
        %v4483 = vadd.f32 %v4482, %v1371
        %v4484 = vadd.f32 %v4483, %v1373
        %v4485 = vadd.f32 %v4484, %v1375
        %v4486 = vadd.f32 %v4485, %v1377
        %v4487 = vadd.f32 %v4486, %v1379
        %v4488 = vadd.f32 %v4487, %v1381
        %v4489 = vadd.f32 %v4488, %v2911
        %v4492 = vrot.slane %v4489, 1
        %v4493 = vrot.slane %v3971, 1
        %v4494 = vsel %vm1385, %v4492, %v4493
        %v4497 = vsel %vm255, %v4494, 0.0
        %v4498 = vsel %vm285, %v4493, 0.0
        %v4499 = vadd.f32 %v4497, %v4498
        %v4500 = vrot.slane %v4499, 4
        %v4501 = vadd.f32 %v4499, %v4500
        %v4502 = vrot.slane %v4501, 2
        %v4503 = vadd.f32 %v4501, %v4502
        %v4504 = vrot.slane %v4503, 1
        %v4505 = vadd.f32 %v4503, %v4504
        %v4506 = vmul.f32 %v4505, 0.00390625
        %s4507 = scalar_lea.vmem %s1, 64
        %v4508 = vld [vmem:[%s4507] sm:$0x77]
        %v4510 = vcombine.high %v4508, %v4508
        %v4512 = vsel %vm255, %v4506, 0
        %v4514 = vsel %vm331, %v4508, 0
        %v4516 = vsel %vm331, %v4510, 0
        %v4518 = vand.u32 %v4516, 4294901760
        %4519 = vmatprep.subr.mxu0 %v4518
        %v4520 = vand.u32 %v4514, 4294901760
        %4521 = vmatpush1.msra.mxu0 %v4520
        %4522 = vmatprep.subr.mxu0 0.0
        %4523 = vmatpush1.msra.mxu0 0.0
        %4524 = vmatprep.subr.mxu0 0.0
        %4525 = vmatpush1.msra.mxu0 0.0
        %4526 = vmatprep.subr.mxu0 0.0
        %4527 = vmatpush1.msra.mxu0 0.0
        %4528 = vmatprep.subr.mxu0 0.0
        %4529 = vmatpush1.msra.mxu0 0.0
        %4530 = vmatprep.subr.mxu0 0.0
        %4531 = vmatpush1.msra.mxu0 0.0
        %4532 = vmatprep.subr.mxu0 0.0
        %4533 = vmatpush1.msra.mxu0 0.0
        %4534 = vmatprep.subr.mxu0 0.0
        %4535 = vmatpush1.msra.mxu0 0.0
        %4536 = vmatprep.subr.mxu0 0.0
        %4537 = vmatpush1.msra.mxu0 0.0
        %4538 = vmatprep.subr.mxu0 0.0
        %4539 = vmatpush1.msra.mxu0 0.0
        %4540 = vmatprep.subr.mxu0 0.0
        %4541 = vmatpush1.msra.mxu0 0.0
        %4542 = vmatprep.subr.mxu0 0.0
        %4543 = vmatpush1.msra.mxu0 0.0
        %4544 = vmatprep.subr.mxu0 0.0
        %4545 = vmatpush1.msra.mxu0 0.0
        %4546 = vmatprep.subr.mxu0 0.0
        %4547 = vmatpush1.msra.mxu0 0.0
        %4548 = vmatprep.subr.mxu0 0.0
        %4549 = vmatpush1.msra.mxu0 0.0
        %4550 = vmatprep.subr.mxu0 0.0
        %4551 = vmatpush1.msra.mxu0 0.0
        %4552 = vmatprep.subr.mxu0 0.0
        %4553 = vmatpush1.msra.mxu0 0.0
        %4554 = vmatprep.subr.mxu0 0.0
        %4555 = vmatpush1.msra.mxu0 0.0
        %4556 = vmatprep.subr.mxu0 0.0
        %4557 = vmatpush1.msra.mxu0 0.0
        %4558 = vmatprep.subr.mxu0 0.0
        %4559 = vmatpush1.msra.mxu0 0.0
        %4560 = vmatprep.subr.mxu0 0.0
        %4561 = vmatpush1.msra.mxu0 0.0
        %4562 = vmatprep.subr.mxu0 0.0
        %4563 = vmatpush1.msra.mxu0 0.0
        %4564 = vmatprep.subr.mxu0 0.0
        %4565 = vmatpush1.msra.mxu0 0.0
        %4566 = vmatprep.subr.mxu0 0.0
        %4567 = vmatpush1.msra.mxu0 0.0
        %4568 = vmatprep.subr.mxu0 0.0
        %4569 = vmatpush1.msra.mxu0 0.0
        %4570 = vmatprep.subr.mxu0 0.0
        %4571 = vmatpush1.msra.mxu0 0.0
        %4572 = vmatprep.subr.mxu0 0.0
        %4573 = vmatpush1.msra.mxu0 0.0
        %4574 = vmatprep.subr.mxu0 0.0
        %4575 = vmatpush1.msra.mxu0 0.0
        %4576 = vmatprep.subr.mxu0 0.0
        %4577 = vmatpush1.msra.mxu0 0.0
        %4578 = vmatprep.subr.mxu0 0.0
        %4579 = vmatpush1.msra.mxu0 0.0
        %4580 = vmatprep.subr.mxu0 0.0
        %4581 = vmatpush1.msra.mxu0 0.0
        %4582 = vmatprep.subr.mxu0 0.0
        %4583 = vmatpush1.msra.mxu0 0.0
        %4584 = vmatprep.mubr.f32.mxu0 0.0
        %v4585 = vand.u32 %v4512, 4294901760
        %v4586 = vsub.f32 %v4512, %v4585
        %v4587 = vand.u32 %v4586, 4294901760
        %v4588 = vsub.f32 %v4586, %v4587
        %v4589 = vand.u32 %v4588, 4294901760
        %4590 = vmatmul.mubr.f32.gmra.mrb[0].mxu0 %v4589
        %v4591 = vpop.f32.mrb[0].mxu0
        %v4592 = vadd.f32 0.0, %v4591
        %v4593 = vpop.f32.mrb[0].mxu0
        %v4594 = vadd.f32 0.0, %v4593
        %4595 = vdwg.mxu0
        %v4596 = vand.u32 %v4516, 4294901760
        %v4597 = vsub.f32 %v4516, %v4596
        %v4598 = vand.u32 %v4597, 4294901760
        %v4599 = vsub.f32 %v4597, %v4598
        %v4600 = vand.u32 %v4599, 4294901760
        %4601 = vmatprep.subr.mxu0 %v4600
        %v4602 = vand.u32 %v4514, 4294901760
        %v4603 = vsub.f32 %v4514, %v4602
        %v4604 = vand.u32 %v4603, 4294901760
        %v4605 = vsub.f32 %v4603, %v4604
        %v4606 = vand.u32 %v4605, 4294901760
        %4607 = vmatpush1.msra.mxu0 %v4606
        %4608 = vmatprep.subr.mxu0 0.0
        %4609 = vmatpush1.msra.mxu0 0.0
        %4610 = vmatprep.subr.mxu0 0.0
        %4611 = vmatpush1.msra.mxu0 0.0
        %4612 = vmatprep.subr.mxu0 0.0
        %4613 = vmatpush1.msra.mxu0 0.0
        %4614 = vmatprep.subr.mxu0 0.0
        %4615 = vmatpush1.msra.mxu0 0.0
        %4616 = vmatprep.subr.mxu0 0.0
        %4617 = vmatpush1.msra.mxu0 0.0
        %4618 = vmatprep.subr.mxu0 0.0
        %4619 = vmatpush1.msra.mxu0 0.0
        %4620 = vmatprep.subr.mxu0 0.0
        %4621 = vmatpush1.msra.mxu0 0.0
        %4622 = vmatprep.subr.mxu0 0.0
        %4623 = vmatpush1.msra.mxu0 0.0
        %4624 = vmatprep.subr.mxu0 0.0
        %4625 = vmatpush1.msra.mxu0 0.0
        %4626 = vmatprep.subr.mxu0 0.0
        %4627 = vmatpush1.msra.mxu0 0.0
        %4628 = vmatprep.subr.mxu0 0.0
        %4629 = vmatpush1.msra.mxu0 0.0
        %4630 = vmatprep.subr.mxu0 0.0
        %4631 = vmatpush1.msra.mxu0 0.0
        %4632 = vmatprep.subr.mxu0 0.0
        %4633 = vmatpush1.msra.mxu0 0.0
        %4634 = vmatprep.subr.mxu0 0.0
        %4635 = vmatpush1.msra.mxu0 0.0
        %4636 = vmatprep.subr.mxu0 0.0
        %4637 = vmatpush1.msra.mxu0 0.0
        %4638 = vmatprep.subr.mxu0 0.0
        %4639 = vmatpush1.msra.mxu0 0.0
        %4640 = vmatprep.subr.mxu0 0.0
        %4641 = vmatpush1.msra.mxu0 0.0
        %4642 = vmatprep.subr.mxu0 0.0
        %4643 = vmatpush1.msra.mxu0 0.0
        %4644 = vmatprep.subr.mxu0 0.0
        %4645 = vmatpush1.msra.mxu0 0.0
        %4646 = vmatprep.subr.mxu0 0.0
        %4647 = vmatpush1.msra.mxu0 0.0
        %4648 = vmatprep.subr.mxu0 0.0
        %4649 = vmatpush1.msra.mxu0 0.0
        %4650 = vmatprep.subr.mxu0 0.0
        %4651 = vmatpush1.msra.mxu0 0.0
        %4652 = vmatprep.subr.mxu0 0.0
        %4653 = vmatpush1.msra.mxu0 0.0
        %4654 = vmatprep.subr.mxu0 0.0
        %4655 = vmatpush1.msra.mxu0 0.0
        %4656 = vmatprep.subr.mxu0 0.0
        %4657 = vmatpush1.msra.mxu0 0.0
        %4658 = vmatprep.subr.mxu0 0.0
        %4659 = vmatpush1.msra.mxu0 0.0
        %4660 = vmatprep.subr.mxu0 0.0
        %4661 = vmatpush1.msra.mxu0 0.0
        %4662 = vmatprep.subr.mxu0 0.0
        %4663 = vmatpush1.msra.mxu0 0.0
        %4664 = vmatprep.subr.mxu0 0.0
        %4665 = vmatpush1.msra.mxu0 0.0
        %4666 = vmatprep.subr.mxu0 0.0
        %4667 = vmatpush1.msra.mxu0 0.0
        %4668 = vmatprep.subr.mxu0 0.0
        %4669 = vmatpush1.msra.mxu0 0.0
        %4670 = vmatprep.mubr.f32.mxu0 0.0
        %v4671 = vand.u32 %v4512, 4294901760
        %4672 = vmatmul.mubr.f32.gmra.mrb[0].mxu0 %v4671
        %v4673 = vpop.f32.mrb[0].mxu0
        %v4674 = vadd.f32 %v4592, %v4673
        %v4675 = vpop.f32.mrb[0].mxu0
        %v4676 = vadd.f32 %v4594, %v4675
        %4677 = vdwg.mxu0
        %v4678 = vand.u32 %v4516, 4294901760
        %v4679 = vsub.f32 %v4516, %v4678
        %4680 = vmatprep.subr.mxu0 %v4679
        %v4681 = vand.u32 %v4514, 4294901760
        %v4682 = vsub.f32 %v4514, %v4681
        %4683 = vmatpush1.msra.mxu0 %v4682
        %4684 = vmatprep.subr.mxu0 0.0
        %4685 = vmatpush1.msra.mxu0 0.0
        %4686 = vmatprep.subr.mxu0 0.0
        %4687 = vmatpush1.msra.mxu0 0.0
        %4688 = vmatprep.subr.mxu0 0.0
        %4689 = vmatpush1.msra.mxu0 0.0
        %4690 = vmatprep.subr.mxu0 0.0
        %4691 = vmatpush1.msra.mxu0 0.0
        %4692 = vmatprep.subr.mxu0 0.0
        %4693 = vmatpush1.msra.mxu0 0.0
        %4694 = vmatprep.subr.mxu0 0.0
        %4695 = vmatpush1.msra.mxu0 0.0
        %4696 = vmatprep.subr.mxu0 0.0
        %4697 = vmatpush1.msra.mxu0 0.0
        %4698 = vmatprep.subr.mxu0 0.0
        %4699 = vmatpush1.msra.mxu0 0.0
        %4700 = vmatprep.subr.mxu0 0.0
        %4701 = vmatpush1.msra.mxu0 0.0
        %4702 = vmatprep.subr.mxu0 0.0
        %4703 = vmatpush1.msra.mxu0 0.0
        %4704 = vmatprep.subr.mxu0 0.0
        %4705 = vmatpush1.msra.mxu0 0.0
        %4706 = vmatprep.subr.mxu0 0.0
        %4707 = vmatpush1.msra.mxu0 0.0
        %4708 = vmatprep.subr.mxu0 0.0
        %4709 = vmatpush1.msra.mxu0 0.0
        %4710 = vmatprep.subr.mxu0 0.0
        %4711 = vmatpush1.msra.mxu0 0.0
        %4712 = vmatprep.subr.mxu0 0.0
        %4713 = vmatpush1.msra.mxu0 0.0
        %4714 = vmatprep.subr.mxu0 0.0
        %4715 = vmatpush1.msra.mxu0 0.0
        %4716 = vmatprep.subr.mxu0 0.0
        %4717 = vmatpush1.msra.mxu0 0.0
        %4718 = vmatprep.subr.mxu0 0.0
        %4719 = vmatpush1.msra.mxu0 0.0
        %4720 = vmatprep.subr.mxu0 0.0
        %4721 = vmatpush1.msra.mxu0 0.0
        %4722 = vmatprep.subr.mxu0 0.0
        %4723 = vmatpush1.msra.mxu0 0.0
        %4724 = vmatprep.subr.mxu0 0.0
        %4725 = vmatpush1.msra.mxu0 0.0
        %4726 = vmatprep.subr.mxu0 0.0
        %4727 = vmatpush1.msra.mxu0 0.0
        %4728 = vmatprep.subr.mxu0 0.0
        %4729 = vmatpush1.msra.mxu0 0.0
        %4730 = vmatprep.subr.mxu0 0.0
        %4731 = vmatpush1.msra.mxu0 0.0
        %4732 = vmatprep.subr.mxu0 0.0
        %4733 = vmatpush1.msra.mxu0 0.0
        %4734 = vmatprep.subr.mxu0 0.0
        %4735 = vmatpush1.msra.mxu0 0.0
        %4736 = vmatprep.subr.mxu0 0.0
        %4737 = vmatpush1.msra.mxu0 0.0
        %4738 = vmatprep.subr.mxu0 0.0
        %4739 = vmatpush1.msra.mxu0 0.0
        %4740 = vmatprep.subr.mxu0 0.0
        %4741 = vmatpush1.msra.mxu0 0.0
        %4742 = vmatprep.subr.mxu0 0.0
        %4743 = vmatpush1.msra.mxu0 0.0
        %4744 = vmatprep.subr.mxu0 0.0
        %4745 = vmatpush1.msra.mxu0 0.0
        %4746 = vmatprep.mubr.f32.mxu0 0.0
        %v4747 = vand.u32 %v4512, 4294901760
        %v4748 = vsub.f32 %v4512, %v4747
        %4749 = vmatmul.mubr.f32.gmra.mrb[0].mxu0 %v4748
        %v4750 = vpop.f32.mrb[0].mxu0
        %v4751 = vadd.f32 %v4674, %v4750
        %v4752 = vpop.f32.mrb[0].mxu0
        %v4753 = vadd.f32 %v4676, %v4752
        %4754 = vdwg.mxu0
        %v4755 = vand.u32 %v4516, 4294901760
        %4756 = vmatprep.subr.mxu0 %v4755
        %v4757 = vand.u32 %v4514, 4294901760
        %4758 = vmatpush1.msra.mxu0 %v4757
        %4759 = vmatprep.subr.mxu0 0.0
        %4760 = vmatpush1.msra.mxu0 0.0
        %4761 = vmatprep.subr.mxu0 0.0
        %4762 = vmatpush1.msra.mxu0 0.0
        %4763 = vmatprep.subr.mxu0 0.0
        %4764 = vmatpush1.msra.mxu0 0.0
        %4765 = vmatprep.subr.mxu0 0.0
        %4766 = vmatpush1.msra.mxu0 0.0
        %4767 = vmatprep.subr.mxu0 0.0
        %4768 = vmatpush1.msra.mxu0 0.0
        %4769 = vmatprep.subr.mxu0 0.0
        %4770 = vmatpush1.msra.mxu0 0.0
        %4771 = vmatprep.subr.mxu0 0.0
        %4772 = vmatpush1.msra.mxu0 0.0
        %4773 = vmatprep.subr.mxu0 0.0
        %4774 = vmatpush1.msra.mxu0 0.0
        %4775 = vmatprep.subr.mxu0 0.0
        %4776 = vmatpush1.msra.mxu0 0.0
        %4777 = vmatprep.subr.mxu0 0.0
        %4778 = vmatpush1.msra.mxu0 0.0
        %4779 = vmatprep.subr.mxu0 0.0
        %4780 = vmatpush1.msra.mxu0 0.0
        %4781 = vmatprep.subr.mxu0 0.0
        %4782 = vmatpush1.msra.mxu0 0.0
        %4783 = vmatprep.subr.mxu0 0.0
        %4784 = vmatpush1.msra.mxu0 0.0
        %4785 = vmatprep.subr.mxu0 0.0
        %4786 = vmatpush1.msra.mxu0 0.0
        %4787 = vmatprep.subr.mxu0 0.0
        %4788 = vmatpush1.msra.mxu0 0.0
        %4789 = vmatprep.subr.mxu0 0.0
        %4790 = vmatpush1.msra.mxu0 0.0
        %4791 = vmatprep.subr.mxu0 0.0
        %4792 = vmatpush1.msra.mxu0 0.0
        %4793 = vmatprep.subr.mxu0 0.0
        %4794 = vmatpush1.msra.mxu0 0.0
        %4795 = vmatprep.subr.mxu0 0.0
        %4796 = vmatpush1.msra.mxu0 0.0
        %4797 = vmatprep.subr.mxu0 0.0
        %4798 = vmatpush1.msra.mxu0 0.0
        %4799 = vmatprep.subr.mxu0 0.0
        %4800 = vmatpush1.msra.mxu0 0.0
        %4801 = vmatprep.subr.mxu0 0.0
        %4802 = vmatpush1.msra.mxu0 0.0
        %4803 = vmatprep.subr.mxu0 0.0
        %4804 = vmatpush1.msra.mxu0 0.0
        %4805 = vmatprep.subr.mxu0 0.0
        %4806 = vmatpush1.msra.mxu0 0.0
        %4807 = vmatprep.subr.mxu0 0.0
        %4808 = vmatpush1.msra.mxu0 0.0
        %4809 = vmatprep.subr.mxu0 0.0
        %4810 = vmatpush1.msra.mxu0 0.0
        %4811 = vmatprep.subr.mxu0 0.0
        %4812 = vmatpush1.msra.mxu0 0.0
        %4813 = vmatprep.subr.mxu0 0.0
        %4814 = vmatpush1.msra.mxu0 0.0
        %4815 = vmatprep.subr.mxu0 0.0
        %4816 = vmatpush1.msra.mxu0 0.0
        %4817 = vmatprep.subr.mxu0 0.0
        %4818 = vmatpush1.msra.mxu0 0.0
        %4819 = vmatprep.subr.mxu0 0.0
        %4820 = vmatpush1.msra.mxu0 0.0
        %4821 = vmatprep.mubr.f32.mxu0 0.0
        %v4822 = vand.u32 %v4512, 4294901760
        %v4823 = vsub.f32 %v4512, %v4822
        %v4824 = vand.u32 %v4823, 4294901760
        %4825 = vmatmul.mubr.f32.gmra.mrb[0].mxu0 %v4824
        %v4826 = vpop.f32.mrb[0].mxu0
        %v4827 = vadd.f32 %v4751, %v4826
        %v4828 = vpop.f32.mrb[0].mxu0
        %v4829 = vadd.f32 %v4753, %v4828
        %4830 = vdwg.mxu0
        %v4831 = vand.u32 %v4516, 4294901760
        %v4832 = vsub.f32 %v4516, %v4831
        %v4833 = vand.u32 %v4832, 4294901760
        %4834 = vmatprep.subr.mxu0 %v4833
        %v4835 = vand.u32 %v4514, 4294901760
        %v4836 = vsub.f32 %v4514, %v4835
        %v4837 = vand.u32 %v4836, 4294901760
        %4838 = vmatpush1.msra.mxu0 %v4837
        %4839 = vmatprep.subr.mxu0 0.0
        %4840 = vmatpush1.msra.mxu0 0.0
        %4841 = vmatprep.subr.mxu0 0.0
        %4842 = vmatpush1.msra.mxu0 0.0
        %4843 = vmatprep.subr.mxu0 0.0
        %4844 = vmatpush1.msra.mxu0 0.0
        %4845 = vmatprep.subr.mxu0 0.0
        %4846 = vmatpush1.msra.mxu0 0.0
        %4847 = vmatprep.subr.mxu0 0.0
        %4848 = vmatpush1.msra.mxu0 0.0
        %4849 = vmatprep.subr.mxu0 0.0
        %4850 = vmatpush1.msra.mxu0 0.0
        %4851 = vmatprep.subr.mxu0 0.0
        %4852 = vmatpush1.msra.mxu0 0.0
        %4853 = vmatprep.subr.mxu0 0.0
        %4854 = vmatpush1.msra.mxu0 0.0
        %4855 = vmatprep.subr.mxu0 0.0
        %4856 = vmatpush1.msra.mxu0 0.0
        %4857 = vmatprep.subr.mxu0 0.0
        %4858 = vmatpush1.msra.mxu0 0.0
        %4859 = vmatprep.subr.mxu0 0.0
        %4860 = vmatpush1.msra.mxu0 0.0
        %4861 = vmatprep.subr.mxu0 0.0
        %4862 = vmatpush1.msra.mxu0 0.0
        %4863 = vmatprep.subr.mxu0 0.0
        %4864 = vmatpush1.msra.mxu0 0.0
        %4865 = vmatprep.subr.mxu0 0.0
        %4866 = vmatpush1.msra.mxu0 0.0
        %4867 = vmatprep.subr.mxu0 0.0
        %4868 = vmatpush1.msra.mxu0 0.0
        %4869 = vmatprep.subr.mxu0 0.0
        %4870 = vmatpush1.msra.mxu0 0.0
        %4871 = vmatprep.subr.mxu0 0.0
        %4872 = vmatpush1.msra.mxu0 0.0
        %4873 = vmatprep.subr.mxu0 0.0
        %4874 = vmatpush1.msra.mxu0 0.0
        %4875 = vmatprep.subr.mxu0 0.0
        %4876 = vmatpush1.msra.mxu0 0.0
        %4877 = vmatprep.subr.mxu0 0.0
        %4878 = vmatpush1.msra.mxu0 0.0
        %4879 = vmatprep.subr.mxu0 0.0
        %4880 = vmatpush1.msra.mxu0 0.0
        %4881 = vmatprep.subr.mxu0 0.0
        %4882 = vmatpush1.msra.mxu0 0.0
        %4883 = vmatprep.subr.mxu0 0.0
        %4884 = vmatpush1.msra.mxu0 0.0
        %4885 = vmatprep.subr.mxu0 0.0
        %4886 = vmatpush1.msra.mxu0 0.0
        %4887 = vmatprep.subr.mxu0 0.0
        %4888 = vmatpush1.msra.mxu0 0.0
        %4889 = vmatprep.subr.mxu0 0.0
        %4890 = vmatpush1.msra.mxu0 0.0
        %4891 = vmatprep.subr.mxu0 0.0
        %4892 = vmatpush1.msra.mxu0 0.0
        %4893 = vmatprep.subr.mxu0 0.0
        %4894 = vmatpush1.msra.mxu0 0.0
        %4895 = vmatprep.subr.mxu0 0.0
        %4896 = vmatpush1.msra.mxu0 0.0
        %4897 = vmatprep.subr.mxu0 0.0
        %4898 = vmatpush1.msra.mxu0 0.0
        %4899 = vmatprep.subr.mxu0 0.0
        %4900 = vmatpush1.msra.mxu0 0.0
        %4901 = vmatprep.mubr.f32.mxu0 0.0
        %v4902 = vand.u32 %v4512, 4294901760
        %4903 = vmatmul.mubr.f32.gmra.mrb[0].mxu0 %v4902
        %v4904 = vpop.f32.mrb[0].mxu0
        %v4905 = vadd.f32 %v4827, %v4904
        %v4906 = vpop.f32.mrb[0].mxu0
        %v4907 = vadd.f32 %v4829, %v4906
        %4908 = vdwg.mxu0
        %v4909 = vand.u32 %v4516, 4294901760
        %4910 = vmatprep.subr.mxu0 %v4909
        %v4911 = vand.u32 %v4514, 4294901760
        %4912 = vmatpush1.msra.mxu0 %v4911
        %4913 = vmatprep.subr.mxu0 0.0
        %4914 = vmatpush1.msra.mxu0 0.0
        %4915 = vmatprep.subr.mxu0 0.0
        %4916 = vmatpush1.msra.mxu0 0.0
        %4917 = vmatprep.subr.mxu0 0.0
        %4918 = vmatpush1.msra.mxu0 0.0
        %4919 = vmatprep.subr.mxu0 0.0
        %4920 = vmatpush1.msra.mxu0 0.0
        %4921 = vmatprep.subr.mxu0 0.0
        %4922 = vmatpush1.msra.mxu0 0.0
        %4923 = vmatprep.subr.mxu0 0.0
        %4924 = vmatpush1.msra.mxu0 0.0
        %4925 = vmatprep.subr.mxu0 0.0
        %4926 = vmatpush1.msra.mxu0 0.0
        %4927 = vmatprep.subr.mxu0 0.0
        %4928 = vmatpush1.msra.mxu0 0.0
        %4929 = vmatprep.subr.mxu0 0.0
        %4930 = vmatpush1.msra.mxu0 0.0
        %4931 = vmatprep.subr.mxu0 0.0
        %4932 = vmatpush1.msra.mxu0 0.0
        %4933 = vmatprep.subr.mxu0 0.0
        %4934 = vmatpush1.msra.mxu0 0.0
        %4935 = vmatprep.subr.mxu0 0.0
        %4936 = vmatpush1.msra.mxu0 0.0
        %4937 = vmatprep.subr.mxu0 0.0
        %4938 = vmatpush1.msra.mxu0 0.0
        %4939 = vmatprep.subr.mxu0 0.0
        %4940 = vmatpush1.msra.mxu0 0.0
        %4941 = vmatprep.subr.mxu0 0.0
        %4942 = vmatpush1.msra.mxu0 0.0
        %4943 = vmatprep.subr.mxu0 0.0
        %4944 = vmatpush1.msra.mxu0 0.0
        %4945 = vmatprep.subr.mxu0 0.0
        %4946 = vmatpush1.msra.mxu0 0.0
        %4947 = vmatprep.subr.mxu0 0.0
        %4948 = vmatpush1.msra.mxu0 0.0
        %4949 = vmatprep.subr.mxu0 0.0
        %4950 = vmatpush1.msra.mxu0 0.0
        %4951 = vmatprep.subr.mxu0 0.0
        %4952 = vmatpush1.msra.mxu0 0.0
        %4953 = vmatprep.subr.mxu0 0.0
        %4954 = vmatpush1.msra.mxu0 0.0
        %4955 = vmatprep.subr.mxu0 0.0
        %4956 = vmatpush1.msra.mxu0 0.0
        %4957 = vmatprep.subr.mxu0 0.0
        %4958 = vmatpush1.msra.mxu0 0.0
        %4959 = vmatprep.subr.mxu0 0.0
        %4960 = vmatpush1.msra.mxu0 0.0
        %4961 = vmatprep.subr.mxu0 0.0
        %4962 = vmatpush1.msra.mxu0 0.0
        %4963 = vmatprep.subr.mxu0 0.0
        %4964 = vmatpush1.msra.mxu0 0.0
        %4965 = vmatprep.subr.mxu0 0.0
        %4966 = vmatpush1.msra.mxu0 0.0
        %4967 = vmatprep.subr.mxu0 0.0
        %4968 = vmatpush1.msra.mxu0 0.0
        %4969 = vmatprep.subr.mxu0 0.0
        %4970 = vmatpush1.msra.mxu0 0.0
        %4971 = vmatprep.subr.mxu0 0.0
        %4972 = vmatpush1.msra.mxu0 0.0
        %4973 = vmatprep.subr.mxu0 0.0
        %4974 = vmatpush1.msra.mxu0 0.0
        %4975 = vmatprep.mubr.f32.mxu0 0.0
        %v4976 = vand.u32 %v4512, 4294901760
        %4977 = vmatmul.mubr.f32.gmra.mrb[0].mxu0 %v4976
        %v4978 = vpop.f32.mrb[0].mxu0
        %v4979 = vadd.f32 %v4905, %v4978
        %v4980 = vpop.f32.mrb[0].mxu0
        %v4981 = vadd.f32 %v4907, %v4980
        %4982 = vdwg.mxu0
        %v4985 = vcombine.low %v4979, %v4981
        %v4987 = vunpack.c.l.s4 1966171168
        %v4988 = vunpack.c.0.s8 %v4987
        %v4989 = vlaneseq
        %v4990 = vshrl.u32 %v4989, 7
        %v4991 = vsub.s32 %v4988, %v4990
        %v4992 = vrot.slane %v4985, %v4991
        %v4994 = vunpack.c.l.s4 1966171168
        %v4995 = vunpack.c.0.s8 %v4994
        %v4996 = vlaneseq
        %v4997 = vshrl.u32 %v4996, 7
        %v4998 = vsub.s32 %v4995, %v4997
        %v4999 = vrot.slane %v4992, %v4998
        %v5001 = vadd.f32 %v4475, %v4999
        %v5002 = vld [vmem:[%s3] sm:$0xff]
        %v5003 = vld [vmem:[%s3 + $0x8] sm:$0xff]
        %v5004 = vld [vmem:[%s3 + $0x10] sm:$0xff]
        %v5005 = vld [vmem:[%s3 + $0x18] sm:$0xff]
        %v5006 = vld [vmem:[%s3 + $0x20] sm:$0xff]
        %v5007 = vld [vmem:[%s3 + $0x28] sm:$0xff]
        %v5008 = vld [vmem:[%s3 + $0x30] sm:$0xff]
        %v5009 = vld [vmem:[%s3 + $0x38] sm:$0xff]
        %v5010 = vld [vmem:[%s3 + $0x40] sm:$0xff]
        %v5011 = vld [vmem:[%s3 + $0x48] sm:$0xff]
        %v5012 = vld [vmem:[%s3 + $0x50] sm:$0xff]
        %v5013 = vld [vmem:[%s3 + $0x58] sm:$0xff]
        %v5014 = vld [vmem:[%s3 + $0x60] sm:$0xff]
        %v5015 = vld [vmem:[%s3 + $0x68] sm:$0xff]
        %v5016 = vld [vmem:[%s3 + $0x70] sm:$0xff]
        %v5017 = vld [vmem:[%s3 + $0x78] sm:$0xff]
        %v5018 = vld [vmem:[%s3 + $0x80] sm:$0xff]
        %v5019 = vld [vmem:[%s3 + $0x88] sm:$0xff]
        %v5020 = vld [vmem:[%s3 + $0x90] sm:$0xff]
        %v5021 = vld [vmem:[%s3 + $0x98] sm:$0xff]
        %v5022 = vld [vmem:[%s3 + $0xa0] sm:$0xff]
        %v5023 = vld [vmem:[%s3 + $0xa8] sm:$0xff]
        %v5024 = vld [vmem:[%s3 + $0xb0] sm:$0xff]
        %v5025 = vld [vmem:[%s3 + $0xb8] sm:$0xff]
        %v5027 = vlaneseq
        %v5028 = vshrl.u32 %v5027, 7
        %v5029 = vsub.s32 0, %v5028
        %v5030 = vrot.slane %v5001, %v5029
        %v5031 = vlaneseq
        %v5032 = vshrl.u32 %v5031, 7
        %v5033 = vsub.s32 1, %v5032
        %v5034 = vrot.slane %v5001, %v5033
        %vm5036 = vcmask 523264
        %v5037 = vsel %vm5036, %v5034, 0
        %5039 = vmatprep.subr.mxu0 0.0
        %v5040 = vand.u32 %v5002, 4294901760
        %5041 = vmatpush1.msra.mxu0 %v5040
        %5042 = vmatprep.subr.mxu0 0.0
        %v5043 = vand.u32 %v5003, 4294901760
        %5044 = vmatpush1.msra.mxu0 %v5043
        %5045 = vmatprep.subr.mxu0 0.0
        %v5046 = vand.u32 %v5004, 4294901760
        %5047 = vmatpush1.msra.mxu0 %v5046
        %5048 = vmatprep.subr.mxu0 0.0
        %v5049 = vand.u32 %v5005, 4294901760
        %5050 = vmatpush1.msra.mxu0 %v5049
        %5051 = vmatprep.subr.mxu0 0.0
        %v5052 = vand.u32 %v5006, 4294901760
        %5053 = vmatpush1.msra.mxu0 %v5052
        %5054 = vmatprep.subr.mxu0 0.0
        %v5055 = vand.u32 %v5007, 4294901760
        %5056 = vmatpush1.msra.mxu0 %v5055
        %5057 = vmatprep.subr.mxu0 0.0
        %v5058 = vand.u32 %v5008, 4294901760
        %5059 = vmatpush1.msra.mxu0 %v5058
        %5060 = vmatprep.subr.mxu0 0.0
        %v5061 = vand.u32 %v5009, 4294901760
        %5062 = vmatpush1.msra.mxu0 %v5061
        %5063 = vmatprep.subr.mxu0 0.0
        %v5064 = vand.u32 %v5010, 4294901760
        %5065 = vmatpush1.msra.mxu0 %v5064
        %5066 = vmatprep.subr.mxu0 0.0
        %v5067 = vand.u32 %v5011, 4294901760
        %5068 = vmatpush1.msra.mxu0 %v5067
        %5069 = vmatprep.subr.mxu0 0.0
        %v5070 = vand.u32 %v5012, 4294901760
        %5071 = vmatpush1.msra.mxu0 %v5070
        %5072 = vmatprep.subr.mxu0 0.0
        %v5073 = vand.u32 %v5013, 4294901760
        %5074 = vmatpush1.msra.mxu0 %v5073
        %5075 = vmatprep.subr.mxu0 0.0
        %v5076 = vand.u32 %v5014, 4294901760
        %5077 = vmatpush1.msra.mxu0 %v5076
        %5078 = vmatprep.subr.mxu0 0.0
        %v5079 = vand.u32 %v5015, 4294901760
        %5080 = vmatpush1.msra.mxu0 %v5079
        %5081 = vmatprep.subr.mxu0 0.0
        %v5082 = vand.u32 %v5016, 4294901760
        %5083 = vmatpush1.msra.mxu0 %v5082
        %5084 = vmatprep.subr.mxu0 0.0
        %v5085 = vand.u32 %v5017, 4294901760
        %5086 = vmatpush1.msra.mxu0 %v5085
        %5087 = vmatprep.subr.mxu0 0.0
        %v5088 = vand.u32 %v5018, 4294901760
        %5089 = vmatpush1.msra.mxu0 %v5088
        %5090 = vmatprep.subr.mxu0 0.0
        %v5091 = vand.u32 %v5019, 4294901760
        %5092 = vmatpush1.msra.mxu0 %v5091
        %5093 = vmatprep.subr.mxu0 0.0
        %v5094 = vand.u32 %v5020, 4294901760
        %5095 = vmatpush1.msra.mxu0 %v5094
        %5096 = vmatprep.subr.mxu0 0.0
        %v5097 = vand.u32 %v5021, 4294901760
        %5098 = vmatpush1.msra.mxu0 %v5097
        %5099 = vmatprep.subr.mxu0 0.0
        %v5100 = vand.u32 %v5022, 4294901760
        %5101 = vmatpush1.msra.mxu0 %v5100
        %5102 = vmatprep.subr.mxu0 0.0
        %v5103 = vand.u32 %v5023, 4294901760
        %5104 = vmatpush1.msra.mxu0 %v5103
        %5105 = vmatprep.subr.mxu0 0.0
        %v5106 = vand.u32 %v5024, 4294901760
        %5107 = vmatpush1.msra.mxu0 %v5106
        %5108 = vmatprep.subr.mxu0 0.0
        %v5109 = vand.u32 %v5025, 4294901760
        %5110 = vmatpush1.msra.mxu0 %v5109
        %5111 = vmatprep.subr.mxu0 0.0
        %5112 = vmatpush1.msra.mxu0 0.0
        %5113 = vmatprep.subr.mxu0 0.0
        %5114 = vmatpush1.msra.mxu0 0.0
        %5115 = vmatprep.subr.mxu0 0.0
        %5116 = vmatpush1.msra.mxu0 0.0
        %5117 = vmatprep.subr.mxu0 0.0
        %5118 = vmatpush1.msra.mxu0 0.0
        %5119 = vmatprep.subr.mxu0 0.0
        %5120 = vmatpush1.msra.mxu0 0.0
        %5121 = vmatprep.subr.mxu0 0.0
        %5122 = vmatpush1.msra.mxu0 0.0
        %5123 = vmatprep.subr.mxu0 0.0
        %5124 = vmatpush1.msra.mxu0 0.0
        %5125 = vmatprep.subr.mxu0 0.0
        %5126 = vmatpush1.msra.mxu0 0.0
        %v5127 = vand.u32 %v5037, 4294901760
        %v5128 = vsub.f32 %v5037, %v5127
        %v5129 = vand.u32 %v5128, 4294901760
        %v5130 = vsub.f32 %v5128, %v5129
        %v5131 = vand.u32 %v5130, 4294901760
        %5132 = vmatprep.mubr.f32.mxu0 %v5131
        %v5133 = vand.u32 %v5030, 4294901760
        %v5134 = vsub.f32 %v5030, %v5133
        %v5135 = vand.u32 %v5134, 4294901760
        %v5136 = vsub.f32 %v5134, %v5135
        %v5137 = vand.u32 %v5136, 4294901760
        %5138 = vmatmul.mubr.f32.gmra.mrb[0].mxu0 %v5137
        %v5139 = vpop.f32.mrb[0].mxu0
        %v5140 = vadd.f32 0.0, %v5139
        %v5141 = vpop.f32.mrb[0].mxu0
        %5142 = vdwg.mxu0
        %5143 = vmatprep.subr.mxu0 0.0
        %v5144 = vand.u32 %v5002, 4294901760
        %v5145 = vsub.f32 %v5002, %v5144
        %v5146 = vand.u32 %v5145, 4294901760
        %v5147 = vsub.f32 %v5145, %v5146
        %v5148 = vand.u32 %v5147, 4294901760
        %5149 = vmatpush1.msra.mxu0 %v5148
        %5150 = vmatprep.subr.mxu0 0.0
        %v5151 = vand.u32 %v5003, 4294901760
        %v5152 = vsub.f32 %v5003, %v5151
        %v5153 = vand.u32 %v5152, 4294901760
        %v5154 = vsub.f32 %v5152, %v5153
        %v5155 = vand.u32 %v5154, 4294901760
        %5156 = vmatpush1.msra.mxu0 %v5155
        %5157 = vmatprep.subr.mxu0 0.0
        %v5158 = vand.u32 %v5004, 4294901760
        %v5159 = vsub.f32 %v5004, %v5158
        %v5160 = vand.u32 %v5159, 4294901760
        %v5161 = vsub.f32 %v5159, %v5160
        %v5162 = vand.u32 %v5161, 4294901760
        %5163 = vmatpush1.msra.mxu0 %v5162
        %5164 = vmatprep.subr.mxu0 0.0
        %v5165 = vand.u32 %v5005, 4294901760
        %v5166 = vsub.f32 %v5005, %v5165
        %v5167 = vand.u32 %v5166, 4294901760
        %v5168 = vsub.f32 %v5166, %v5167
        %v5169 = vand.u32 %v5168, 4294901760
        %5170 = vmatpush1.msra.mxu0 %v5169
        %5171 = vmatprep.subr.mxu0 0.0
        %v5172 = vand.u32 %v5006, 4294901760
        %v5173 = vsub.f32 %v5006, %v5172
        %v5174 = vand.u32 %v5173, 4294901760
        %v5175 = vsub.f32 %v5173, %v5174
        %v5176 = vand.u32 %v5175, 4294901760
        %5177 = vmatpush1.msra.mxu0 %v5176
        %5178 = vmatprep.subr.mxu0 0.0
        %v5179 = vand.u32 %v5007, 4294901760
        %v5180 = vsub.f32 %v5007, %v5179
        %v5181 = vand.u32 %v5180, 4294901760
        %v5182 = vsub.f32 %v5180, %v5181
        %v5183 = vand.u32 %v5182, 4294901760
        %5184 = vmatpush1.msra.mxu0 %v5183
        %5185 = vmatprep.subr.mxu0 0.0
        %v5186 = vand.u32 %v5008, 4294901760
        %v5187 = vsub.f32 %v5008, %v5186
        %v5188 = vand.u32 %v5187, 4294901760
        %v5189 = vsub.f32 %v5187, %v5188
        %v5190 = vand.u32 %v5189, 4294901760
        %5191 = vmatpush1.msra.mxu0 %v5190
        %5192 = vmatprep.subr.mxu0 0.0
        %v5193 = vand.u32 %v5009, 4294901760
        %v5194 = vsub.f32 %v5009, %v5193
        %v5195 = vand.u32 %v5194, 4294901760
        %v5196 = vsub.f32 %v5194, %v5195
        %v5197 = vand.u32 %v5196, 4294901760
        %5198 = vmatpush1.msra.mxu0 %v5197
        %5199 = vmatprep.subr.mxu0 0.0
        %v5200 = vand.u32 %v5010, 4294901760
        %v5201 = vsub.f32 %v5010, %v5200
        %v5202 = vand.u32 %v5201, 4294901760
        %v5203 = vsub.f32 %v5201, %v5202
        %v5204 = vand.u32 %v5203, 4294901760
        %5205 = vmatpush1.msra.mxu0 %v5204
        %5206 = vmatprep.subr.mxu0 0.0
        %v5207 = vand.u32 %v5011, 4294901760
        %v5208 = vsub.f32 %v5011, %v5207
        %v5209 = vand.u32 %v5208, 4294901760
        %v5210 = vsub.f32 %v5208, %v5209
        %v5211 = vand.u32 %v5210, 4294901760
        %5212 = vmatpush1.msra.mxu0 %v5211
        %5213 = vmatprep.subr.mxu0 0.0
        %v5214 = vand.u32 %v5012, 4294901760
        %v5215 = vsub.f32 %v5012, %v5214
        %v5216 = vand.u32 %v5215, 4294901760
        %v5217 = vsub.f32 %v5215, %v5216
        %v5218 = vand.u32 %v5217, 4294901760
        %5219 = vmatpush1.msra.mxu0 %v5218
        %5220 = vmatprep.subr.mxu0 0.0
        %v5221 = vand.u32 %v5013, 4294901760
        %v5222 = vsub.f32 %v5013, %v5221
        %v5223 = vand.u32 %v5222, 4294901760
        %v5224 = vsub.f32 %v5222, %v5223
        %v5225 = vand.u32 %v5224, 4294901760
        %5226 = vmatpush1.msra.mxu0 %v5225
        %5227 = vmatprep.subr.mxu0 0.0
        %v5228 = vand.u32 %v5014, 4294901760
        %v5229 = vsub.f32 %v5014, %v5228
        %v5230 = vand.u32 %v5229, 4294901760
        %v5231 = vsub.f32 %v5229, %v5230
        %v5232 = vand.u32 %v5231, 4294901760
        %5233 = vmatpush1.msra.mxu0 %v5232
        %5234 = vmatprep.subr.mxu0 0.0
        %v5235 = vand.u32 %v5015, 4294901760
        %v5236 = vsub.f32 %v5015, %v5235
        %v5237 = vand.u32 %v5236, 4294901760
        %v5238 = vsub.f32 %v5236, %v5237
        %v5239 = vand.u32 %v5238, 4294901760
        %5240 = vmatpush1.msra.mxu0 %v5239
        %5241 = vmatprep.subr.mxu0 0.0
        %v5242 = vand.u32 %v5016, 4294901760
        %v5243 = vsub.f32 %v5016, %v5242
        %v5244 = vand.u32 %v5243, 4294901760
        %v5245 = vsub.f32 %v5243, %v5244
        %v5246 = vand.u32 %v5245, 4294901760
        %5247 = vmatpush1.msra.mxu0 %v5246
        %5248 = vmatprep.subr.mxu0 0.0
        %v5249 = vand.u32 %v5017, 4294901760
        %v5250 = vsub.f32 %v5017, %v5249
        %v5251 = vand.u32 %v5250, 4294901760
        %v5252 = vsub.f32 %v5250, %v5251
        %v5253 = vand.u32 %v5252, 4294901760
        %5254 = vmatpush1.msra.mxu0 %v5253
        %5255 = vmatprep.subr.mxu0 0.0
        %v5256 = vand.u32 %v5018, 4294901760
        %v5257 = vsub.f32 %v5018, %v5256
        %v5258 = vand.u32 %v5257, 4294901760
        %v5259 = vsub.f32 %v5257, %v5258
        %v5260 = vand.u32 %v5259, 4294901760
        %5261 = vmatpush1.msra.mxu0 %v5260
        %5262 = vmatprep.subr.mxu0 0.0
        %v5263 = vand.u32 %v5019, 4294901760
        %v5264 = vsub.f32 %v5019, %v5263
        %v5265 = vand.u32 %v5264, 4294901760
        %v5266 = vsub.f32 %v5264, %v5265
        %v5267 = vand.u32 %v5266, 4294901760
        %5268 = vmatpush1.msra.mxu0 %v5267
        %5269 = vmatprep.subr.mxu0 0.0
        %v5270 = vand.u32 %v5020, 4294901760
        %v5271 = vsub.f32 %v5020, %v5270
        %v5272 = vand.u32 %v5271, 4294901760
        %v5273 = vsub.f32 %v5271, %v5272
        %v5274 = vand.u32 %v5273, 4294901760
        %5275 = vmatpush1.msra.mxu0 %v5274
        %5276 = vmatprep.subr.mxu0 0.0
        %v5277 = vand.u32 %v5021, 4294901760
        %v5278 = vsub.f32 %v5021, %v5277
        %v5279 = vand.u32 %v5278, 4294901760
        %v5280 = vsub.f32 %v5278, %v5279
        %v5281 = vand.u32 %v5280, 4294901760
        %5282 = vmatpush1.msra.mxu0 %v5281
        %5283 = vmatprep.subr.mxu0 0.0
        %v5284 = vand.u32 %v5022, 4294901760
        %v5285 = vsub.f32 %v5022, %v5284
        %v5286 = vand.u32 %v5285, 4294901760
        %v5287 = vsub.f32 %v5285, %v5286
        %v5288 = vand.u32 %v5287, 4294901760
        %5289 = vmatpush1.msra.mxu0 %v5288
        %5290 = vmatprep.subr.mxu0 0.0
        %v5291 = vand.u32 %v5023, 4294901760
        %v5292 = vsub.f32 %v5023, %v5291
        %v5293 = vand.u32 %v5292, 4294901760
        %v5294 = vsub.f32 %v5292, %v5293
        %v5295 = vand.u32 %v5294, 4294901760
        %5296 = vmatpush1.msra.mxu0 %v5295
        %5297 = vmatprep.subr.mxu0 0.0
        %v5298 = vand.u32 %v5024, 4294901760
        %v5299 = vsub.f32 %v5024, %v5298
        %v5300 = vand.u32 %v5299, 4294901760
        %v5301 = vsub.f32 %v5299, %v5300
        %v5302 = vand.u32 %v5301, 4294901760
        %5303 = vmatpush1.msra.mxu0 %v5302
        %5304 = vmatprep.subr.mxu0 0.0
        %v5305 = vand.u32 %v5025, 4294901760
        %v5306 = vsub.f32 %v5025, %v5305
        %v5307 = vand.u32 %v5306, 4294901760
        %v5308 = vsub.f32 %v5306, %v5307
        %v5309 = vand.u32 %v5308, 4294901760
        %5310 = vmatpush1.msra.mxu0 %v5309
        %5311 = vmatprep.subr.mxu0 0.0
        %5312 = vmatpush1.msra.mxu0 0.0
        %5313 = vmatprep.subr.mxu0 0.0
        %5314 = vmatpush1.msra.mxu0 0.0
        %5315 = vmatprep.subr.mxu0 0.0
        %5316 = vmatpush1.msra.mxu0 0.0
        %5317 = vmatprep.subr.mxu0 0.0
        %5318 = vmatpush1.msra.mxu0 0.0
        %5319 = vmatprep.subr.mxu0 0.0
        %5320 = vmatpush1.msra.mxu0 0.0
        %5321 = vmatprep.subr.mxu0 0.0
        %5322 = vmatpush1.msra.mxu0 0.0
        %5323 = vmatprep.subr.mxu0 0.0
        %5324 = vmatpush1.msra.mxu0 0.0
        %5325 = vmatprep.subr.mxu0 0.0
        %5326 = vmatpush1.msra.mxu0 0.0
        %v5327 = vand.u32 %v5037, 4294901760
        %5328 = vmatprep.mubr.f32.mxu0 %v5327
        %v5329 = vand.u32 %v5030, 4294901760
        %5330 = vmatmul.mubr.f32.gmra.mrb[0].mxu0 %v5329
        %v5331 = vpop.f32.mrb[0].mxu0
        %v5332 = vadd.f32 %v5140, %v5331
        %v5333 = vpop.f32.mrb[0].mxu0
        %5334 = vdwg.mxu0
        %5335 = vmatprep.subr.mxu0 0.0
        %v5336 = vand.u32 %v5002, 4294901760
        %v5337 = vsub.f32 %v5002, %v5336
        %5338 = vmatpush1.msra.mxu0 %v5337
        %5339 = vmatprep.subr.mxu0 0.0
        %v5340 = vand.u32 %v5003, 4294901760
        %v5341 = vsub.f32 %v5003, %v5340
        %5342 = vmatpush1.msra.mxu0 %v5341
        %5343 = vmatprep.subr.mxu0 0.0
        %v5344 = vand.u32 %v5004, 4294901760
        %v5345 = vsub.f32 %v5004, %v5344
        %5346 = vmatpush1.msra.mxu0 %v5345
        %5347 = vmatprep.subr.mxu0 0.0
        %v5348 = vand.u32 %v5005, 4294901760
        %v5349 = vsub.f32 %v5005, %v5348
        %5350 = vmatpush1.msra.mxu0 %v5349
        %5351 = vmatprep.subr.mxu0 0.0
        %v5352 = vand.u32 %v5006, 4294901760
        %v5353 = vsub.f32 %v5006, %v5352
        %5354 = vmatpush1.msra.mxu0 %v5353
        %5355 = vmatprep.subr.mxu0 0.0
        %v5356 = vand.u32 %v5007, 4294901760
        %v5357 = vsub.f32 %v5007, %v5356
        %5358 = vmatpush1.msra.mxu0 %v5357
        %5359 = vmatprep.subr.mxu0 0.0
        %v5360 = vand.u32 %v5008, 4294901760
        %v5361 = vsub.f32 %v5008, %v5360
        %5362 = vmatpush1.msra.mxu0 %v5361
        %5363 = vmatprep.subr.mxu0 0.0
        %v5364 = vand.u32 %v5009, 4294901760
        %v5365 = vsub.f32 %v5009, %v5364
        %5366 = vmatpush1.msra.mxu0 %v5365
        %5367 = vmatprep.subr.mxu0 0.0
        %v5368 = vand.u32 %v5010, 4294901760
        %v5369 = vsub.f32 %v5010, %v5368
        %5370 = vmatpush1.msra.mxu0 %v5369
        %5371 = vmatprep.subr.mxu0 0.0
        %v5372 = vand.u32 %v5011, 4294901760
        %v5373 = vsub.f32 %v5011, %v5372
        %5374 = vmatpush1.msra.mxu0 %v5373
        %5375 = vmatprep.subr.mxu0 0.0
        %v5376 = vand.u32 %v5012, 4294901760
        %v5377 = vsub.f32 %v5012, %v5376
        %5378 = vmatpush1.msra.mxu0 %v5377
        %5379 = vmatprep.subr.mxu0 0.0
        %v5380 = vand.u32 %v5013, 4294901760
        %v5381 = vsub.f32 %v5013, %v5380
        %5382 = vmatpush1.msra.mxu0 %v5381
        %5383 = vmatprep.subr.mxu0 0.0
        %v5384 = vand.u32 %v5014, 4294901760
        %v5385 = vsub.f32 %v5014, %v5384
        %5386 = vmatpush1.msra.mxu0 %v5385
        %5387 = vmatprep.subr.mxu0 0.0
        %v5388 = vand.u32 %v5015, 4294901760
        %v5389 = vsub.f32 %v5015, %v5388
        %5390 = vmatpush1.msra.mxu0 %v5389
        %5391 = vmatprep.subr.mxu0 0.0
        %v5392 = vand.u32 %v5016, 4294901760
        %v5393 = vsub.f32 %v5016, %v5392
        %5394 = vmatpush1.msra.mxu0 %v5393
        %5395 = vmatprep.subr.mxu0 0.0
        %v5396 = vand.u32 %v5017, 4294901760
        %v5397 = vsub.f32 %v5017, %v5396
        %5398 = vmatpush1.msra.mxu0 %v5397
        %5399 = vmatprep.subr.mxu0 0.0
        %v5400 = vand.u32 %v5018, 4294901760
        %v5401 = vsub.f32 %v5018, %v5400
        %5402 = vmatpush1.msra.mxu0 %v5401
        %5403 = vmatprep.subr.mxu0 0.0
        %v5404 = vand.u32 %v5019, 4294901760
        %v5405 = vsub.f32 %v5019, %v5404
        %5406 = vmatpush1.msra.mxu0 %v5405
        %5407 = vmatprep.subr.mxu0 0.0
        %v5408 = vand.u32 %v5020, 4294901760
        %v5409 = vsub.f32 %v5020, %v5408
        %5410 = vmatpush1.msra.mxu0 %v5409
        %5411 = vmatprep.subr.mxu0 0.0
        %v5412 = vand.u32 %v5021, 4294901760
        %v5413 = vsub.f32 %v5021, %v5412
        %5414 = vmatpush1.msra.mxu0 %v5413
        %5415 = vmatprep.subr.mxu0 0.0
        %v5416 = vand.u32 %v5022, 4294901760
        %v5417 = vsub.f32 %v5022, %v5416
        %5418 = vmatpush1.msra.mxu0 %v5417
        %5419 = vmatprep.subr.mxu0 0.0
        %v5420 = vand.u32 %v5023, 4294901760
        %v5421 = vsub.f32 %v5023, %v5420
        %5422 = vmatpush1.msra.mxu0 %v5421
        %5423 = vmatprep.subr.mxu0 0.0
        %v5424 = vand.u32 %v5024, 4294901760
        %v5425 = vsub.f32 %v5024, %v5424
        %5426 = vmatpush1.msra.mxu0 %v5425
        %5427 = vmatprep.subr.mxu0 0.0
        %v5428 = vand.u32 %v5025, 4294901760
        %v5429 = vsub.f32 %v5025, %v5428
        %5430 = vmatpush1.msra.mxu0 %v5429
        %5431 = vmatprep.subr.mxu0 0.0
        %5432 = vmatpush1.msra.mxu0 0.0
        %5433 = vmatprep.subr.mxu0 0.0
        %5434 = vmatpush1.msra.mxu0 0.0
        %5435 = vmatprep.subr.mxu0 0.0
        %5436 = vmatpush1.msra.mxu0 0.0
        %5437 = vmatprep.subr.mxu0 0.0
        %5438 = vmatpush1.msra.mxu0 0.0
        %5439 = vmatprep.subr.mxu0 0.0
        %5440 = vmatpush1.msra.mxu0 0.0
        %5441 = vmatprep.subr.mxu0 0.0
        %5442 = vmatpush1.msra.mxu0 0.0
        %5443 = vmatprep.subr.mxu0 0.0
        %5444 = vmatpush1.msra.mxu0 0.0
        %5445 = vmatprep.subr.mxu0 0.0
        %5446 = vmatpush1.msra.mxu0 0.0
        %v5447 = vand.u32 %v5037, 4294901760
        %v5448 = vsub.f32 %v5037, %v5447
        %5449 = vmatprep.mubr.f32.mxu0 %v5448
        %v5450 = vand.u32 %v5030, 4294901760
        %v5451 = vsub.f32 %v5030, %v5450
        %5452 = vmatmul.mubr.f32.gmra.mrb[0].mxu0 %v5451
        %v5453 = vpop.f32.mrb[0].mxu0
        %v5454 = vadd.f32 %v5332, %v5453
        %v5455 = vpop.f32.mrb[0].mxu0
        %5456 = vdwg.mxu0
        %5457 = vmatprep.subr.mxu0 0.0
        %v5458 = vand.u32 %v5002, 4294901760
        %5459 = vmatpush1.msra.mxu0 %v5458
        %5460 = vmatprep.subr.mxu0 0.0
        %v5461 = vand.u32 %v5003, 4294901760
        %5462 = vmatpush1.msra.mxu0 %v5461
        %5463 = vmatprep.subr.mxu0 0.0
        %v5464 = vand.u32 %v5004, 4294901760
        %5465 = vmatpush1.msra.mxu0 %v5464
        %5466 = vmatprep.subr.mxu0 0.0
        %v5467 = vand.u32 %v5005, 4294901760
        %5468 = vmatpush1.msra.mxu0 %v5467
        %5469 = vmatprep.subr.mxu0 0.0
        %v5470 = vand.u32 %v5006, 4294901760
        %5471 = vmatpush1.msra.mxu0 %v5470
        %5472 = vmatprep.subr.mxu0 0.0
        %v5473 = vand.u32 %v5007, 4294901760
        %5474 = vmatpush1.msra.mxu0 %v5473
        %5475 = vmatprep.subr.mxu0 0.0
        %v5476 = vand.u32 %v5008, 4294901760
        %5477 = vmatpush1.msra.mxu0 %v5476
        %5478 = vmatprep.subr.mxu0 0.0
        %v5479 = vand.u32 %v5009, 4294901760
        %5480 = vmatpush1.msra.mxu0 %v5479
        %5481 = vmatprep.subr.mxu0 0.0
        %v5482 = vand.u32 %v5010, 4294901760
        %5483 = vmatpush1.msra.mxu0 %v5482
        %5484 = vmatprep.subr.mxu0 0.0
        %v5485 = vand.u32 %v5011, 4294901760
        %5486 = vmatpush1.msra.mxu0 %v5485
        %5487 = vmatprep.subr.mxu0 0.0
        %v5488 = vand.u32 %v5012, 4294901760
        %5489 = vmatpush1.msra.mxu0 %v5488
        %5490 = vmatprep.subr.mxu0 0.0
        %v5491 = vand.u32 %v5013, 4294901760
        %5492 = vmatpush1.msra.mxu0 %v5491
        %5493 = vmatprep.subr.mxu0 0.0
        %v5494 = vand.u32 %v5014, 4294901760
        %5495 = vmatpush1.msra.mxu0 %v5494
        %5496 = vmatprep.subr.mxu0 0.0
        %v5497 = vand.u32 %v5015, 4294901760
        %5498 = vmatpush1.msra.mxu0 %v5497
        %5499 = vmatprep.subr.mxu0 0.0
        %v5500 = vand.u32 %v5016, 4294901760
        %5501 = vmatpush1.msra.mxu0 %v5500
        %5502 = vmatprep.subr.mxu0 0.0
        %v5503 = vand.u32 %v5017, 4294901760
        %5504 = vmatpush1.msra.mxu0 %v5503
        %5505 = vmatprep.subr.mxu0 0.0
        %v5506 = vand.u32 %v5018, 4294901760
        %5507 = vmatpush1.msra.mxu0 %v5506
        %5508 = vmatprep.subr.mxu0 0.0
        %v5509 = vand.u32 %v5019, 4294901760
        %5510 = vmatpush1.msra.mxu0 %v5509
        %5511 = vmatprep.subr.mxu0 0.0
        %v5512 = vand.u32 %v5020, 4294901760
        %5513 = vmatpush1.msra.mxu0 %v5512
        %5514 = vmatprep.subr.mxu0 0.0
        %v5515 = vand.u32 %v5021, 4294901760
        %5516 = vmatpush1.msra.mxu0 %v5515
        %5517 = vmatprep.subr.mxu0 0.0
        %v5518 = vand.u32 %v5022, 4294901760
        %5519 = vmatpush1.msra.mxu0 %v5518
        %5520 = vmatprep.subr.mxu0 0.0
        %v5521 = vand.u32 %v5023, 4294901760
        %5522 = vmatpush1.msra.mxu0 %v5521
        %5523 = vmatprep.subr.mxu0 0.0
        %v5524 = vand.u32 %v5024, 4294901760
        %5525 = vmatpush1.msra.mxu0 %v5524
        %5526 = vmatprep.subr.mxu0 0.0
        %v5527 = vand.u32 %v5025, 4294901760
        %5528 = vmatpush1.msra.mxu0 %v5527
        %5529 = vmatprep.subr.mxu0 0.0
        %5530 = vmatpush1.msra.mxu0 0.0
        %5531 = vmatprep.subr.mxu0 0.0
        %5532 = vmatpush1.msra.mxu0 0.0
        %5533 = vmatprep.subr.mxu0 0.0
        %5534 = vmatpush1.msra.mxu0 0.0
        %5535 = vmatprep.subr.mxu0 0.0
        %5536 = vmatpush1.msra.mxu0 0.0
        %5537 = vmatprep.subr.mxu0 0.0
        %5538 = vmatpush1.msra.mxu0 0.0
        %5539 = vmatprep.subr.mxu0 0.0
        %5540 = vmatpush1.msra.mxu0 0.0
        %5541 = vmatprep.subr.mxu0 0.0
        %5542 = vmatpush1.msra.mxu0 0.0
        %5543 = vmatprep.subr.mxu0 0.0
        %5544 = vmatpush1.msra.mxu0 0.0
        %v5545 = vand.u32 %v5037, 4294901760
        %v5546 = vsub.f32 %v5037, %v5545
        %v5547 = vand.u32 %v5546, 4294901760
        %5548 = vmatprep.mubr.f32.mxu0 %v5547
        %v5549 = vand.u32 %v5030, 4294901760
        %v5550 = vsub.f32 %v5030, %v5549
        %v5551 = vand.u32 %v5550, 4294901760
        %5552 = vmatmul.mubr.f32.gmra.mrb[0].mxu0 %v5551
        %v5553 = vpop.f32.mrb[0].mxu0
        %v5554 = vadd.f32 %v5454, %v5553
        %v5555 = vpop.f32.mrb[0].mxu0
        %5556 = vdwg.mxu0
        %5557 = vmatprep.subr.mxu0 0.0
        %v5558 = vand.u32 %v5002, 4294901760
        %v5559 = vsub.f32 %v5002, %v5558
        %v5560 = vand.u32 %v5559, 4294901760
        %5561 = vmatpush1.msra.mxu0 %v5560
        %5562 = vmatprep.subr.mxu0 0.0
        %v5563 = vand.u32 %v5003, 4294901760
        %v5564 = vsub.f32 %v5003, %v5563
        %v5565 = vand.u32 %v5564, 4294901760
        %5566 = vmatpush1.msra.mxu0 %v5565
        %5567 = vmatprep.subr.mxu0 0.0
        %v5568 = vand.u32 %v5004, 4294901760
        %v5569 = vsub.f32 %v5004, %v5568
        %v5570 = vand.u32 %v5569, 4294901760
        %5571 = vmatpush1.msra.mxu0 %v5570
        %5572 = vmatprep.subr.mxu0 0.0
        %v5573 = vand.u32 %v5005, 4294901760
        %v5574 = vsub.f32 %v5005, %v5573
        %v5575 = vand.u32 %v5574, 4294901760
        %5576 = vmatpush1.msra.mxu0 %v5575
        %5577 = vmatprep.subr.mxu0 0.0
        %v5578 = vand.u32 %v5006, 4294901760
        %v5579 = vsub.f32 %v5006, %v5578
        %v5580 = vand.u32 %v5579, 4294901760
        %5581 = vmatpush1.msra.mxu0 %v5580
        %5582 = vmatprep.subr.mxu0 0.0
        %v5583 = vand.u32 %v5007, 4294901760
        %v5584 = vsub.f32 %v5007, %v5583
        %v5585 = vand.u32 %v5584, 4294901760
        %5586 = vmatpush1.msra.mxu0 %v5585
        %5587 = vmatprep.subr.mxu0 0.0
        %v5588 = vand.u32 %v5008, 4294901760
        %v5589 = vsub.f32 %v5008, %v5588
        %v5590 = vand.u32 %v5589, 4294901760
        %5591 = vmatpush1.msra.mxu0 %v5590
        %5592 = vmatprep.subr.mxu0 0.0
        %v5593 = vand.u32 %v5009, 4294901760
        %v5594 = vsub.f32 %v5009, %v5593
        %v5595 = vand.u32 %v5594, 4294901760
        %5596 = vmatpush1.msra.mxu0 %v5595
        %5597 = vmatprep.subr.mxu0 0.0
        %v5598 = vand.u32 %v5010, 4294901760
        %v5599 = vsub.f32 %v5010, %v5598
        %v5600 = vand.u32 %v5599, 4294901760
        %5601 = vmatpush1.msra.mxu0 %v5600
        %5602 = vmatprep.subr.mxu0 0.0
        %v5603 = vand.u32 %v5011, 4294901760
        %v5604 = vsub.f32 %v5011, %v5603
        %v5605 = vand.u32 %v5604, 4294901760
        %5606 = vmatpush1.msra.mxu0 %v5605
        %5607 = vmatprep.subr.mxu0 0.0
        %v5608 = vand.u32 %v5012, 4294901760
        %v5609 = vsub.f32 %v5012, %v5608
        %v5610 = vand.u32 %v5609, 4294901760
        %5611 = vmatpush1.msra.mxu0 %v5610
        %5612 = vmatprep.subr.mxu0 0.0
        %v5613 = vand.u32 %v5013, 4294901760
        %v5614 = vsub.f32 %v5013, %v5613
        %v5615 = vand.u32 %v5614, 4294901760
        %5616 = vmatpush1.msra.mxu0 %v5615
        %5617 = vmatprep.subr.mxu0 0.0
        %v5618 = vand.u32 %v5014, 4294901760
        %v5619 = vsub.f32 %v5014, %v5618
        %v5620 = vand.u32 %v5619, 4294901760
        %5621 = vmatpush1.msra.mxu0 %v5620
        %5622 = vmatprep.subr.mxu0 0.0
        %v5623 = vand.u32 %v5015, 4294901760
        %v5624 = vsub.f32 %v5015, %v5623
        %v5625 = vand.u32 %v5624, 4294901760
        %5626 = vmatpush1.msra.mxu0 %v5625
        %5627 = vmatprep.subr.mxu0 0.0
        %v5628 = vand.u32 %v5016, 4294901760
        %v5629 = vsub.f32 %v5016, %v5628
        %v5630 = vand.u32 %v5629, 4294901760
        %5631 = vmatpush1.msra.mxu0 %v5630
        %5632 = vmatprep.subr.mxu0 0.0
        %v5633 = vand.u32 %v5017, 4294901760
        %v5634 = vsub.f32 %v5017, %v5633
        %v5635 = vand.u32 %v5634, 4294901760
        %5636 = vmatpush1.msra.mxu0 %v5635
        %5637 = vmatprep.subr.mxu0 0.0
        %v5638 = vand.u32 %v5018, 4294901760
        %v5639 = vsub.f32 %v5018, %v5638
        %v5640 = vand.u32 %v5639, 4294901760
        %5641 = vmatpush1.msra.mxu0 %v5640
        %5642 = vmatprep.subr.mxu0 0.0
        %v5643 = vand.u32 %v5019, 4294901760
        %v5644 = vsub.f32 %v5019, %v5643
        %v5645 = vand.u32 %v5644, 4294901760
        %5646 = vmatpush1.msra.mxu0 %v5645
        %5647 = vmatprep.subr.mxu0 0.0
        %v5648 = vand.u32 %v5020, 4294901760
        %v5649 = vsub.f32 %v5020, %v5648
        %v5650 = vand.u32 %v5649, 4294901760
        %5651 = vmatpush1.msra.mxu0 %v5650
        %5652 = vmatprep.subr.mxu0 0.0
        %v5653 = vand.u32 %v5021, 4294901760
        %v5654 = vsub.f32 %v5021, %v5653
        %v5655 = vand.u32 %v5654, 4294901760
        %5656 = vmatpush1.msra.mxu0 %v5655
        %5657 = vmatprep.subr.mxu0 0.0
        %v5658 = vand.u32 %v5022, 4294901760
        %v5659 = vsub.f32 %v5022, %v5658
        %v5660 = vand.u32 %v5659, 4294901760
        %5661 = vmatpush1.msra.mxu0 %v5660
        %5662 = vmatprep.subr.mxu0 0.0
        %v5663 = vand.u32 %v5023, 4294901760
        %v5664 = vsub.f32 %v5023, %v5663
        %v5665 = vand.u32 %v5664, 4294901760
        %5666 = vmatpush1.msra.mxu0 %v5665
        %5667 = vmatprep.subr.mxu0 0.0
        %v5668 = vand.u32 %v5024, 4294901760
        %v5669 = vsub.f32 %v5024, %v5668
        %v5670 = vand.u32 %v5669, 4294901760
        %5671 = vmatpush1.msra.mxu0 %v5670
        %5672 = vmatprep.subr.mxu0 0.0
        %v5673 = vand.u32 %v5025, 4294901760
        %v5674 = vsub.f32 %v5025, %v5673
        %v5675 = vand.u32 %v5674, 4294901760
        %5676 = vmatpush1.msra.mxu0 %v5675
        %5677 = vmatprep.subr.mxu0 0.0
        %5678 = vmatpush1.msra.mxu0 0.0
        %5679 = vmatprep.subr.mxu0 0.0
        %5680 = vmatpush1.msra.mxu0 0.0
        %5681 = vmatprep.subr.mxu0 0.0
        %5682 = vmatpush1.msra.mxu0 0.0
        %5683 = vmatprep.subr.mxu0 0.0
        %5684 = vmatpush1.msra.mxu0 0.0
        %5685 = vmatprep.subr.mxu0 0.0
        %5686 = vmatpush1.msra.mxu0 0.0
        %5687 = vmatprep.subr.mxu0 0.0
        %5688 = vmatpush1.msra.mxu0 0.0
        %5689 = vmatprep.subr.mxu0 0.0
        %5690 = vmatpush1.msra.mxu0 0.0
        %5691 = vmatprep.subr.mxu0 0.0
        %5692 = vmatpush1.msra.mxu0 0.0
        %v5693 = vand.u32 %v5037, 4294901760
        %5694 = vmatprep.mubr.f32.mxu0 %v5693
        %v5695 = vand.u32 %v5030, 4294901760
        %5696 = vmatmul.mubr.f32.gmra.mrb[0].mxu0 %v5695
        %v5697 = vpop.f32.mrb[0].mxu0
        %v5698 = vadd.f32 %v5554, %v5697
        %v5699 = vpop.f32.mrb[0].mxu0
        %5700 = vdwg.mxu0
        %5701 = vmatprep.subr.mxu0 0.0
        %v5702 = vand.u32 %v5002, 4294901760
        %5703 = vmatpush1.msra.mxu0 %v5702
        %5704 = vmatprep.subr.mxu0 0.0
        %v5705 = vand.u32 %v5003, 4294901760
        %5706 = vmatpush1.msra.mxu0 %v5705
        %5707 = vmatprep.subr.mxu0 0.0
        %v5708 = vand.u32 %v5004, 4294901760
        %5709 = vmatpush1.msra.mxu0 %v5708
        %5710 = vmatprep.subr.mxu0 0.0
        %v5711 = vand.u32 %v5005, 4294901760
        %5712 = vmatpush1.msra.mxu0 %v5711
        %5713 = vmatprep.subr.mxu0 0.0
        %v5714 = vand.u32 %v5006, 4294901760
        %5715 = vmatpush1.msra.mxu0 %v5714
        %5716 = vmatprep.subr.mxu0 0.0
        %v5717 = vand.u32 %v5007, 4294901760
        %5718 = vmatpush1.msra.mxu0 %v5717
        %5719 = vmatprep.subr.mxu0 0.0
        %v5720 = vand.u32 %v5008, 4294901760
        %5721 = vmatpush1.msra.mxu0 %v5720
        %5722 = vmatprep.subr.mxu0 0.0
        %v5723 = vand.u32 %v5009, 4294901760
        %5724 = vmatpush1.msra.mxu0 %v5723
        %5725 = vmatprep.subr.mxu0 0.0
        %v5726 = vand.u32 %v5010, 4294901760
        %5727 = vmatpush1.msra.mxu0 %v5726
        %5728 = vmatprep.subr.mxu0 0.0
        %v5729 = vand.u32 %v5011, 4294901760
        %5730 = vmatpush1.msra.mxu0 %v5729
        %5731 = vmatprep.subr.mxu0 0.0
        %v5732 = vand.u32 %v5012, 4294901760
        %5733 = vmatpush1.msra.mxu0 %v5732
        %5734 = vmatprep.subr.mxu0 0.0
        %v5735 = vand.u32 %v5013, 4294901760
        %5736 = vmatpush1.msra.mxu0 %v5735
        %5737 = vmatprep.subr.mxu0 0.0
        %v5738 = vand.u32 %v5014, 4294901760
        %5739 = vmatpush1.msra.mxu0 %v5738
        %5740 = vmatprep.subr.mxu0 0.0
        %v5741 = vand.u32 %v5015, 4294901760
        %5742 = vmatpush1.msra.mxu0 %v5741
        %5743 = vmatprep.subr.mxu0 0.0
        %v5744 = vand.u32 %v5016, 4294901760
        %5745 = vmatpush1.msra.mxu0 %v5744
        %5746 = vmatprep.subr.mxu0 0.0
        %v5747 = vand.u32 %v5017, 4294901760
        %5748 = vmatpush1.msra.mxu0 %v5747
        %5749 = vmatprep.subr.mxu0 0.0
        %v5750 = vand.u32 %v5018, 4294901760
        %5751 = vmatpush1.msra.mxu0 %v5750
        %5752 = vmatprep.subr.mxu0 0.0
        %v5753 = vand.u32 %v5019, 4294901760
        %5754 = vmatpush1.msra.mxu0 %v5753
        %5755 = vmatprep.subr.mxu0 0.0
        %v5756 = vand.u32 %v5020, 4294901760
        %5757 = vmatpush1.msra.mxu0 %v5756
        %5758 = vmatprep.subr.mxu0 0.0
        %v5759 = vand.u32 %v5021, 4294901760
        %5760 = vmatpush1.msra.mxu0 %v5759
        %5761 = vmatprep.subr.mxu0 0.0
        %v5762 = vand.u32 %v5022, 4294901760
        %5763 = vmatpush1.msra.mxu0 %v5762
        %5764 = vmatprep.subr.mxu0 0.0
        %v5765 = vand.u32 %v5023, 4294901760
        %5766 = vmatpush1.msra.mxu0 %v5765
        %5767 = vmatprep.subr.mxu0 0.0
        %v5768 = vand.u32 %v5024, 4294901760
        %5769 = vmatpush1.msra.mxu0 %v5768
        %5770 = vmatprep.subr.mxu0 0.0
        %v5771 = vand.u32 %v5025, 4294901760
        %5772 = vmatpush1.msra.mxu0 %v5771
        %5773 = vmatprep.subr.mxu0 0.0
        %5774 = vmatpush1.msra.mxu0 0.0
        %5775 = vmatprep.subr.mxu0 0.0
        %5776 = vmatpush1.msra.mxu0 0.0
        %5777 = vmatprep.subr.mxu0 0.0
        %5778 = vmatpush1.msra.mxu0 0.0
        %5779 = vmatprep.subr.mxu0 0.0
        %5780 = vmatpush1.msra.mxu0 0.0
        %5781 = vmatprep.subr.mxu0 0.0
        %5782 = vmatpush1.msra.mxu0 0.0
        %5783 = vmatprep.subr.mxu0 0.0
        %5784 = vmatpush1.msra.mxu0 0.0
        %5785 = vmatprep.subr.mxu0 0.0
        %5786 = vmatpush1.msra.mxu0 0.0
        %5787 = vmatprep.subr.mxu0 0.0
        %5788 = vmatpush1.msra.mxu0 0.0
        %v5789 = vand.u32 %v5037, 4294901760
        %5790 = vmatprep.mubr.f32.mxu0 %v5789
        %v5791 = vand.u32 %v5030, 4294901760
        %5792 = vmatmul.mubr.f32.gmra.mrb[0].mxu0 %v5791
        %v5793 = vpop.f32.mrb[0].mxu0
        %v5794 = vadd.f32 %v5698, %v5793
        %v5795 = vpop.f32.mrb[0].mxu0
        %5796 = vdwg.mxu0
        %v5797 = vmul.f32 %v5794, 1.19792
        %v5798 = vld [vmem:[%s4] sm:$0x1]
        %v5799 = vadd.f32 %v5797, %v5798
        %vm5800 = vcmask 73728
        %5801 = vst.msk [vmem:[%s216] sm:$0x1] %vm5800, %v5799
        %s5802 = sand.u32 %s137, 1
        %s5803 = scalar_lea.sflag [#allocation3], %s5802
        %s5804 = sand.u32 %s137, 1
        %s5805 = scalar_lea.vmem [#allocation2], %s5804
        // Predicated region
        $region41: #{autostereo_forward.1} parent=39 // pred_check
          %p5806 = pneg %p147
        $region42: #{autostereo_forward.1} parent=39 // pred_check_branch
          %5808 = sbr.rel (%p5806) target = $region44
        $region43: #{autostereo_forward.1} parent=39 // pred_region
          %s5810 = ssub.s32 16, 16
          %5811 = vsyncadd %s5803, %s5810
          %s5812 = smul.addr %s19, 16
          %s5813 = scalar_lea.hbm %s5, %s5812
          %s5815 = sshll.u32 %s5805, 4
          %s5816 = int_to_ptr.vmem [resolvable:$true] %s5815
          %5818 = dma.vmem_to_hbm [thread:$0]  %s5816, 16, %s5813, %s5803
        $region44: #{autostereo_forward.1} parent=39 // pred_fallthru
          _
      $region40: #{autostereo_forward.1} parent=5 // pred_fallthru
        _
      %p5819 = scmp.le.s32.totalorder 2, %s14
      // Predicated region
      $region45: #{autostereo_forward.1} parent=5 // pred_check
        %p5820 = pneg %p5819
      $region46: #{autostereo_forward.1} parent=5 // pred_check_branch
        %5822 = sbr.rel (%p5820) target = $region48
      $region47: #{autostereo_forward.1} parent=5 // pred_region
        %s5823 = ssub.s32 %s14, 2
        // Predicated region
        $region49: #{autostereo_forward.1} parent=47 // pred_check
          %p5824 = pneg %p153
        $region50: #{autostereo_forward.1} parent=47 // pred_check_branch
          %5826 = sbr.rel (%p5824) target = $region52
        $region51: #{autostereo_forward.1} parent=47 // pred_region
          %s5827 = sand.u32 %s138, 1
          %s5828 = scalar_lea.sflag [#allocation3], %s5827
          %s5829 = sand.u32 %s138, 1
          %s5830 = scalar_lea.vmem [#allocation2], %s5829
          %5831 = dma.done %s5828, 16
        $region52: #{autostereo_forward.1} parent=47 // pred_fallthru
          _
      $region48: #{autostereo_forward.1} parent=5 // pred_fallthru
        _
    $region6: #{autostereo_forward.1} parent=1 // loop_footer
      %s18 = sadd.s32 1, %s14
    $region7: #{autostereo_forward.1} parent=1 // loop_footer_branch
      %13 = sbr.rel target = $region3
    $region8: #{autostereo_forward.1} parent=1 // loop_exit
      _
    %5832 = vsyncpa [#allocation3], 1
    %s5833 = scalar_lea.sflag [#allocation3], 1
    %5834 = vsyncpa %s5833, 1

</llo_original>
